<compile_context>
chip_gen: v6e
topology: v6e:2x2x1
jax: 0.10.0
libtpu: 0.0.40
codegen_flags: <defaults>
</compile_context>

<pallas_src>
import functools

import jax
import jax.numpy as jnp
from jax import lax
from jax.experimental import pallas as pl
from jax.experimental.pallas import tpu as pltpu


# (c_in, c_out, kernel, stride, padding) — must match the PyTorch module.
_CONV_CFG = (
    (1, 16, 5, 1, 2),
    (16, 32, 5, 5, 2),
    (32, 64, 5, 5, 2),
    (64, 64, 5, 5, 2),
    (64, 5, 1, 1, 0),     # conv_final (1x1)
)
_LINEAR1 = (410, 100)     # 410 = 5 channels * 82 positions after conv_final
_LINEAR2_IN = 100


def _round_up(x, m):
    return ((x + m - 1) // m) * m


# -----------------------------------------------------------------------------
# Fused matmul + bias + (optional) ReLU kernel:  O = act(W @ X + b)
#   W: (N, K)  weights, resident in VMEM across the grid
#   X: (K, M)  activations, tiled along M (the lane axis), tiles % 128 == 0
#   b: (N, 1)  bias, broadcast along lanes in the epilogue
# -----------------------------------------------------------------------------
def _fused_matmul_kernel(w_ref, x_ref, b_ref, o_ref, *, relu):
    acc = jnp.dot(w_ref[...], x_ref[...], preferred_element_type=jnp.float32)
    acc = acc + b_ref[...]
    if relu:
        acc = jnp.maximum(acc, 0.0)
    o_ref[...] = acc.astype(o_ref.dtype)


def fused_matmul_bias(w, x, b, *, relu, tile_m=1024):
    """act(w @ x + b[:, None]) via one Pallas MXU kernel.  Returns (N, M) f32."""
    n_out, k = w.shape
    k2, m = x.shape
    assert k == k2 and b.shape == (n_out,)

    # Zero-pad the contraction dim to a sublane multiple (correctness-free).
    k_pad = _round_up(k, 8)
    if k_pad != k:
        w = jnp.pad(w, ((0, 0), (0, k_pad - k)))
        x = jnp.pad(x, ((0, k_pad - k), (0, 0)))

    # Lane-dense tiles: multiples of 128 lanes, up to tile_m lanes per grid step.
    tm = min(tile_m, _round_up(m, 128))
    m_pad = _round_up(m, tm)
    if m_pad != m:
        x = jnp.pad(x, ((0, 0), (0, m_pad - m)))

    grid = (m_pad // tm,)
    kernel = functools.partial(_fused_matmul_kernel, relu=relu)

    out = pl.pallas_call(
        kernel,
        out_shape=jax.ShapeDtypeStruct((n_out, m_pad), jnp.float32),
        grid_spec=pltpu.PrefetchScalarGridSpec(
            num_scalar_prefetch=0,
            grid=grid,
            in_specs=[
                pl.BlockSpec((n_out, k_pad), lambda i: (0, 0)),   # weights (resident)
                pl.BlockSpec((k_pad, tm), lambda i: (0, i)),      # activation tile
                pl.BlockSpec((n_out, 1), lambda i: (0, 0)),       # bias
            ],
            out_specs=pl.BlockSpec((n_out, tm), lambda i: (0, i)),
        ),
        compiler_params=pltpu.CompilerParams(
            # Shards the lane-tile grid across the 2 TensorCores on v7x;
            # tiles stay well under the v5e 16 MiB scoped-VMEM default.
            dimension_semantics=("parallel",),
        ),
    )(w, x, b.reshape(n_out, 1))
    return out[:, :m]


# -----------------------------------------------------------------------------
# im2col (channels-first) for Conv1d — layout plumbing done in the wrapper.
# -----------------------------------------------------------------------------
def _im2col_1d(a, ksize, stride, pad):
    """a: (C_in, B, L_in) -> ((C_in*ksize, B*L_out), L_out).

    Column (ci*ksize + k, b*L_out + t) == padded_a[ci, b, stride*t + k].
    """
    c_in, batch, l_in = a.shape
    if pad:
        a = jnp.pad(a, ((0, 0), (0, 0), (pad, pad)))
    l_out = (l_in + 2 * pad - ksize) // stride + 1
    taps = [
        lax.slice_in_dim(a, k, k + stride * (l_out - 1) + 1, stride=stride, axis=2)
        for k in range(ksize)
    ]
    patches = jnp.stack(taps, axis=1)                 # (C_in, ksize, B, L_out)
    return patches.reshape(c_in * ksize, batch * l_out), l_out


# -----------------------------------------------------------------------------
# Full forward pass (matches the PyTorch module's forward).
# -----------------------------------------------------------------------------
def convolutional_net_forward(x, params):
    """x: (B, L) f32 -> (B, n_params) f32."""
    batch = x.shape[0]
    a = x[jnp.newaxis, :, :]                          # unsqueeze(1) -> (C=1, B, L)

    for (c_in, c_out, ksize, stride, pad), (w, b) in zip(_CONV_CFG, params["convs"]):
        cols, l_out = _im2col_1d(a, ksize, stride, pad)      # (C_in*K, B*L_out)
        wmat = w.reshape(c_out, c_in * ksize)
        y = fused_matmul_bias(wmat, cols, b, relu=True)      # (C_out, B*L_out)
        a = y.reshape(c_out, batch, l_out)

    # torch.flatten(start_dim=1) of (B, C, L): channel-major feature vector.
    c_fin, _, l_fin = a.shape
    feat = jnp.transpose(a, (1, 0, 2)).reshape(batch, c_fin * l_fin)   # (B, 410)

    w1, b1 = params["linear1"]
    w2, b2 = params["linear2"]
    h = fused_matmul_bias(w1, feat.T, b1, relu=True)         # (100, B)
    out = fused_matmul_bias(w2, h, b2, relu=False)           # (n_params, B)
    return out.T                                             # (B, n_params)


# -----------------------------------------------------------------------------
# Pure-JAX reference (lax.conv / jnp.dot at HIGHEST precision) for validation.
# -----------------------------------------------------------------------------
def _reference_forward(x, params):
    hi = lax.Precision.HIGHEST
    a = x[:, None, :]                                        # (B, 1, L)
    for (_, _, _, stride, pad), (w, b) in zip(_CONV_CFG, params["convs"]):
        a = lax.conv_general_dilated(
            a, w, window_strides=(stride,), padding=[(pad, pad)],
            dimension_numbers=("NCH", "OIH", "NCH"), precision=hi)
        a = jax.nn.relu(a + b[None, :, None])
    feat = a.reshape(a.shape[0], -1)
    w1, b1 = params["linear1"]
    w2, b2 = params["linear2"]
    h = jax.nn.relu(jnp.dot(feat, w1.T, precision=hi) + b1)
    return jnp.dot(h, w2.T, precision=hi) + b2


def init_params(key, n_params=12):
    """PyTorch-default-style U(-1/sqrt(fan_in), 1/sqrt(fan_in)) initialisation."""
    keys = jax.random.split(key, 2 * len(_CONV_CFG) + 4)
    it = iter(keys)
    convs = []
    for (c_in, c_out, ksize, _, _) in _CONV_CFG:
        bound = float((c_in * ksize) ** -0.5)
        w = jax.random.uniform(next(it), (c_out, c_in, ksize), jnp.float32, -bound, bound)
        b = jax.random.uniform(next(it), (c_out,), jnp.float32, -bound, bound)
        convs.append((w, b))

    def _linear(in_f, out_f):
        bound = float(in_f ** -0.5)
        w = jax.random.uniform(next(it), (out_f, in_f), jnp.float32, -bound, bound)
        b = jax.random.uniform(next(it), (out_f,), jnp.float32, -bound, bound)
        return (w, b)

    return {
        "convs": convs,
        "linear1": _linear(_LINEAR1[0], _LINEAR1[1]),
        "linear2": _linear(_LINEAR2_IN, n_params),
    }


if __name__ == "__main__":
    key = jax.random.PRNGKey(0)
    k_x, k_p = jax.random.split(key)

    # linear1 expects 410 = 5 * 82 flattened features, which pins the input
    # length: 10250 -> 2050 -> 410 -> 82 through the stride-5 convs.
    batch, seq_len, n_params = 2, 10250, 12
    x = jax.random.normal(k_x, (batch, seq_len), dtype=jnp.float32)
    params = init_params(k_p, n_params)

    out = jax.block_until_ready(jax.jit(convolutional_net_forward)(x, params))
    ref = jax.block_until_ready(_reference_forward(x, params))

    assert out.shape == (batch, n_params), out.shape
    max_err = float(jnp.max(jnp.abs(out - ref)))
    assert max_err < 2e-2, f"max |pallas - reference| = {max_err}"
    print("KERNEL_OK")
</pallas_src>

<mosaic_0001>
module attributes {stable_mosaic.version = 11 : i64} {
  func.func @_fused_matmul_kernel(%arg0: i32, %arg1: memref<16x8xf32, #tpu.memory_space<vmem>>, %arg2: memref<8x1024xf32, #tpu.memory_space<vmem>>, %arg3: memref<16x1xf32, #tpu.memory_space<vmem>>, %arg4: memref<16x1024xf32, #tpu.memory_space<vmem>>) attributes {dimension_semantics = [#tpu.dimension_semantics<parallel>], iteration_bounds = array<i64: 21>, scalar_prefetch = 0 : i64, scratch_operands = 0 : i64, tpu.core_type = #tpu.core_type<tc>, window_params = [{pipeline_mode = #tpu.pipeline_mode<synchronous>, transform_indices = @transform_0, window_bounds = array<i64: 16, 8>}, {transform_indices = @transform_1, window_bounds = array<i64: 8, 1024>}, {pipeline_mode = #tpu.pipeline_mode<synchronous>, transform_indices = @transform_2, window_bounds = array<i64: 16, 1>}, {transform_indices = @transform_3, window_bounds = array<i64: 16, 1024>}]} {
    %c0 = arith.constant 0 : index
    %c0_0 = arith.constant 0 : index
    %0 = vector.load %arg1[%c0, %c0_0] : memref<16x8xf32, #tpu.memory_space<vmem>>, vector<16x8xf32>
    %c0_1 = arith.constant 0 : index
    %c0_2 = arith.constant 0 : index
    %1 = vector.load %arg2[%c0_1, %c0_2] : memref<8x1024xf32, #tpu.memory_space<vmem>>, vector<8x1024xf32>
    %cst = arith.constant dense<0.000000e+00> : vector<16x1024xf32>
    %2 = tpu.matmul %0, %1, %cst {dimension_numbers = #tpu.dot_dimension_numbers<[1], [0], [0], [1], [0, 0, 1, 1], [], []>} : vector<16x8xf32>, vector<8x1024xf32>, vector<16x1024xf32> -> vector<16x1024xf32>
    %c0_3 = arith.constant 0 : index
    %c0_4 = arith.constant 0 : index
    %3 = vector.load %arg3[%c0_3, %c0_4] : memref<16x1xf32, #tpu.memory_space<vmem>>, vector<16x1xf32>
    %4 = vector.broadcast %3 : vector<16x1xf32> to vector<16x1024xf32>
    %5 = arith.addf %2, %4 : vector<16x1024xf32>
    %cst_5 = arith.constant 0.000000e+00 : f32
    %6 = vector.broadcast %cst_5 : f32 to vector<16x1024xf32>
    %7 = arith.maximumf %5, %6 : vector<16x1024xf32>
    %c0_6 = arith.constant 0 : index
    %c0_7 = arith.constant 0 : index
    %8 = vector.load %arg4[%c0_6, %c0_7] : memref<16x1024xf32, #tpu.memory_space<vmem>>, vector<16x1024xf32>
    tpu.vector_store %arg4[%c0_6, %c0_7], %7 {strides = array<i32>} : memref<16x1024xf32, #tpu.memory_space<vmem>>, vector<16x1024xf32>,
    return
  }
  func.func @transform_0(%arg0: i32) -> (i32, i32) {
    %c0_i32 = arith.constant 0 : i32
    %c0_i32_0 = arith.constant 0 : i32
    %c0_i32_1 = arith.constant 0 : i32
    return %c0_i32, %c0_i32_0 : i32, i32
  }
  func.func @transform_1(%arg0: i32) -> (i32, i32) {
    %c0_i32 = arith.constant 0 : i32
    %c0_i32_0 = arith.constant 0 : i32
    return %c0_i32, %arg0 : i32, i32
  }
  func.func @transform_2(%arg0: i32) -> (i32, i32) {
    %c0_i32 = arith.constant 0 : i32
    %c0_i32_0 = arith.constant 0 : i32
    %c0_i32_1 = arith.constant 0 : i32
    return %c0_i32, %c0_i32_0 : i32, i32
  }
  func.func @transform_3(%arg0: i32) -> (i32, i32) {
    %c0_i32 = arith.constant 0 : i32
    %c0_i32_0 = arith.constant 0 : i32
    return %c0_i32, %arg0 : i32, i32
  }
}

module attributes {stable_mosaic.version = 11 : i64} {
  func.func @_fused_matmul_kernel(%arg0: i32, %arg1: memref<32x80xf32, #tpu.memory_space<vmem>>, %arg2: memref<80x1024xf32, #tpu.memory_space<vmem>>, %arg3: memref<32x1xf32, #tpu.memory_space<vmem>>, %arg4: memref<32x1024xf32, #tpu.memory_space<vmem>>) attributes {dimension_semantics = [#tpu.dimension_semantics<parallel>], iteration_bounds = array<i64: 5>, scalar_prefetch = 0 : i64, scratch_operands = 0 : i64, tpu.core_type = #tpu.core_type<tc>, window_params = [{pipeline_mode = #tpu.pipeline_mode<synchronous>, transform_indices = @transform_0, window_bounds = array<i64: 32, 80>}, {transform_indices = @transform_1, window_bounds = array<i64: 80, 1024>}, {pipeline_mode = #tpu.pipeline_mode<synchronous>, transform_indices = @transform_2, window_bounds = array<i64: 32, 1>}, {transform_indices = @transform_3, window_bounds = array<i64: 32, 1024>}]} {
    %c0 = arith.constant 0 : index
    %c0_0 = arith.constant 0 : index
    %0 = vector.load %arg1[%c0, %c0_0] : memref<32x80xf32, #tpu.memory_space<vmem>>, vector<32x80xf32>
    %c0_1 = arith.constant 0 : index
    %c0_2 = arith.constant 0 : index
    %1 = vector.load %arg2[%c0_1, %c0_2] : memref<80x1024xf32, #tpu.memory_space<vmem>>, vector<80x1024xf32>
    %cst = arith.constant dense<0.000000e+00> : vector<32x1024xf32>
    %2 = tpu.matmul %0, %1, %cst {dimension_numbers = #tpu.dot_dimension_numbers<[1], [0], [0], [1], [0, 0, 1, 1], [], []>} : vector<32x80xf32>, vector<80x1024xf32>, vector<32x1024xf32> -> vector<32x1024xf32>
    %c0_3 = arith.constant 0 : index
    %c0_4 = arith.constant 0 : index
    %3 = vector.load %arg3[%c0_3, %c0_4] : memref<32x1xf32, #tpu.memory_space<vmem>>, vector<32x1xf32>
    %4 = vector.broadcast %3 : vector<32x1xf32> to vector<32x1024xf32>
    %5 = arith.addf %2, %4 : vector<32x1024xf32>
    %cst_5 = arith.constant 0.000000e+00 : f32
    %6 = vector.broadcast %cst_5 : f32 to vector<32x1024xf32>
    %7 = arith.maximumf %5, %6 : vector<32x1024xf32>
    %c0_6 = arith.constant 0 : index
    %c0_7 = arith.constant 0 : index
    %8 = vector.load %arg4[%c0_6, %c0_7] : memref<32x1024xf32, #tpu.memory_space<vmem>>, vector<32x1024xf32>
    tpu.vector_store %arg4[%c0_6, %c0_7], %7 {strides = array<i32>} : memref<32x1024xf32, #tpu.memory_space<vmem>>, vector<32x1024xf32>,
    return
  }
  func.func @transform_0(%arg0: i32) -> (i32, i32) {
    %c0_i32 = arith.constant 0 : i32
    %c0_i32_0 = arith.constant 0 : i32
    %c0_i32_1 = arith.constant 0 : i32
    return %c0_i32, %c0_i32_0 : i32, i32
  }
  func.func @transform_1(%arg0: i32) -> (i32, i32) {
    %c0_i32 = arith.constant 0 : i32
    %c0_i32_0 = arith.constant 0 : i32
    return %c0_i32, %arg0 : i32, i32
  }
  func.func @transform_2(%arg0: i32) -> (i32, i32) {
    %c0_i32 = arith.constant 0 : i32
    %c0_i32_0 = arith.constant 0 : i32
    %c0_i32_1 = arith.constant 0 : i32
    return %c0_i32, %c0_i32_0 : i32, i32
  }
  func.func @transform_3(%arg0: i32) -> (i32, i32) {
    %c0_i32 = arith.constant 0 : i32
    %c0_i32_0 = arith.constant 0 : i32
    return %c0_i32, %arg0 : i32, i32
  }
}

module attributes {stable_mosaic.version = 11 : i64} {
  func.func @_fused_matmul_kernel(%arg0: i32, %arg1: memref<64x160xf32, #tpu.memory_space<vmem>>, %arg2: memref<160x896xf32, #tpu.memory_space<vmem>>, %arg3: memref<64x1xf32, #tpu.memory_space<vmem>>, %arg4: memref<64x896xf32, #tpu.memory_space<vmem>>) attributes {dimension_semantics = [#tpu.dimension_semantics<parallel>], iteration_bounds = array<i64: 1>, scalar_prefetch = 0 : i64, scratch_operands = 0 : i64, tpu.core_type = #tpu.core_type<tc>, window_params = [{pipeline_mode = #tpu.pipeline_mode<synchronous>, transform_indices = @transform_0, window_bounds = array<i64: 64, 160>}, {transform_indices = @transform_1, window_bounds = array<i64: 160, 896>}, {pipeline_mode = #tpu.pipeline_mode<synchronous>, transform_indices = @transform_2, window_bounds = array<i64: 64, 1>}, {transform_indices = @transform_3, window_bounds = array<i64: 64, 896>}]} {
    %c0 = arith.constant 0 : index
    %c0_0 = arith.constant 0 : index
    %0 = vector.load %arg1[%c0, %c0_0] : memref<64x160xf32, #tpu.memory_space<vmem>>, vector<64x160xf32>
    %c0_1 = arith.constant 0 : index
    %c0_2 = arith.constant 0 : index
    %1 = vector.load %arg2[%c0_1, %c0_2] : memref<160x896xf32, #tpu.memory_space<vmem>>, vector<160x896xf32>
    %cst = arith.constant dense<0.000000e+00> : vector<64x896xf32>
    %2 = tpu.matmul %0, %1, %cst {dimension_numbers = #tpu.dot_dimension_numbers<[1], [0], [0], [1], [0, 0, 1, 1], [], []>} : vector<64x160xf32>, vector<160x896xf32>, vector<64x896xf32> -> vector<64x896xf32>
    %c0_3 = arith.constant 0 : index
    %c0_4 = arith.constant 0 : index
    %3 = vector.load %arg3[%c0_3, %c0_4] : memref<64x1xf32, #tpu.memory_space<vmem>>, vector<64x1xf32>
    %4 = vector.broadcast %3 : vector<64x1xf32> to vector<64x896xf32>
    %5 = arith.addf %2, %4 : vector<64x896xf32>
    %cst_5 = arith.constant 0.000000e+00 : f32
    %6 = vector.broadcast %cst_5 : f32 to vector<64x896xf32>
    %7 = arith.maximumf %5, %6 : vector<64x896xf32>
    %c0_6 = arith.constant 0 : index
    %c0_7 = arith.constant 0 : index
    %8 = vector.load %arg4[%c0_6, %c0_7] : memref<64x896xf32, #tpu.memory_space<vmem>>, vector<64x896xf32>
    tpu.vector_store %arg4[%c0_6, %c0_7], %7 {strides = array<i32>} : memref<64x896xf32, #tpu.memory_space<vmem>>, vector<64x896xf32>,
    return
  }
  func.func @transform_0(%arg0: i32) -> (i32, i32) {
    %c0_i32 = arith.constant 0 : i32
    %c0_i32_0 = arith.constant 0 : i32
    %c0_i32_1 = arith.constant 0 : i32
    return %c0_i32, %c0_i32_0 : i32, i32
  }
  func.func @transform_1(%arg0: i32) -> (i32, i32) {
    %c0_i32 = arith.constant 0 : i32
    %c0_i32_0 = arith.constant 0 : i32
    return %c0_i32, %arg0 : i32, i32
  }
  func.func @transform_2(%arg0: i32) -> (i32, i32) {
    %c0_i32 = arith.constant 0 : i32
    %c0_i32_0 = arith.constant 0 : i32
    %c0_i32_1 = arith.constant 0 : i32
    return %c0_i32, %c0_i32_0 : i32, i32
  }
  func.func @transform_3(%arg0: i32) -> (i32, i32) {
    %c0_i32 = arith.constant 0 : i32
    %c0_i32_0 = arith.constant 0 : i32
    return %c0_i32, %arg0 : i32, i32
  }
}

module attributes {stable_mosaic.version = 11 : i64} {
  func.func @_fused_matmul_kernel(%arg0: i32, %arg1: memref<64x320xf32, #tpu.memory_space<vmem>>, %arg2: memref<320x256xf32, #tpu.memory_space<vmem>>, %arg3: memref<64x1xf32, #tpu.memory_space<vmem>>, %arg4: memref<64x256xf32, #tpu.memory_space<vmem>>) attributes {dimension_semantics = [#tpu.dimension_semantics<parallel>], iteration_bounds = array<i64: 1>, scalar_prefetch = 0 : i64, scratch_operands = 0 : i64, tpu.core_type = #tpu.core_type<tc>, window_params = [{pipeline_mode = #tpu.pipeline_mode<synchronous>, transform_indices = @transform_0, window_bounds = array<i64: 64, 320>}, {transform_indices = @transform_1, window_bounds = array<i64: 320, 256>}, {pipeline_mode = #tpu.pipeline_mode<synchronous>, transform_indices = @transform_2, window_bounds = array<i64: 64, 1>}, {transform_indices = @transform_3, window_bounds = array<i64: 64, 256>}]} {
    %c0 = arith.constant 0 : index
    %c0_0 = arith.constant 0 : index
    %0 = vector.load %arg1[%c0, %c0_0] : memref<64x320xf32, #tpu.memory_space<vmem>>, vector<64x320xf32>
    %c0_1 = arith.constant 0 : index
    %c0_2 = arith.constant 0 : index
    %1 = vector.load %arg2[%c0_1, %c0_2] : memref<320x256xf32, #tpu.memory_space<vmem>>, vector<320x256xf32>
    %cst = arith.constant dense<0.000000e+00> : vector<64x256xf32>
    %2 = tpu.matmul %0, %1, %cst {dimension_numbers = #tpu.dot_dimension_numbers<[1], [0], [0], [1], [0, 0, 1, 1], [], []>} : vector<64x320xf32>, vector<320x256xf32>, vector<64x256xf32> -> vector<64x256xf32>
    %c0_3 = arith.constant 0 : index
    %c0_4 = arith.constant 0 : index
    %3 = vector.load %arg3[%c0_3, %c0_4] : memref<64x1xf32, #tpu.memory_space<vmem>>, vector<64x1xf32>
    %4 = vector.broadcast %3 : vector<64x1xf32> to vector<64x256xf32>
    %5 = arith.addf %2, %4 : vector<64x256xf32>
    %cst_5 = arith.constant 0.000000e+00 : f32
    %6 = vector.broadcast %cst_5 : f32 to vector<64x256xf32>
    %7 = arith.maximumf %5, %6 : vector<64x256xf32>
    %c0_6 = arith.constant 0 : index
    %c0_7 = arith.constant 0 : index
    %8 = vector.load %arg4[%c0_6, %c0_7] : memref<64x256xf32, #tpu.memory_space<vmem>>, vector<64x256xf32>
    tpu.vector_store %arg4[%c0_6, %c0_7], %7 {strides = array<i32>} : memref<64x256xf32, #tpu.memory_space<vmem>>, vector<64x256xf32>,
    return
  }
  func.func @transform_0(%arg0: i32) -> (i32, i32) {
    %c0_i32 = arith.constant 0 : i32
    %c0_i32_0 = arith.constant 0 : i32
    %c0_i32_1 = arith.constant 0 : i32
    return %c0_i32, %c0_i32_0 : i32, i32
  }
  func.func @transform_1(%arg0: i32) -> (i32, i32) {
    %c0_i32 = arith.constant 0 : i32
    %c0_i32_0 = arith.constant 0 : i32
    return %c0_i32, %arg0 : i32, i32
  }
  func.func @transform_2(%arg0: i32) -> (i32, i32) {
    %c0_i32 = arith.constant 0 : i32
    %c0_i32_0 = arith.constant 0 : i32
    %c0_i32_1 = arith.constant 0 : i32
    return %c0_i32, %c0_i32_0 : i32, i32
  }
  func.func @transform_3(%arg0: i32) -> (i32, i32) {
    %c0_i32 = arith.constant 0 : i32
    %c0_i32_0 = arith.constant 0 : i32
    return %c0_i32, %arg0 : i32, i32
  }
}

module attributes {stable_mosaic.version = 11 : i64} {
  func.func @_fused_matmul_kernel(%arg0: i32, %arg1: memref<5x64xf32, #tpu.memory_space<vmem>>, %arg2: memref<64x256xf32, #tpu.memory_space<vmem>>, %arg3: memref<5x1xf32, #tpu.memory_space<vmem>>, %arg4: memref<5x256xf32, #tpu.memory_space<vmem>>) attributes {dimension_semantics = [#tpu.dimension_semantics<parallel>], iteration_bounds = array<i64: 1>, scalar_prefetch = 0 : i64, scratch_operands = 0 : i64, tpu.core_type = #tpu.core_type<tc>, window_params = [{pipeline_mode = #tpu.pipeline_mode<synchronous>, transform_indices = @transform_0, window_bounds = array<i64: 5, 64>}, {transform_indices = @transform_1, window_bounds = array<i64: 64, 256>}, {pipeline_mode = #tpu.pipeline_mode<synchronous>, transform_indices = @transform_2, window_bounds = array<i64: 5, 1>}, {transform_indices = @transform_3, window_bounds = array<i64: 5, 256>}]} {
    %c0 = arith.constant 0 : index
    %c0_0 = arith.constant 0 : index
    %0 = vector.load %arg1[%c0, %c0_0] : memref<5x64xf32, #tpu.memory_space<vmem>>, vector<5x64xf32>
    %c0_1 = arith.constant 0 : index
    %c0_2 = arith.constant 0 : index
    %1 = vector.load %arg2[%c0_1, %c0_2] : memref<64x256xf32, #tpu.memory_space<vmem>>, vector<64x256xf32>
    %cst = arith.constant dense<0.000000e+00> : vector<5x256xf32>
    %2 = tpu.matmul %0, %1, %cst {dimension_numbers = #tpu.dot_dimension_numbers<[1], [0], [0], [1], [0, 0, 1, 1], [], []>} : vector<5x64xf32>, vector<64x256xf32>, vector<5x256xf32> -> vector<5x256xf32>
    %c0_3 = arith.constant 0 : index
    %c0_4 = arith.constant 0 : index
    %3 = vector.load %arg3[%c0_3, %c0_4] : memref<5x1xf32, #tpu.memory_space<vmem>>, vector<5x1xf32>
    %4 = vector.broadcast %3 : vector<5x1xf32> to vector<5x256xf32>
    %5 = arith.addf %2, %4 : vector<5x256xf32>
    %cst_5 = arith.constant 0.000000e+00 : f32
    %6 = vector.broadcast %cst_5 : f32 to vector<5x256xf32>
    %7 = arith.maximumf %5, %6 : vector<5x256xf32>
    %c0_6 = arith.constant 0 : index
    %c0_7 = arith.constant 0 : index
    %8 = vector.load %arg4[%c0_6, %c0_7] : memref<5x256xf32, #tpu.memory_space<vmem>>, vector<5x256xf32>
    tpu.vector_store %arg4[%c0_6, %c0_7], %7 {strides = array<i32>} : memref<5x256xf32, #tpu.memory_space<vmem>>, vector<5x256xf32>,
    return
  }
  func.func @transform_0(%arg0: i32) -> (i32, i32) {
    %c0_i32 = arith.constant 0 : i32
    %c0_i32_0 = arith.constant 0 : i32
    %c0_i32_1 = arith.constant 0 : i32
    return %c0_i32, %c0_i32_0 : i32, i32
  }
  func.func @transform_1(%arg0: i32) -> (i32, i32) {
    %c0_i32 = arith.constant 0 : i32
    %c0_i32_0 = arith.constant 0 : i32
    return %c0_i32, %arg0 : i32, i32
  }
  func.func @transform_2(%arg0: i32) -> (i32, i32) {
    %c0_i32 = arith.constant 0 : i32
    %c0_i32_0 = arith.constant 0 : i32
    %c0_i32_1 = arith.constant 0 : i32
    return %c0_i32, %c0_i32_0 : i32, i32
  }
  func.func @transform_3(%arg0: i32) -> (i32, i32) {
    %c0_i32 = arith.constant 0 : i32
    %c0_i32_0 = arith.constant 0 : i32
    return %c0_i32, %arg0 : i32, i32
  }
}

module attributes {stable_mosaic.version = 11 : i64} {
  func.func @_fused_matmul_kernel(%arg0: i32, %arg1: memref<100x416xf32, #tpu.memory_space<vmem>>, %arg2: memref<416x128xf32, #tpu.memory_space<vmem>>, %arg3: memref<100x1xf32, #tpu.memory_space<vmem>>, %arg4: memref<100x128xf32, #tpu.memory_space<vmem>>) attributes {dimension_semantics = [#tpu.dimension_semantics<parallel>], iteration_bounds = array<i64: 1>, scalar_prefetch = 0 : i64, scratch_operands = 0 : i64, tpu.core_type = #tpu.core_type<tc>, window_params = [{pipeline_mode = #tpu.pipeline_mode<synchronous>, transform_indices = @transform_0, window_bounds = array<i64: 100, 416>}, {transform_indices = @transform_1, window_bounds = array<i64: 416, 128>}, {pipeline_mode = #tpu.pipeline_mode<synchronous>, transform_indices = @transform_2, window_bounds = array<i64: 100, 1>}, {transform_indices = @transform_3, window_bounds = array<i64: 100, 128>}]} {
    %c0 = arith.constant 0 : index
    %c0_0 = arith.constant 0 : index
    %0 = vector.load %arg1[%c0, %c0_0] : memref<100x416xf32, #tpu.memory_space<vmem>>, vector<100x416xf32>
    %c0_1 = arith.constant 0 : index
    %c0_2 = arith.constant 0 : index
    %1 = vector.load %arg2[%c0_1, %c0_2] : memref<416x128xf32, #tpu.memory_space<vmem>>, vector<416x128xf32>
    %cst = arith.constant dense<0.000000e+00> : vector<100x128xf32>
    %2 = tpu.matmul %0, %1, %cst {dimension_numbers = #tpu.dot_dimension_numbers<[1], [0], [0], [1], [0, 0, 1, 1], [], []>} : vector<100x416xf32>, vector<416x128xf32>, vector<100x128xf32> -> vector<100x128xf32>
    %c0_3 = arith.constant 0 : index
    %c0_4 = arith.constant 0 : index
    %3 = vector.load %arg3[%c0_3, %c0_4] : memref<100x1xf32, #tpu.memory_space<vmem>>, vector<100x1xf32>
    %4 = vector.broadcast %3 : vector<100x1xf32> to vector<100x128xf32>
    %5 = arith.addf %2, %4 : vector<100x128xf32>
    %cst_5 = arith.constant 0.000000e+00 : f32
    %6 = vector.broadcast %cst_5 : f32 to vector<100x128xf32>
    %7 = arith.maximumf %5, %6 : vector<100x128xf32>
    %c0_6 = arith.constant 0 : index
    %c0_7 = arith.constant 0 : index
    %8 = vector.load %arg4[%c0_6, %c0_7] : memref<100x128xf32, #tpu.memory_space<vmem>>, vector<100x128xf32>
    tpu.vector_store %arg4[%c0_6, %c0_7], %7 {strides = array<i32>} : memref<100x128xf32, #tpu.memory_space<vmem>>, vector<100x128xf32>,
    return
  }
  func.func @transform_0(%arg0: i32) -> (i32, i32) {
    %c0_i32 = arith.constant 0 : i32
    %c0_i32_0 = arith.constant 0 : i32
    %c0_i32_1 = arith.constant 0 : i32
    return %c0_i32, %c0_i32_0 : i32, i32
  }
  func.func @transform_1(%arg0: i32) -> (i32, i32) {
    %c0_i32 = arith.constant 0 : i32
    %c0_i32_0 = arith.constant 0 : i32
    return %c0_i32, %arg0 : i32, i32
  }
  func.func @transform_2(%arg0: i32) -> (i32, i32) {
    %c0_i32 = arith.constant 0 : i32
    %c0_i32_0 = arith.constant 0 : i32
    %c0_i32_1 = arith.constant 0 : i32
    return %c0_i32, %c0_i32_0 : i32, i32
  }
  func.func @transform_3(%arg0: i32) -> (i32, i32) {
    %c0_i32 = arith.constant 0 : i32
    %c0_i32_0 = arith.constant 0 : i32
    return %c0_i32, %arg0 : i32, i32
  }
}

module attributes {stable_mosaic.version = 11 : i64} {
  func.func @_fused_matmul_kernel(%arg0: i32, %arg1: memref<12x104xf32, #tpu.memory_space<vmem>>, %arg2: memref<104x128xf32, #tpu.memory_space<vmem>>, %arg3: memref<12x1xf32, #tpu.memory_space<vmem>>, %arg4: memref<12x128xf32, #tpu.memory_space<vmem>>) attributes {dimension_semantics = [#tpu.dimension_semantics<parallel>], iteration_bounds = array<i64: 1>, scalar_prefetch = 0 : i64, scratch_operands = 0 : i64, tpu.core_type = #tpu.core_type<tc>, window_params = [{pipeline_mode = #tpu.pipeline_mode<synchronous>, transform_indices = @transform_0, window_bounds = array<i64: 12, 104>}, {transform_indices = @transform_1, window_bounds = array<i64: 104, 128>}, {pipeline_mode = #tpu.pipeline_mode<synchronous>, transform_indices = @transform_2, window_bounds = array<i64: 12, 1>}, {transform_indices = @transform_3, window_bounds = array<i64: 12, 128>}]} {
    %c0 = arith.constant 0 : index
    %c0_0 = arith.constant 0 : index
    %0 = vector.load %arg1[%c0, %c0_0] : memref<12x104xf32, #tpu.memory_space<vmem>>, vector<12x104xf32>
    %c0_1 = arith.constant 0 : index
    %c0_2 = arith.constant 0 : index
    %1 = vector.load %arg2[%c0_1, %c0_2] : memref<104x128xf32, #tpu.memory_space<vmem>>, vector<104x128xf32>
    %cst = arith.constant dense<0.000000e+00> : vector<12x128xf32>
    %2 = tpu.matmul %0, %1, %cst {dimension_numbers = #tpu.dot_dimension_numbers<[1], [0], [0], [1], [0, 0, 1, 1], [], []>} : vector<12x104xf32>, vector<104x128xf32>, vector<12x128xf32> -> vector<12x128xf32>
    %c0_3 = arith.constant 0 : index
    %c0_4 = arith.constant 0 : index
    %3 = vector.load %arg3[%c0_3, %c0_4] : memref<12x1xf32, #tpu.memory_space<vmem>>, vector<12x1xf32>
    %4 = vector.broadcast %3 : vector<12x1xf32> to vector<12x128xf32>
    %5 = arith.addf %2, %4 : vector<12x128xf32>
    %c0_5 = arith.constant 0 : index
    %c0_6 = arith.constant 0 : index
    %6 = vector.load %arg4[%c0_5, %c0_6] : memref<12x128xf32, #tpu.memory_space<vmem>>, vector<12x128xf32>
    tpu.vector_store %arg4[%c0_5, %c0_6], %5 {strides = array<i32>} : memref<12x128xf32, #tpu.memory_space<vmem>>, vector<12x128xf32>,
    return
  }
  func.func @transform_0(%arg0: i32) -> (i32, i32) {
    %c0_i32 = arith.constant 0 : i32
    %c0_i32_0 = arith.constant 0 : i32
    %c0_i32_1 = arith.constant 0 : i32
    return %c0_i32, %c0_i32_0 : i32, i32
  }
  func.func @transform_1(%arg0: i32) -> (i32, i32) {
    %c0_i32 = arith.constant 0 : i32
    %c0_i32_0 = arith.constant 0 : i32
    return %c0_i32, %arg0 : i32, i32
  }
  func.func @transform_2(%arg0: i32) -> (i32, i32) {
    %c0_i32 = arith.constant 0 : i32
    %c0_i32_0 = arith.constant 0 : i32
    %c0_i32_1 = arith.constant 0 : i32
    return %c0_i32, %c0_i32_0 : i32, i32
  }
  func.func @transform_3(%arg0: i32) -> (i32, i32) {
    %c0_i32 = arith.constant 0 : i32
    %c0_i32_0 = arith.constant 0 : i32
    return %c0_i32, %arg0 : i32, i32
  }
}

</mosaic_0001>

<llo_original>
// kernel: convolutional_net_forward.7
$region0: #{convolutional_net_forward.7}
  #allocation0 [shape = 'u32[]', space=smem, size = 0x4, offset = 0x4, fixed_abs, tag = 'smem constant byte address 0x4 - core index']
  #allocation1 [shape = 'u32[144,128]{1,0:T(1,128)}', space=vmem, size = 0x12000, scoped, tag = 'internal scratch']
  %s0 = inlined_call_operand.vmem [shape: f32[16,8], index: 0, kind: input, shape index: {}]
  %s1 = inlined_call_operand.vmem [shape: f32[8,21504], index: 1, kind: input, shape index: {}]
  %s2 = inlined_call_operand.vmem [shape: f32[16,1], index: 2, kind: input, shape index: {}]
  %s3 = inlined_call_operand.vmem [shape: f32[16,21504], index: 3, kind: output, shape index: {}]
  %s4 = sld [smem:[#allocation0]]
  $region64: #{convolutional_net_forward.7} parent=0
    _
  %s6 = ssub.s32 1, %s4
  %s7 = scalar_select 0, %s6, %s4
  $region1: #{convolutional_net_forward.7} parent=0
    #allocation2 [shape = 'u8[131072]{0}', space=vmem, size = 0x20000, scoped, tag = 'output window, operand 0']
    loop: start=0, step=1, limit=23
    $region2: #{convolutional_net_forward.7} parent=1 // loop_pre_header
      _
    $region3: #{convolutional_net_forward.7} parent=1 // loop_header
      %s9 = sphi 0, %s13
      %p10 = scmp.ge.s32.totalorder %s9, 23
      %s17 = sphi 0, %s17
      %s19 = sphi 0, %s17
      %s20 = sphi 0, %s19
      %s34 = sphi 0, %s20
      %s40 = sphi 0, %s42
      %s43 = sphi 0, %s40
      %s44 = sphi 0, %s43
      %s60 = sphi 0, %s44
      %s64 = sphi 0, %s64
      %s66 = sphi 0, %s64
      %s67 = sphi 0, %s66
      %s81 = sphi 0, %s67
      %s87 = sphi 0, %s89
      %s90 = sphi 0, %s87
      %s91 = sphi 0, %s90
      %s107 = sphi 0, %s91
    $region4: #{convolutional_net_forward.7} parent=1 // loop_header_branch
      %12 = sbr.rel (%p10) target = $region8
    $region5: #{convolutional_net_forward.7} parent=1 // loop_body
      %s14 = ssub.s32 %s9, 1
      %s15 = ssub.s32 %s9, 2
      %s16 = sadd.s32 %s9, 1
      %s18 = sadd.s32 %s17, 1
      %p21 = scmp.eq.s32.totalorder %s9, 20
      %p22 = scmp.ne.s32.totalorder %s17, %s19
      %p23 = scmp.eq.s32.totalorder %s9, 0
      %p24 = por %p22, %p23
      %p25 = scmp.ne.s32.totalorder %s17, %s19
      %p26 = scmp.eq.s32.totalorder %s14, 20
      %p27 = por %p25, %p26
      %p28 = scmp.ne.s32.totalorder %s19, %s20
      %p29 = scmp.eq.s32.totalorder %s14, 0
      %p30 = por %p28, %p29
      %p31 = scmp.ne.s32.totalorder %s19, %s20
      %p32 = scmp.eq.s32.totalorder %s15, 20
      %p33 = por %p31, %p32
      %p35 = scmp.ne.s32.totalorder %s20, %s34
      %p36 = scmp.eq.s32.totalorder %s15, 0
      %p37 = por %p35, %p36
      %s38 = ssub.s32 %s9, %s16
      %p39 = scmp.eq.s32.totalorder %s38, 0
      %s41 = sadd.s32 %s40, 1
      %s42 = scalar_select %p39, %s40, %s41
      %p45 = pneg %p39
      %p46 = scmp.eq.s32.totalorder %s9, 20
      %p47 = por %p45, %p46
      %p48 = scmp.ne.s32.totalorder %s40, %s43
      %p49 = scmp.eq.s32.totalorder %s9, 0
      %p50 = por %p48, %p49
      %p51 = scmp.ne.s32.totalorder %s40, %s43
      %p52 = scmp.eq.s32.totalorder %s14, 20
      %p53 = por %p51, %p52
      %p54 = scmp.ne.s32.totalorder %s43, %s44
      %p55 = scmp.eq.s32.totalorder %s14, 0
      %p56 = por %p54, %p55
      %p57 = scmp.ne.s32.totalorder %s43, %s44
      %p58 = scmp.eq.s32.totalorder %s15, 20
      %p59 = por %p57, %p58
      %p61 = scmp.ne.s32.totalorder %s44, %s60
      %p62 = scmp.eq.s32.totalorder %s15, 0
      %p63 = por %p61, %p62
      %s65 = sadd.s32 %s64, 1
      %p68 = scmp.eq.s32.totalorder %s9, 20
      %p69 = scmp.ne.s32.totalorder %s64, %s66
      %p70 = scmp.eq.s32.totalorder %s9, 0
      %p71 = por %p69, %p70
      %p72 = scmp.ne.s32.totalorder %s64, %s66
      %p73 = scmp.eq.s32.totalorder %s14, 20
      %p74 = por %p72, %p73
      %p75 = scmp.ne.s32.totalorder %s66, %s67
      %p76 = scmp.eq.s32.totalorder %s14, 0
      %p77 = por %p75, %p76
      %p78 = scmp.ne.s32.totalorder %s66, %s67
      %p79 = scmp.eq.s32.totalorder %s15, 20
      %p80 = por %p78, %p79
      %p82 = scmp.ne.s32.totalorder %s67, %s81
      %p83 = scmp.eq.s32.totalorder %s15, 0
      %p84 = por %p82, %p83
      %s85 = ssub.s32 %s9, %s16
      %p86 = scmp.eq.s32.totalorder %s85, 0
      %s88 = sadd.s32 %s87, 1
      %s89 = scalar_select %p86, %s87, %s88
      %p92 = pneg %p86
      %p93 = scmp.eq.s32.totalorder %s9, 20
      %p94 = por %p92, %p93
      %p95 = scmp.ne.s32.totalorder %s87, %s90
      %p96 = scmp.eq.s32.totalorder %s9, 0
      %p97 = por %p95, %p96
      %p98 = scmp.ne.s32.totalorder %s87, %s90
      %p99 = scmp.eq.s32.totalorder %s14, 20
      %p100 = por %p98, %p99
      %p101 = scmp.ne.s32.totalorder %s90, %s91
      %p102 = scmp.eq.s32.totalorder %s14, 0
      %p103 = por %p101, %p102
      %p104 = scmp.ne.s32.totalorder %s90, %s91
      %p105 = scmp.eq.s32.totalorder %s15, 20
      %p106 = por %p104, %p105
      %p108 = scmp.ne.s32.totalorder %s91, %s107
      %p109 = scmp.eq.s32.totalorder %s15, 0
      %p110 = por %p108, %p109
      %p111 = scmp.le.s32.totalorder 1, %s9
      %p112 = scmp.lt.s32.totalorder %s9, 22
      %p113 = pnand %p111, %p112
      %p114 = pneg %p113
      // Predicated region
      $region9: #{convolutional_net_forward.7} parent=5 // pred_check
        _
      $region10: #{convolutional_net_forward.7} parent=5 // pred_check_branch
        %116 = sbr.rel (%p113) target = $region12
      $region11: #{convolutional_net_forward.7} parent=5 // pred_region
        %s117 = ssub.s32 %s9, 1
        // Predicated region
        $region13: #{convolutional_net_forward.7} parent=11 // pred_check
          %p118 = pneg %p30
        $region14: #{convolutional_net_forward.7} parent=11 // pred_check_branch
          %120 = sbr.rel (%p118) target = $region16
        $region15: #{convolutional_net_forward.7} parent=11 // pred_region
          _
        $region16: #{convolutional_net_forward.7} parent=11 // pred_fallthru
          _
        // Predicated region
        $region17: #{convolutional_net_forward.7} parent=11 // pred_check
          %p121 = pneg %p77
        $region18: #{convolutional_net_forward.7} parent=11 // pred_check_branch
          %123 = sbr.rel (%p121) target = $region20
        $region19: #{convolutional_net_forward.7} parent=11 // pred_region
          _
        $region20: #{convolutional_net_forward.7} parent=11 // pred_fallthru
          _
      $region12: #{convolutional_net_forward.7} parent=5 // pred_fallthru
        _
      %p124 = scmp.lt.s32.totalorder %s9, 21
      // Predicated region
      $region21: #{convolutional_net_forward.7} parent=5 // pred_check
        %p125 = pneg %p124
      $region22: #{convolutional_net_forward.7} parent=5 // pred_check_branch
        %127 = sbr.rel (%p125) target = $region24
      $region23: #{convolutional_net_forward.7} parent=5 // pred_region
        // Predicated region
        $region25: #{convolutional_net_forward.7} parent=23 // pred_check
          %p128 = pneg %p50
        $region26: #{convolutional_net_forward.7} parent=23 // pred_check_branch
          %130 = sbr.rel (%p128) target = $region28
        $region27: #{convolutional_net_forward.7} parent=23 // pred_region
          %s131 = smul.u32 8, %s9
          %p132 = scmp.lt.s32.totalorder %s131, 167
          %s133 = scalar_select %p132, %s131, 167
          %s134 = smul.addr %s133, 8
          %s135 = scalar_lea.vmem %s1, %s134
          %s136 = smul.u32 8, %s9
        $region28: #{convolutional_net_forward.7} parent=23 // pred_fallthru
          _
      $region24: #{convolutional_net_forward.7} parent=5 // pred_fallthru
        _
      %p137 = scmp.le.s32.totalorder 1, %s9
      %p138 = scmp.lt.s32.totalorder %s9, 22
      %p139 = pnand %p137, %p138
      %p140 = pneg %p139
      // Predicated region
      $region29: #{convolutional_net_forward.7} parent=5 // pred_check
        _
      $region30: #{convolutional_net_forward.7} parent=5 // pred_check_branch
        %142 = sbr.rel (%p139) target = $region32
      $region31: #{convolutional_net_forward.7} parent=5 // pred_region
        %s143 = ssub.s32 %s9, 1
        %p144 = pneg %p30
        %p145 = pneg %p27
        %s146 = smul.u32 8, %s14
        %p147 = scmp.lt.s32.totalorder %s146, 167
        %s148 = scalar_select %p147, %s146, 167
        %s149 = smul.addr %s148, 8
        %s150 = scalar_lea.vmem %s1, %s149
        %p151 = pneg %p56
        %p152 = pneg %p53
        %p153 = pneg %p77
        %p154 = pneg %p74
        %p155 = pneg %p103
        %p156 = pneg %p100
        %s157 = sand.u32 %s90, 1
        %s158 = sand.u32 %s90, 1
        %s159 = smul.addr %s158, 128
        %s160 = scalar_lea.vmem [#allocation2], %s159
        %s161 = smul.u32 8, %s14
        %p162 = scmp.lt.s32.totalorder %s161, 167
        %s163 = scalar_select %p162, %s161, 167
        %s164 = smul.addr %s163, 8
        %s165 = scalar_lea.vmem %s1, %s164
        %s166 = smul.u32 8, %s14
        %s167 = smul.u32 8, %s14
        %v168 = vld [vmem:[%s0] sm:$0xff]
        %v169 = vld [vmem:[%s0 + $0x8] sm:$0xff]
        %v170 = vld [vmem:[%s165] sm:$0xff]
        %v171 = vld [vmem:[%s165 + $0x8] sm:$0xff]
        %v172 = vld [vmem:[%s165 + $0x10] sm:$0xff]
        %v173 = vld [vmem:[%s165 + $0x18] sm:$0xff]
        %v174 = vld [vmem:[%s165 + $0x20] sm:$0xff]
        %v175 = vld [vmem:[%s165 + $0x28] sm:$0xff]
        %v176 = vld [vmem:[%s165 + $0x30] sm:$0xff]
        %v177 = vld [vmem:[%s165 + $0x38] sm:$0xff]
        %v178 = vld [vmem:[%s2] sm:$0xff]
        %v179 = vld [vmem:[%s2 + $0x8] sm:$0xff]
        %181 = vset.pattern.permute.xlu0 0
        %182 = vperm.xlu0 %181, %v178
        %v183 = vpop.permute.xlu0 %182
        %186 = vset.pattern.permute.xlu0 0
        %187 = vperm.xlu0 %186, %v179
        %v188 = vpop.permute.xlu0 %187
        %vm190 = vcmask 64512
        %v192 = vsel %vm190, %v168, 0
        %v195 = vsel %vm190, %v169, 0
        %197 = vmatprep.subr.mxu0 0.0
        %198 = vmatpush1.msra.mxu0 0.0
        %199 = vmatprep.subr.mxu0 0.0
        %200 = vmatpush1.msra.mxu0 0.0
        %201 = vmatprep.subr.mxu0 0.0
        %202 = vmatpush1.msra.mxu0 0.0
        %203 = vmatprep.subr.mxu0 0.0
        %204 = vmatpush1.msra.mxu0 0.0
        %205 = vmatprep.subr.mxu0 0.0
        %206 = vmatpush1.msra.mxu0 0.0
        %207 = vmatprep.subr.mxu0 0.0
        %208 = vmatpush1.msra.mxu0 0.0
        %209 = vmatprep.subr.mxu0 0.0
        %210 = vmatpush1.msra.mxu0 0.0
        %211 = vmatprep.subr.mxu0 0.0
        %212 = vmatpush1.msra.mxu0 0.0
        %213 = vmatprep.subr.mxu0 0.0
        %214 = vmatpush1.msra.mxu0 0.0
        %215 = vmatprep.subr.mxu0 0.0
        %216 = vmatpush1.msra.mxu0 0.0
        %217 = vmatprep.subr.mxu0 0.0
        %218 = vmatpush1.msra.mxu0 0.0
        %219 = vmatprep.subr.mxu0 0.0
        %220 = vmatpush1.msra.mxu0 0.0
        %221 = vmatprep.subr.mxu0 0.0
        %222 = vmatpush1.msra.mxu0 0.0
        %223 = vmatprep.subr.mxu0 0.0
        %224 = vmatpush1.msra.mxu0 0.0
        %225 = vmatprep.subr.mxu0 0.0
        %226 = vmatpush1.msra.mxu0 0.0
        %227 = vmatprep.subr.mxu0 %v171
        %228 = vmatpush1.msra.mxu0 %v170
        %229 = vmatprep.subr.mxu0 0.0
        %230 = vmatpush2.msra.mxu0 0.0
        %231 = vmatprep.subr.mxu0 0.0
        %232 = vmatpush2.msra.mxu0 0.0
        %233 = vmatprep.subr.mxu0 0.0
        %234 = vmatpush2.msra.mxu0 0.0
        %235 = vmatprep.subr.mxu0 0.0
        %236 = vmatpush2.msra.mxu0 0.0
        %237 = vmatprep.subr.mxu0 0.0
        %238 = vmatpush2.msra.mxu0 0.0
        %239 = vmatprep.subr.mxu0 0.0
        %240 = vmatpush2.msra.mxu0 0.0
        %241 = vmatprep.subr.mxu0 0.0
        %242 = vmatpush2.msra.mxu0 0.0
        %243 = vmatprep.subr.mxu0 0.0
        %244 = vmatpush2.msra.mxu0 0.0
        %245 = vmatprep.subr.mxu0 0.0
        %246 = vmatpush2.msra.mxu0 0.0
        %247 = vmatprep.subr.mxu0 0.0
        %248 = vmatpush2.msra.mxu0 0.0
        %249 = vmatprep.subr.mxu0 0.0
        %250 = vmatpush2.msra.mxu0 0.0
        %251 = vmatprep.subr.mxu0 0.0
        %252 = vmatpush2.msra.mxu0 0.0
        %253 = vmatprep.subr.mxu0 0.0
        %254 = vmatpush2.msra.mxu0 0.0
        %255 = vmatprep.subr.mxu0 0.0
        %256 = vmatpush2.msra.mxu0 0.0
        %257 = vmatprep.subr.mxu0 0.0
        %258 = vmatpush2.msra.mxu0 0.0
        %259 = vmatprep.subr.mxu0 0.0
        %260 = vmatpush2.msra.mxu0 0.0
        %261 = vmatprep.mubr.f32.mxu0 0.0
        %262 = vmatmul.mubr.f32.gmra.mxu0 %v192
        %v263 = vpop.f32.mrf.mxu0
        %v264 = vadd.f32 %v183, %v263
        %v265 = vpop.f32.mrf.mxu0
        %v266 = vadd.f32 %v183, %v265
        %267 = vmatprep.mubr.f32.mxu0 0.0
        %268 = vmatmul.mubr.f32.gmra.mxu0 %v195
        %v269 = vpop.f32.mrf.mxu0
        %v270 = vadd.f32 %v188, %v269
        %v271 = vpop.f32.mrf.mxu0
        %v272 = vadd.f32 %v188, %v271
        %273 = vdwg.mxu0
        %274 = vmatprep.subr.mxu0 0.0
        %275 = vmatpush1.msra.mxu0 0.0
        %276 = vmatprep.subr.mxu0 0.0
        %277 = vmatpush1.msra.mxu0 0.0
        %278 = vmatprep.subr.mxu0 0.0
        %279 = vmatpush1.msra.mxu0 0.0
        %280 = vmatprep.subr.mxu0 0.0
        %281 = vmatpush1.msra.mxu0 0.0
        %282 = vmatprep.subr.mxu0 0.0
        %283 = vmatpush1.msra.mxu0 0.0
        %284 = vmatprep.subr.mxu0 0.0
        %285 = vmatpush1.msra.mxu0 0.0
        %286 = vmatprep.subr.mxu0 0.0
        %287 = vmatpush1.msra.mxu0 0.0
        %288 = vmatprep.subr.mxu0 0.0
        %289 = vmatpush1.msra.mxu0 0.0
        %290 = vmatprep.subr.mxu0 0.0
        %291 = vmatpush1.msra.mxu0 0.0
        %292 = vmatprep.subr.mxu0 0.0
        %293 = vmatpush1.msra.mxu0 0.0
        %294 = vmatprep.subr.mxu0 0.0
        %295 = vmatpush1.msra.mxu0 0.0
        %296 = vmatprep.subr.mxu0 0.0
        %297 = vmatpush1.msra.mxu0 0.0
        %298 = vmatprep.subr.mxu0 0.0
        %299 = vmatpush1.msra.mxu0 0.0
        %300 = vmatprep.subr.mxu0 0.0
        %301 = vmatpush1.msra.mxu0 0.0
        %302 = vmatprep.subr.mxu0 0.0
        %303 = vmatpush1.msra.mxu0 0.0
        %304 = vmatprep.subr.mxu0 %v173
        %305 = vmatpush1.msra.mxu0 %v172
        %306 = vmatprep.subr.mxu0 0.0
        %307 = vmatpush2.msra.mxu0 0.0
        %308 = vmatprep.subr.mxu0 0.0
        %309 = vmatpush2.msra.mxu0 0.0
        %310 = vmatprep.subr.mxu0 0.0
        %311 = vmatpush2.msra.mxu0 0.0
        %312 = vmatprep.subr.mxu0 0.0
        %313 = vmatpush2.msra.mxu0 0.0
        %314 = vmatprep.subr.mxu0 0.0
        %315 = vmatpush2.msra.mxu0 0.0
        %316 = vmatprep.subr.mxu0 0.0
        %317 = vmatpush2.msra.mxu0 0.0
        %318 = vmatprep.subr.mxu0 0.0
        %319 = vmatpush2.msra.mxu0 0.0
        %320 = vmatprep.subr.mxu0 0.0
        %321 = vmatpush2.msra.mxu0 0.0
        %322 = vmatprep.subr.mxu0 0.0
        %323 = vmatpush2.msra.mxu0 0.0
        %324 = vmatprep.subr.mxu0 0.0
        %325 = vmatpush2.msra.mxu0 0.0
        %326 = vmatprep.subr.mxu0 0.0
        %327 = vmatpush2.msra.mxu0 0.0
        %328 = vmatprep.subr.mxu0 0.0
        %329 = vmatpush2.msra.mxu0 0.0
        %330 = vmatprep.subr.mxu0 0.0
        %331 = vmatpush2.msra.mxu0 0.0
        %332 = vmatprep.subr.mxu0 0.0
        %333 = vmatpush2.msra.mxu0 0.0
        %334 = vmatprep.subr.mxu0 0.0
        %335 = vmatpush2.msra.mxu0 0.0
        %336 = vmatprep.subr.mxu0 0.0
        %337 = vmatpush2.msra.mxu0 0.0
        %338 = vmatprep.mubr.f32.mxu0 0.0
        %339 = vmatmul.mubr.f32.gmra.mxu0 %v192
        %v340 = vpop.f32.mrf.mxu0
        %v341 = vadd.f32 %v183, %v340
        %v342 = vpop.f32.mrf.mxu0
        %v343 = vadd.f32 %v183, %v342
        %344 = vmatprep.mubr.f32.mxu0 0.0
        %345 = vmatmul.mubr.f32.gmra.mxu0 %v195
        %v346 = vpop.f32.mrf.mxu0
        %v347 = vadd.f32 %v188, %v346
        %v348 = vpop.f32.mrf.mxu0
        %v349 = vadd.f32 %v188, %v348
        %350 = vdwg.mxu0
        %351 = vmatprep.subr.mxu0 0.0
        %352 = vmatpush1.msra.mxu0 0.0
        %353 = vmatprep.subr.mxu0 0.0
        %354 = vmatpush1.msra.mxu0 0.0
        %355 = vmatprep.subr.mxu0 0.0
        %356 = vmatpush1.msra.mxu0 0.0
        %357 = vmatprep.subr.mxu0 0.0
        %358 = vmatpush1.msra.mxu0 0.0
        %359 = vmatprep.subr.mxu0 0.0
        %360 = vmatpush1.msra.mxu0 0.0
        %361 = vmatprep.subr.mxu0 0.0
        %362 = vmatpush1.msra.mxu0 0.0
        %363 = vmatprep.subr.mxu0 0.0
        %364 = vmatpush1.msra.mxu0 0.0
        %365 = vmatprep.subr.mxu0 0.0
        %366 = vmatpush1.msra.mxu0 0.0
        %367 = vmatprep.subr.mxu0 0.0
        %368 = vmatpush1.msra.mxu0 0.0
        %369 = vmatprep.subr.mxu0 0.0
        %370 = vmatpush1.msra.mxu0 0.0
        %371 = vmatprep.subr.mxu0 0.0
        %372 = vmatpush1.msra.mxu0 0.0
        %373 = vmatprep.subr.mxu0 0.0
        %374 = vmatpush1.msra.mxu0 0.0
        %375 = vmatprep.subr.mxu0 0.0
        %376 = vmatpush1.msra.mxu0 0.0
        %377 = vmatprep.subr.mxu0 0.0
        %378 = vmatpush1.msra.mxu0 0.0
        %379 = vmatprep.subr.mxu0 0.0
        %380 = vmatpush1.msra.mxu0 0.0
        %381 = vmatprep.subr.mxu0 %v175
        %382 = vmatpush1.msra.mxu0 %v174
        %383 = vmatprep.subr.mxu0 0.0
        %384 = vmatpush2.msra.mxu0 0.0
        %385 = vmatprep.subr.mxu0 0.0
        %386 = vmatpush2.msra.mxu0 0.0
        %387 = vmatprep.subr.mxu0 0.0
        %388 = vmatpush2.msra.mxu0 0.0
        %389 = vmatprep.subr.mxu0 0.0
        %390 = vmatpush2.msra.mxu0 0.0
        %391 = vmatprep.subr.mxu0 0.0
        %392 = vmatpush2.msra.mxu0 0.0
        %393 = vmatprep.subr.mxu0 0.0
        %394 = vmatpush2.msra.mxu0 0.0
        %395 = vmatprep.subr.mxu0 0.0
        %396 = vmatpush2.msra.mxu0 0.0
        %397 = vmatprep.subr.mxu0 0.0
        %398 = vmatpush2.msra.mxu0 0.0
        %399 = vmatprep.subr.mxu0 0.0
        %400 = vmatpush2.msra.mxu0 0.0
        %401 = vmatprep.subr.mxu0 0.0
        %402 = vmatpush2.msra.mxu0 0.0
        %403 = vmatprep.subr.mxu0 0.0
        %404 = vmatpush2.msra.mxu0 0.0
        %405 = vmatprep.subr.mxu0 0.0
        %406 = vmatpush2.msra.mxu0 0.0
        %407 = vmatprep.subr.mxu0 0.0
        %408 = vmatpush2.msra.mxu0 0.0
        %409 = vmatprep.subr.mxu0 0.0
        %410 = vmatpush2.msra.mxu0 0.0
        %411 = vmatprep.subr.mxu0 0.0
        %412 = vmatpush2.msra.mxu0 0.0
        %413 = vmatprep.subr.mxu0 0.0
        %414 = vmatpush2.msra.mxu0 0.0
        %415 = vmatprep.mubr.f32.mxu0 0.0
        %416 = vmatmul.mubr.f32.gmra.mxu0 %v192
        %v417 = vpop.f32.mrf.mxu0
        %v418 = vadd.f32 %v183, %v417
        %v419 = vpop.f32.mrf.mxu0
        %v420 = vadd.f32 %v183, %v419
        %421 = vmatprep.mubr.f32.mxu0 0.0
        %422 = vmatmul.mubr.f32.gmra.mxu0 %v195
        %v423 = vpop.f32.mrf.mxu0
        %v424 = vadd.f32 %v188, %v423
        %v425 = vpop.f32.mrf.mxu0
        %v426 = vadd.f32 %v188, %v425
        %427 = vdwg.mxu0
        %428 = vmatprep.subr.mxu0 0.0
        %429 = vmatpush1.msra.mxu0 0.0
        %430 = vmatprep.subr.mxu0 0.0
        %431 = vmatpush1.msra.mxu0 0.0
        %432 = vmatprep.subr.mxu0 0.0
        %433 = vmatpush1.msra.mxu0 0.0
        %434 = vmatprep.subr.mxu0 0.0
        %435 = vmatpush1.msra.mxu0 0.0
        %436 = vmatprep.subr.mxu0 0.0
        %437 = vmatpush1.msra.mxu0 0.0
        %438 = vmatprep.subr.mxu0 0.0
        %439 = vmatpush1.msra.mxu0 0.0
        %440 = vmatprep.subr.mxu0 0.0
        %441 = vmatpush1.msra.mxu0 0.0
        %442 = vmatprep.subr.mxu0 0.0
        %443 = vmatpush1.msra.mxu0 0.0
        %444 = vmatprep.subr.mxu0 0.0
        %445 = vmatpush1.msra.mxu0 0.0
        %446 = vmatprep.subr.mxu0 0.0
        %447 = vmatpush1.msra.mxu0 0.0
        %448 = vmatprep.subr.mxu0 0.0
        %449 = vmatpush1.msra.mxu0 0.0
        %450 = vmatprep.subr.mxu0 0.0
        %451 = vmatpush1.msra.mxu0 0.0
        %452 = vmatprep.subr.mxu0 0.0
        %453 = vmatpush1.msra.mxu0 0.0
        %454 = vmatprep.subr.mxu0 0.0
        %455 = vmatpush1.msra.mxu0 0.0
        %456 = vmatprep.subr.mxu0 0.0
        %457 = vmatpush1.msra.mxu0 0.0
        %458 = vmatprep.subr.mxu0 %v177
        %459 = vmatpush1.msra.mxu0 %v176
        %460 = vmatprep.subr.mxu0 0.0
        %461 = vmatpush2.msra.mxu0 0.0
        %462 = vmatprep.subr.mxu0 0.0
        %463 = vmatpush2.msra.mxu0 0.0
        %464 = vmatprep.subr.mxu0 0.0
        %465 = vmatpush2.msra.mxu0 0.0
        %466 = vmatprep.subr.mxu0 0.0
        %467 = vmatpush2.msra.mxu0 0.0
        %468 = vmatprep.subr.mxu0 0.0
        %469 = vmatpush2.msra.mxu0 0.0
        %470 = vmatprep.subr.mxu0 0.0
        %471 = vmatpush2.msra.mxu0 0.0
        %472 = vmatprep.subr.mxu0 0.0
        %473 = vmatpush2.msra.mxu0 0.0
        %474 = vmatprep.subr.mxu0 0.0
        %475 = vmatpush2.msra.mxu0 0.0
        %476 = vmatprep.subr.mxu0 0.0
        %477 = vmatpush2.msra.mxu0 0.0
        %478 = vmatprep.subr.mxu0 0.0
        %479 = vmatpush2.msra.mxu0 0.0
        %480 = vmatprep.subr.mxu0 0.0
        %481 = vmatpush2.msra.mxu0 0.0
        %482 = vmatprep.subr.mxu0 0.0
        %483 = vmatpush2.msra.mxu0 0.0
        %484 = vmatprep.subr.mxu0 0.0
        %485 = vmatpush2.msra.mxu0 0.0
        %486 = vmatprep.subr.mxu0 0.0
        %487 = vmatpush2.msra.mxu0 0.0
        %488 = vmatprep.subr.mxu0 0.0
        %489 = vmatpush2.msra.mxu0 0.0
        %490 = vmatprep.subr.mxu0 0.0
        %491 = vmatpush2.msra.mxu0 0.0
        %492 = vmatprep.mubr.f32.mxu0 0.0
        %493 = vmatmul.mubr.f32.gmra.mxu0 %v192
        %v494 = vpop.f32.mrf.mxu0
        %v495 = vadd.f32 %v183, %v494
        %v496 = vpop.f32.mrf.mxu0
        %v497 = vadd.f32 %v183, %v496
        %498 = vmatprep.mubr.f32.mxu0 0.0
        %499 = vmatmul.mubr.f32.gmra.mxu0 %v195
        %v500 = vpop.f32.mrf.mxu0
        %v501 = vadd.f32 %v188, %v500
        %v502 = vpop.f32.mrf.mxu0
        %v503 = vadd.f32 %v188, %v502
        %504 = vdwg.mxu0
        %v505 = vmax.f32 %v264, 0.0
        %v506 = vmax.f32 %v266, 0.0
        %v507 = vmax.f32 %v341, 0.0
        %v508 = vmax.f32 %v343, 0.0
        %v509 = vmax.f32 %v418, 0.0
        %v510 = vmax.f32 %v420, 0.0
        %v511 = vmax.f32 %v495, 0.0
        %v512 = vmax.f32 %v497, 0.0
        %v513 = vmax.f32 %v270, 0.0
        %v514 = vmax.f32 %v272, 0.0
        %v515 = vmax.f32 %v347, 0.0
        %v516 = vmax.f32 %v349, 0.0
        %v517 = vmax.f32 %v424, 0.0
        %v518 = vmax.f32 %v426, 0.0
        %v519 = vmax.f32 %v501, 0.0
        %v520 = vmax.f32 %v503, 0.0
        %521 = vst [vmem:[%s160] sm:$0xff] %v505
        %522 = vst [vmem:[%s160 + $0x8] sm:$0xff] %v506
        %523 = vst [vmem:[%s160 + $0x10] sm:$0xff] %v507
        %524 = vst [vmem:[%s160 + $0x18] sm:$0xff] %v508
        %525 = vst [vmem:[%s160 + $0x20] sm:$0xff] %v509
        %526 = vst [vmem:[%s160 + $0x28] sm:$0xff] %v510
        %527 = vst [vmem:[%s160 + $0x30] sm:$0xff] %v511
        %528 = vst [vmem:[%s160 + $0x38] sm:$0xff] %v512
        %529 = vst [vmem:[%s160 + $0x40] sm:$0xff] %v513
        %530 = vst [vmem:[%s160 + $0x48] sm:$0xff] %v514
        %531 = vst [vmem:[%s160 + $0x50] sm:$0xff] %v515
        %532 = vst [vmem:[%s160 + $0x58] sm:$0xff] %v516
        %533 = vst [vmem:[%s160 + $0x60] sm:$0xff] %v517
        %534 = vst [vmem:[%s160 + $0x68] sm:$0xff] %v518
        %535 = vst [vmem:[%s160 + $0x70] sm:$0xff] %v519
        %536 = vst [vmem:[%s160 + $0x78] sm:$0xff] %v520
        %s537 = sand.u32 %s90, 1
        %s538 = sand.u32 %s90, 1
        %s539 = smul.addr %s538, 128
        %s540 = scalar_lea.vmem [#allocation2], %s539
        // Predicated region
        $region33: #{convolutional_net_forward.7} parent=31 // pred_check
          %p541 = pneg %p100
        $region34: #{convolutional_net_forward.7} parent=31 // pred_check_branch
          %543 = sbr.rel (%p541) target = $region36
        $region35: #{convolutional_net_forward.7} parent=31 // pred_region
          %s544 = smul.u32 8, %s14
          %s545 = smul.addr %s544, 8
          %s546 = scalar_lea.vmem %s3, %s545
          // Predicated region
          $region37: #{convolutional_net_forward.7} parent=35 // pred_check
            _
          $region38: #{convolutional_net_forward.7} parent=35 // pred_check_branch
            %548 = sbr.rel (0) target = $region40
          $region39: #{convolutional_net_forward.7} parent=35 // pred_region
            // Predicated region
            $region41: #{convolutional_net_forward.7} parent=39 // pred_check
              _
            $region42: #{convolutional_net_forward.7} parent=39 // pred_check_branch
              %550 = sbr.rel (0) target = $region44
            $region43: #{convolutional_net_forward.7} parent=39 // pred_region
              loop: start=0, step=1, limit=1
              $region45: #{convolutional_net_forward.7} parent=43 // loop_pre_header
                _
              $region46: #{convolutional_net_forward.7} parent=43 // loop_header
                %s552 = sphi 0, %s556
                %p553 = scmp.ge.s32.totalorder %s552, 1
                %s557 = sphi %s540, %s540
                %s558 = sphi %s546, %s546
              $region47: #{convolutional_net_forward.7} parent=43 // loop_header_branch
                %555 = sbr.rel (%p553) target = $region51
              $region48: #{convolutional_net_forward.7} parent=43 // loop_body
                %v559 = vld [vmem:[%s557] sm:$0xff]
                %560 = vst [vmem:[%s558] sm:$0xff] %v559
                %v561 = vld [vmem:[%s557 + $0x8] sm:$0xff]
                %562 = vst [vmem:[%s558 + $0x8] sm:$0xff] %v561
                %v563 = vld [vmem:[%s557 + $0x10] sm:$0xff]
                %564 = vst [vmem:[%s558 + $0x10] sm:$0xff] %v563
                %v565 = vld [vmem:[%s557 + $0x18] sm:$0xff]
                %566 = vst [vmem:[%s558 + $0x18] sm:$0xff] %v565
                %v567 = vld [vmem:[%s557 + $0x20] sm:$0xff]
                %568 = vst [vmem:[%s558 + $0x20] sm:$0xff] %v567
                %v569 = vld [vmem:[%s557 + $0x28] sm:$0xff]
                %570 = vst [vmem:[%s558 + $0x28] sm:$0xff] %v569
                %v571 = vld [vmem:[%s557 + $0x30] sm:$0xff]
                %572 = vst [vmem:[%s558 + $0x30] sm:$0xff] %v571
                %v573 = vld [vmem:[%s557 + $0x38] sm:$0xff]
                %574 = vst [vmem:[%s558 + $0x38] sm:$0xff] %v573
                %v575 = vld [vmem:[%s557 + $0x40] sm:$0xff]
                %576 = vst [vmem:[%s558 + $0x540] sm:$0xff] %v575
                %v577 = vld [vmem:[%s557 + $0x48] sm:$0xff]
                %578 = vst [vmem:[%s558 + $0x548] sm:$0xff] %v577
                %v579 = vld [vmem:[%s557 + $0x50] sm:$0xff]
                %580 = vst [vmem:[%s558 + $0x550] sm:$0xff] %v579
                %v581 = vld [vmem:[%s557 + $0x58] sm:$0xff]
                %582 = vst [vmem:[%s558 + $0x558] sm:$0xff] %v581
                %v583 = vld [vmem:[%s557 + $0x60] sm:$0xff]
                %584 = vst [vmem:[%s558 + $0x560] sm:$0xff] %v583
                %v585 = vld [vmem:[%s557 + $0x68] sm:$0xff]
                %586 = vst [vmem:[%s558 + $0x568] sm:$0xff] %v585
                %v587 = vld [vmem:[%s557 + $0x70] sm:$0xff]
                %588 = vst [vmem:[%s558 + $0x570] sm:$0xff] %v587
                %v589 = vld [vmem:[%s557 + $0x78] sm:$0xff]
                %590 = vst [vmem:[%s558 + $0x578] sm:$0xff] %v589
              $region49: #{convolutional_net_forward.7} parent=43 // loop_footer
                %s556 = sadd.s32 1, %s552
              $region50: #{convolutional_net_forward.7} parent=43 // loop_footer_branch
                %551 = sbr.rel target = $region46
              $region51: #{convolutional_net_forward.7} parent=43 // loop_exit
                _
            $region44: #{convolutional_net_forward.7} parent=39 // pred_fallthru
              _
            // Predicated region
            $region52: #{convolutional_net_forward.7} parent=39 // pred_check
              _
            $region53: #{convolutional_net_forward.7} parent=39 // pred_check_branch
              %592 = sbr.rel target = $region55
            $region54: #{convolutional_net_forward.7} parent=39 // pred_region
              _
            $region55: #{convolutional_net_forward.7} parent=39 // pred_fallthru
              _
          $region40: #{convolutional_net_forward.7} parent=35 // pred_fallthru
            _
          %593 = vnop
        $region36: #{convolutional_net_forward.7} parent=31 // pred_fallthru
          _
      $region32: #{convolutional_net_forward.7} parent=5 // pred_fallthru
        _
      %p594 = scmp.le.s32.totalorder 2, %s9
      // Predicated region
      $region56: #{convolutional_net_forward.7} parent=5 // pred_check
        %p595 = pneg %p594
      $region57: #{convolutional_net_forward.7} parent=5 // pred_check_branch
        %597 = sbr.rel (%p595) target = $region59
      $region58: #{convolutional_net_forward.7} parent=5 // pred_region
        %s598 = ssub.s32 %s9, 2
        // Predicated region
        $region60: #{convolutional_net_forward.7} parent=58 // pred_check
          %p599 = pneg %p106
        $region61: #{convolutional_net_forward.7} parent=58 // pred_check_branch
          %601 = sbr.rel (%p599) target = $region63
        $region62: #{convolutional_net_forward.7} parent=58 // pred_region
          %s602 = sand.u32 %s91, 1
          %s603 = sand.u32 %s91, 1
          %s604 = smul.addr %s603, 128
          %s605 = scalar_lea.vmem [#allocation2], %s604
        $region63: #{convolutional_net_forward.7} parent=58 // pred_fallthru
          _
      $region59: #{convolutional_net_forward.7} parent=5 // pred_fallthru
        _
    $region6: #{convolutional_net_forward.7} parent=1 // loop_footer
      %s13 = sadd.s32 1, %s9
    $region7: #{convolutional_net_forward.7} parent=1 // loop_footer_branch
      %8 = sbr.rel target = $region3
    $region8: #{convolutional_net_forward.7} parent=1 // loop_exit
      _

// kernel: convolutional_net_forward.8
$region0: #{convolutional_net_forward.8}
  #allocation0 [shape = 'u32[]', space=smem, size = 0x4, offset = 0x4, fixed_abs, tag = 'smem constant byte address 0x4 - core index']
  #allocation1 [shape = 'u32[144,128]{1,0:T(1,128)}', space=vmem, size = 0x12000, scoped, tag = 'internal scratch']
  %s0 = inlined_call_operand.vmem [shape: f32[32,80], index: 0, kind: input, shape index: {}]
  %s1 = inlined_call_operand.vmem [shape: f32[80,5120], index: 1, kind: input, shape index: {}]
  %s2 = inlined_call_operand.vmem [shape: f32[32,1], index: 2, kind: input, shape index: {}]
  %s3 = inlined_call_operand.vmem [shape: f32[32,5120], index: 3, kind: output, shape index: {}]
  %s4 = sld [smem:[#allocation0]]
  $region87: #{convolutional_net_forward.8} parent=0
    _
  %s6 = ssub.s32 1, %s4
  %s7 = scalar_select 0, %s6, %s4
  $region1: #{convolutional_net_forward.8} parent=0
    #allocation2 [shape = 'u8[655360]{0}', space=vmem, size = 0xa0000, scoped, tag = 'input window, operand 1']
    #allocation3 [shape = 'u8[262144]{0}', space=vmem, size = 0x40000, scoped, tag = 'output window, operand 0']
    loop: start=0, step=1, limit=7
    $region2: #{convolutional_net_forward.8} parent=1 // loop_pre_header
      _
    $region3: #{convolutional_net_forward.8} parent=1 // loop_header
      %s9 = sphi 0, %s13
      %p10 = scmp.ge.s32.totalorder %s9, 7
      %s17 = sphi 0, %s17
      %s19 = sphi 0, %s17
      %s20 = sphi 0, %s19
      %s34 = sphi 0, %s20
      %s40 = sphi 0, %s42
      %s43 = sphi 0, %s40
      %s44 = sphi 0, %s43
      %s60 = sphi 0, %s44
      %s64 = sphi 0, %s64
      %s66 = sphi 0, %s64
      %s67 = sphi 0, %s66
      %s81 = sphi 0, %s67
      %s87 = sphi 0, %s89
      %s90 = sphi 0, %s87
      %s91 = sphi 0, %s90
      %s107 = sphi 0, %s91
    $region4: #{convolutional_net_forward.8} parent=1 // loop_header_branch
      %12 = sbr.rel (%p10) target = $region8
    $region5: #{convolutional_net_forward.8} parent=1 // loop_body
      %s14 = ssub.s32 %s9, 1
      %s15 = ssub.s32 %s9, 2
      %s16 = sadd.s32 %s9, 1
      %s18 = sadd.s32 %s17, 1
      %p21 = scmp.eq.s32.totalorder %s9, 4
      %p22 = scmp.ne.s32.totalorder %s17, %s19
      %p23 = scmp.eq.s32.totalorder %s9, 0
      %p24 = por %p22, %p23
      %p25 = scmp.ne.s32.totalorder %s17, %s19
      %p26 = scmp.eq.s32.totalorder %s14, 4
      %p27 = por %p25, %p26
      %p28 = scmp.ne.s32.totalorder %s19, %s20
      %p29 = scmp.eq.s32.totalorder %s14, 0
      %p30 = por %p28, %p29
      %p31 = scmp.ne.s32.totalorder %s19, %s20
      %p32 = scmp.eq.s32.totalorder %s15, 4
      %p33 = por %p31, %p32
      %p35 = scmp.ne.s32.totalorder %s20, %s34
      %p36 = scmp.eq.s32.totalorder %s15, 0
      %p37 = por %p35, %p36
      %s38 = ssub.s32 %s9, %s16
      %p39 = scmp.eq.s32.totalorder %s38, 0
      %s41 = sadd.s32 %s40, 1
      %s42 = scalar_select %p39, %s40, %s41
      %p45 = pneg %p39
      %p46 = scmp.eq.s32.totalorder %s9, 4
      %p47 = por %p45, %p46
      %p48 = scmp.ne.s32.totalorder %s40, %s43
      %p49 = scmp.eq.s32.totalorder %s9, 0
      %p50 = por %p48, %p49
      %p51 = scmp.ne.s32.totalorder %s40, %s43
      %p52 = scmp.eq.s32.totalorder %s14, 4
      %p53 = por %p51, %p52
      %p54 = scmp.ne.s32.totalorder %s43, %s44
      %p55 = scmp.eq.s32.totalorder %s14, 0
      %p56 = por %p54, %p55
      %p57 = scmp.ne.s32.totalorder %s43, %s44
      %p58 = scmp.eq.s32.totalorder %s15, 4
      %p59 = por %p57, %p58
      %p61 = scmp.ne.s32.totalorder %s44, %s60
      %p62 = scmp.eq.s32.totalorder %s15, 0
      %p63 = por %p61, %p62
      %s65 = sadd.s32 %s64, 1
      %p68 = scmp.eq.s32.totalorder %s9, 4
      %p69 = scmp.ne.s32.totalorder %s64, %s66
      %p70 = scmp.eq.s32.totalorder %s9, 0
      %p71 = por %p69, %p70
      %p72 = scmp.ne.s32.totalorder %s64, %s66
      %p73 = scmp.eq.s32.totalorder %s14, 4
      %p74 = por %p72, %p73
      %p75 = scmp.ne.s32.totalorder %s66, %s67
      %p76 = scmp.eq.s32.totalorder %s14, 0
      %p77 = por %p75, %p76
      %p78 = scmp.ne.s32.totalorder %s66, %s67
      %p79 = scmp.eq.s32.totalorder %s15, 4
      %p80 = por %p78, %p79
      %p82 = scmp.ne.s32.totalorder %s67, %s81
      %p83 = scmp.eq.s32.totalorder %s15, 0
      %p84 = por %p82, %p83
      %s85 = ssub.s32 %s9, %s16
      %p86 = scmp.eq.s32.totalorder %s85, 0
      %s88 = sadd.s32 %s87, 1
      %s89 = scalar_select %p86, %s87, %s88
      %p92 = pneg %p86
      %p93 = scmp.eq.s32.totalorder %s9, 4
      %p94 = por %p92, %p93
      %p95 = scmp.ne.s32.totalorder %s87, %s90
      %p96 = scmp.eq.s32.totalorder %s9, 0
      %p97 = por %p95, %p96
      %p98 = scmp.ne.s32.totalorder %s87, %s90
      %p99 = scmp.eq.s32.totalorder %s14, 4
      %p100 = por %p98, %p99
      %p101 = scmp.ne.s32.totalorder %s90, %s91
      %p102 = scmp.eq.s32.totalorder %s14, 0
      %p103 = por %p101, %p102
      %p104 = scmp.ne.s32.totalorder %s90, %s91
      %p105 = scmp.eq.s32.totalorder %s15, 4
      %p106 = por %p104, %p105
      %p108 = scmp.ne.s32.totalorder %s91, %s107
      %p109 = scmp.eq.s32.totalorder %s15, 0
      %p110 = por %p108, %p109
      %p111 = scmp.le.s32.totalorder 1, %s9
      %p112 = scmp.lt.s32.totalorder %s9, 6
      %p113 = pnand %p111, %p112
      %p114 = pneg %p113
      // Predicated region
      $region9: #{convolutional_net_forward.8} parent=5 // pred_check
        _
      $region10: #{convolutional_net_forward.8} parent=5 // pred_check_branch
        %116 = sbr.rel (%p113) target = $region12
      $region11: #{convolutional_net_forward.8} parent=5 // pred_region
        %s117 = ssub.s32 %s9, 1
        // Predicated region
        $region13: #{convolutional_net_forward.8} parent=11 // pred_check
          %p118 = pneg %p30
        $region14: #{convolutional_net_forward.8} parent=11 // pred_check_branch
          %120 = sbr.rel (%p118) target = $region16
        $region15: #{convolutional_net_forward.8} parent=11 // pred_region
          _
        $region16: #{convolutional_net_forward.8} parent=11 // pred_fallthru
          _
        // Predicated region
        $region17: #{convolutional_net_forward.8} parent=11 // pred_check
          %p121 = pneg %p77
        $region18: #{convolutional_net_forward.8} parent=11 // pred_check_branch
          %123 = sbr.rel (%p121) target = $region20
        $region19: #{convolutional_net_forward.8} parent=11 // pred_region
          _
        $region20: #{convolutional_net_forward.8} parent=11 // pred_fallthru
          _
      $region12: #{convolutional_net_forward.8} parent=5 // pred_fallthru
        _
      %p124 = scmp.lt.s32.totalorder %s9, 5
      // Predicated region
      $region21: #{convolutional_net_forward.8} parent=5 // pred_check
        %p125 = pneg %p124
      $region22: #{convolutional_net_forward.8} parent=5 // pred_check_branch
        %127 = sbr.rel (%p125) target = $region24
      $region23: #{convolutional_net_forward.8} parent=5 // pred_region
        // Predicated region
        $region25: #{convolutional_net_forward.8} parent=23 // pred_check
          %p128 = pneg %p50
        $region26: #{convolutional_net_forward.8} parent=23 // pred_check_branch
          %130 = sbr.rel (%p128) target = $region28
        $region27: #{convolutional_net_forward.8} parent=23 // pred_region
          %s131 = sand.u32 %s40, 1
          %s132 = sand.u32 %s40, 1
          %s133 = smul.addr %s132, 640
          %s134 = scalar_lea.vmem [#allocation2], %s133
          %s135 = smul.u32 8, %s9
          %s136 = smul.addr %s135, 8
          %s137 = scalar_lea.vmem %s1, %s136
          // Predicated region
          $region29: #{convolutional_net_forward.8} parent=27 // pred_check
            _
          $region30: #{convolutional_net_forward.8} parent=27 // pred_check_branch
            %139 = sbr.rel (0) target = $region32
          $region31: #{convolutional_net_forward.8} parent=27 // pred_region
            // Predicated region
            $region33: #{convolutional_net_forward.8} parent=31 // pred_check
              _
            $region34: #{convolutional_net_forward.8} parent=31 // pred_check_branch
              %141 = sbr.rel (0) target = $region36
            $region35: #{convolutional_net_forward.8} parent=31 // pred_region
              loop: start=0, step=1, limit=1
              $region37: #{convolutional_net_forward.8} parent=35 // loop_pre_header
                _
              $region38: #{convolutional_net_forward.8} parent=35 // loop_header
                %s143 = sphi 0, %s147
                %p144 = scmp.ge.s32.totalorder %s143, 1
                %s148 = sphi %s137, %s137
                %s149 = sphi %s134, %s134
              $region39: #{convolutional_net_forward.8} parent=35 // loop_header_branch
                %146 = sbr.rel (%p144) target = $region43
              $region40: #{convolutional_net_forward.8} parent=35 // loop_body
                %v150 = vld [vmem:[%s148] sm:$0xff]
                %151 = vst [vmem:[%s149] sm:$0xff] %v150
                %v152 = vld [vmem:[%s148 + $0x8] sm:$0xff]
                %153 = vst [vmem:[%s149 + $0x8] sm:$0xff] %v152
                %v154 = vld [vmem:[%s148 + $0x10] sm:$0xff]
                %155 = vst [vmem:[%s149 + $0x10] sm:$0xff] %v154
                %v156 = vld [vmem:[%s148 + $0x18] sm:$0xff]
                %157 = vst [vmem:[%s149 + $0x18] sm:$0xff] %v156
                %v158 = vld [vmem:[%s148 + $0x20] sm:$0xff]
                %159 = vst [vmem:[%s149 + $0x20] sm:$0xff] %v158
                %v160 = vld [vmem:[%s148 + $0x28] sm:$0xff]
                %161 = vst [vmem:[%s149 + $0x28] sm:$0xff] %v160
                %v162 = vld [vmem:[%s148 + $0x30] sm:$0xff]
                %163 = vst [vmem:[%s149 + $0x30] sm:$0xff] %v162
                %v164 = vld [vmem:[%s148 + $0x38] sm:$0xff]
                %165 = vst [vmem:[%s149 + $0x38] sm:$0xff] %v164
                %v166 = vld [vmem:[%s148 + $0x140] sm:$0xff]
                %167 = vst [vmem:[%s149 + $0x40] sm:$0xff] %v166
                %v168 = vld [vmem:[%s148 + $0x148] sm:$0xff]
                %169 = vst [vmem:[%s149 + $0x48] sm:$0xff] %v168
                %v170 = vld [vmem:[%s148 + $0x150] sm:$0xff]
                %171 = vst [vmem:[%s149 + $0x50] sm:$0xff] %v170
                %v172 = vld [vmem:[%s148 + $0x158] sm:$0xff]
                %173 = vst [vmem:[%s149 + $0x58] sm:$0xff] %v172
                %v174 = vld [vmem:[%s148 + $0x160] sm:$0xff]
                %175 = vst [vmem:[%s149 + $0x60] sm:$0xff] %v174
                %v176 = vld [vmem:[%s148 + $0x168] sm:$0xff]
                %177 = vst [vmem:[%s149 + $0x68] sm:$0xff] %v176
                %v178 = vld [vmem:[%s148 + $0x170] sm:$0xff]
                %179 = vst [vmem:[%s149 + $0x70] sm:$0xff] %v178
                %v180 = vld [vmem:[%s148 + $0x178] sm:$0xff]
                %181 = vst [vmem:[%s149 + $0x78] sm:$0xff] %v180
                %v182 = vld [vmem:[%s148 + $0x280] sm:$0xff]
                %183 = vst [vmem:[%s149 + $0x80] sm:$0xff] %v182
                %v184 = vld [vmem:[%s148 + $0x288] sm:$0xff]
                %185 = vst [vmem:[%s149 + $0x88] sm:$0xff] %v184
                %v186 = vld [vmem:[%s148 + $0x290] sm:$0xff]
                %187 = vst [vmem:[%s149 + $0x90] sm:$0xff] %v186
                %v188 = vld [vmem:[%s148 + $0x298] sm:$0xff]
                %189 = vst [vmem:[%s149 + $0x98] sm:$0xff] %v188
                %v190 = vld [vmem:[%s148 + $0x2a0] sm:$0xff]
                %191 = vst [vmem:[%s149 + $0xa0] sm:$0xff] %v190
                %v192 = vld [vmem:[%s148 + $0x2a8] sm:$0xff]
                %193 = vst [vmem:[%s149 + $0xa8] sm:$0xff] %v192
                %v194 = vld [vmem:[%s148 + $0x2b0] sm:$0xff]
                %195 = vst [vmem:[%s149 + $0xb0] sm:$0xff] %v194
                %v196 = vld [vmem:[%s148 + $0x2b8] sm:$0xff]
                %197 = vst [vmem:[%s149 + $0xb8] sm:$0xff] %v196
                %v198 = vld [vmem:[%s148 + $0x3c0] sm:$0xff]
                %199 = vst [vmem:[%s149 + $0xc0] sm:$0xff] %v198
                %v200 = vld [vmem:[%s148 + $0x3c8] sm:$0xff]
                %201 = vst [vmem:[%s149 + $0xc8] sm:$0xff] %v200
                %v202 = vld [vmem:[%s148 + $0x3d0] sm:$0xff]
                %203 = vst [vmem:[%s149 + $0xd0] sm:$0xff] %v202
                %v204 = vld [vmem:[%s148 + $0x3d8] sm:$0xff]
                %205 = vst [vmem:[%s149 + $0xd8] sm:$0xff] %v204
                %v206 = vld [vmem:[%s148 + $0x3e0] sm:$0xff]
                %207 = vst [vmem:[%s149 + $0xe0] sm:$0xff] %v206
                %v208 = vld [vmem:[%s148 + $0x3e8] sm:$0xff]
                %209 = vst [vmem:[%s149 + $0xe8] sm:$0xff] %v208
                %v210 = vld [vmem:[%s148 + $0x3f0] sm:$0xff]
                %211 = vst [vmem:[%s149 + $0xf0] sm:$0xff] %v210
                %v212 = vld [vmem:[%s148 + $0x3f8] sm:$0xff]
                %213 = vst [vmem:[%s149 + $0xf8] sm:$0xff] %v212
                %v214 = vld [vmem:[%s148 + $0x500] sm:$0xff]
                %215 = vst [vmem:[%s149 + $0x100] sm:$0xff] %v214
                %v216 = vld [vmem:[%s148 + $0x508] sm:$0xff]
                %217 = vst [vmem:[%s149 + $0x108] sm:$0xff] %v216
                %v218 = vld [vmem:[%s148 + $0x510] sm:$0xff]
                %219 = vst [vmem:[%s149 + $0x110] sm:$0xff] %v218
                %v220 = vld [vmem:[%s148 + $0x518] sm:$0xff]
                %221 = vst [vmem:[%s149 + $0x118] sm:$0xff] %v220
                %v222 = vld [vmem:[%s148 + $0x520] sm:$0xff]
                %223 = vst [vmem:[%s149 + $0x120] sm:$0xff] %v222
                %v224 = vld [vmem:[%s148 + $0x528] sm:$0xff]
                %225 = vst [vmem:[%s149 + $0x128] sm:$0xff] %v224
                %v226 = vld [vmem:[%s148 + $0x530] sm:$0xff]
                %227 = vst [vmem:[%s149 + $0x130] sm:$0xff] %v226
                %v228 = vld [vmem:[%s148 + $0x538] sm:$0xff]
                %229 = vst [vmem:[%s149 + $0x138] sm:$0xff] %v228
                %v230 = vld [vmem:[%s148 + $0x640] sm:$0xff]
                %231 = vst [vmem:[%s149 + $0x140] sm:$0xff] %v230
                %v232 = vld [vmem:[%s148 + $0x648] sm:$0xff]
                %233 = vst [vmem:[%s149 + $0x148] sm:$0xff] %v232
                %v234 = vld [vmem:[%s148 + $0x650] sm:$0xff]
                %235 = vst [vmem:[%s149 + $0x150] sm:$0xff] %v234
                %v236 = vld [vmem:[%s148 + $0x658] sm:$0xff]
                %237 = vst [vmem:[%s149 + $0x158] sm:$0xff] %v236
                %v238 = vld [vmem:[%s148 + $0x660] sm:$0xff]
                %239 = vst [vmem:[%s149 + $0x160] sm:$0xff] %v238
                %v240 = vld [vmem:[%s148 + $0x668] sm:$0xff]
                %241 = vst [vmem:[%s149 + $0x168] sm:$0xff] %v240
                %v242 = vld [vmem:[%s148 + $0x670] sm:$0xff]
                %243 = vst [vmem:[%s149 + $0x170] sm:$0xff] %v242
                %v244 = vld [vmem:[%s148 + $0x678] sm:$0xff]
                %245 = vst [vmem:[%s149 + $0x178] sm:$0xff] %v244
                %v246 = vld [vmem:[%s148 + $0x780] sm:$0xff]
                %247 = vst [vmem:[%s149 + $0x180] sm:$0xff] %v246
                %v248 = vld [vmem:[%s148 + $0x788] sm:$0xff]
                %249 = vst [vmem:[%s149 + $0x188] sm:$0xff] %v248
                %v250 = vld [vmem:[%s148 + $0x790] sm:$0xff]
                %251 = vst [vmem:[%s149 + $0x190] sm:$0xff] %v250
                %v252 = vld [vmem:[%s148 + $0x798] sm:$0xff]
                %253 = vst [vmem:[%s149 + $0x198] sm:$0xff] %v252
                %v254 = vld [vmem:[%s148 + $0x7a0] sm:$0xff]
                %255 = vst [vmem:[%s149 + $0x1a0] sm:$0xff] %v254
                %v256 = vld [vmem:[%s148 + $0x7a8] sm:$0xff]
                %257 = vst [vmem:[%s149 + $0x1a8] sm:$0xff] %v256
                %v258 = vld [vmem:[%s148 + $0x7b0] sm:$0xff]
                %259 = vst [vmem:[%s149 + $0x1b0] sm:$0xff] %v258
                %v260 = vld [vmem:[%s148 + $0x7b8] sm:$0xff]
                %261 = vst [vmem:[%s149 + $0x1b8] sm:$0xff] %v260
                %v262 = vld [vmem:[%s148 + $0x8c0] sm:$0xff]
                %263 = vst [vmem:[%s149 + $0x1c0] sm:$0xff] %v262
                %v264 = vld [vmem:[%s148 + $0x8c8] sm:$0xff]
                %265 = vst [vmem:[%s149 + $0x1c8] sm:$0xff] %v264
                %v266 = vld [vmem:[%s148 + $0x8d0] sm:$0xff]
                %267 = vst [vmem:[%s149 + $0x1d0] sm:$0xff] %v266
                %v268 = vld [vmem:[%s148 + $0x8d8] sm:$0xff]
                %269 = vst [vmem:[%s149 + $0x1d8] sm:$0xff] %v268
                %v270 = vld [vmem:[%s148 + $0x8e0] sm:$0xff]
                %271 = vst [vmem:[%s149 + $0x1e0] sm:$0xff] %v270
                %v272 = vld [vmem:[%s148 + $0x8e8] sm:$0xff]
                %273 = vst [vmem:[%s149 + $0x1e8] sm:$0xff] %v272
                %v274 = vld [vmem:[%s148 + $0x8f0] sm:$0xff]
                %275 = vst [vmem:[%s149 + $0x1f0] sm:$0xff] %v274
                %v276 = vld [vmem:[%s148 + $0x8f8] sm:$0xff]
                %277 = vst [vmem:[%s149 + $0x1f8] sm:$0xff] %v276
                %v278 = vld [vmem:[%s148 + $0xa00] sm:$0xff]
                %279 = vst [vmem:[%s149 + $0x200] sm:$0xff] %v278
                %v280 = vld [vmem:[%s148 + $0xa08] sm:$0xff]
                %281 = vst [vmem:[%s149 + $0x208] sm:$0xff] %v280
                %v282 = vld [vmem:[%s148 + $0xa10] sm:$0xff]
                %283 = vst [vmem:[%s149 + $0x210] sm:$0xff] %v282
                %v284 = vld [vmem:[%s148 + $0xa18] sm:$0xff]
                %285 = vst [vmem:[%s149 + $0x218] sm:$0xff] %v284
                %v286 = vld [vmem:[%s148 + $0xa20] sm:$0xff]
                %287 = vst [vmem:[%s149 + $0x220] sm:$0xff] %v286
                %v288 = vld [vmem:[%s148 + $0xa28] sm:$0xff]
                %289 = vst [vmem:[%s149 + $0x228] sm:$0xff] %v288
                %v290 = vld [vmem:[%s148 + $0xa30] sm:$0xff]
                %291 = vst [vmem:[%s149 + $0x230] sm:$0xff] %v290
                %v292 = vld [vmem:[%s148 + $0xa38] sm:$0xff]
                %293 = vst [vmem:[%s149 + $0x238] sm:$0xff] %v292
                %v294 = vld [vmem:[%s148 + $0xb40] sm:$0xff]
                %295 = vst [vmem:[%s149 + $0x240] sm:$0xff] %v294
                %v296 = vld [vmem:[%s148 + $0xb48] sm:$0xff]
                %297 = vst [vmem:[%s149 + $0x248] sm:$0xff] %v296
                %v298 = vld [vmem:[%s148 + $0xb50] sm:$0xff]
                %299 = vst [vmem:[%s149 + $0x250] sm:$0xff] %v298
                %v300 = vld [vmem:[%s148 + $0xb58] sm:$0xff]
                %301 = vst [vmem:[%s149 + $0x258] sm:$0xff] %v300
                %v302 = vld [vmem:[%s148 + $0xb60] sm:$0xff]
                %303 = vst [vmem:[%s149 + $0x260] sm:$0xff] %v302
                %v304 = vld [vmem:[%s148 + $0xb68] sm:$0xff]
                %305 = vst [vmem:[%s149 + $0x268] sm:$0xff] %v304
                %v306 = vld [vmem:[%s148 + $0xb70] sm:$0xff]
                %307 = vst [vmem:[%s149 + $0x270] sm:$0xff] %v306
                %v308 = vld [vmem:[%s148 + $0xb78] sm:$0xff]
                %309 = vst [vmem:[%s149 + $0x278] sm:$0xff] %v308
              $region41: #{convolutional_net_forward.8} parent=35 // loop_footer
                %s147 = sadd.s32 1, %s143
              $region42: #{convolutional_net_forward.8} parent=35 // loop_footer_branch
                %142 = sbr.rel target = $region38
              $region43: #{convolutional_net_forward.8} parent=35 // loop_exit
                _
            $region36: #{convolutional_net_forward.8} parent=31 // pred_fallthru
              _
            // Predicated region
            $region44: #{convolutional_net_forward.8} parent=31 // pred_check
              _
            $region45: #{convolutional_net_forward.8} parent=31 // pred_check_branch
              %311 = sbr.rel target = $region47
            $region46: #{convolutional_net_forward.8} parent=31 // pred_region
              _
            $region47: #{convolutional_net_forward.8} parent=31 // pred_fallthru
              _
          $region32: #{convolutional_net_forward.8} parent=27 // pred_fallthru
            _
          %312 = vnop
        $region28: #{convolutional_net_forward.8} parent=23 // pred_fallthru
          _
      $region24: #{convolutional_net_forward.8} parent=5 // pred_fallthru
        _
      %p313 = scmp.le.s32.totalorder 1, %s9
      %p314 = scmp.lt.s32.totalorder %s9, 6
      %p315 = pnand %p313, %p314
      %p316 = pneg %p315
      // Predicated region
      $region48: #{convolutional_net_forward.8} parent=5 // pred_check
        _
      $region49: #{convolutional_net_forward.8} parent=5 // pred_check_branch
        %318 = sbr.rel (%p315) target = $region51
      $region50: #{convolutional_net_forward.8} parent=5 // pred_region
        %s319 = ssub.s32 %s9, 1
        %s320 = sand.u32 %s43, 1
        %s321 = sand.u32 %s43, 1
        %s322 = smul.addr %s321, 640
        %s323 = scalar_lea.vmem [#allocation2], %s322
        // Predicated region
        $region52: #{convolutional_net_forward.8} parent=50 // pred_check
          %p324 = pneg %p56
        $region53: #{convolutional_net_forward.8} parent=50 // pred_check_branch
          %326 = sbr.rel (%p324) target = $region55
        $region54: #{convolutional_net_forward.8} parent=50 // pred_region
          _
        $region55: #{convolutional_net_forward.8} parent=50 // pred_fallthru
          _
        %p327 = pneg %p30
        %p328 = pneg %p27
        %s329 = sand.u32 %s43, 1
        %s330 = sand.u32 %s43, 1
        %s331 = smul.addr %s330, 640
        %s332 = scalar_lea.vmem [#allocation2], %s331
        %p333 = pneg %p56
        %p334 = pneg %p53
        %p335 = pneg %p77
        %p336 = pneg %p74
        %p337 = pneg %p103
        %p338 = pneg %p100
        %s339 = sand.u32 %s90, 1
        %s340 = sand.u32 %s90, 1
        %s341 = smul.addr %s340, 256
        %s342 = scalar_lea.vmem [#allocation3], %s341
        %s343 = smul.u32 8, %s14
        %s344 = smul.u32 8, %s14
        %v345 = vld [vmem:[%s0] sm:$0xff]
        %v346 = vld [vmem:[%s0 + $0x8] sm:$0xff]
        %v347 = vld [vmem:[%s0 + $0x10] sm:$0xff]
        %v348 = vld [vmem:[%s0 + $0x18] sm:$0xff]
        %v349 = vld [vmem:[%s323] sm:$0xff]
        %v350 = vld [vmem:[%s323 + $0x8] sm:$0xff]
        %v351 = vld [vmem:[%s323 + $0x10] sm:$0xff]
        %v352 = vld [vmem:[%s323 + $0x18] sm:$0xff]
        %v353 = vld [vmem:[%s323 + $0x20] sm:$0xff]
        %v354 = vld [vmem:[%s323 + $0x28] sm:$0xff]
        %v355 = vld [vmem:[%s323 + $0x30] sm:$0xff]
        %v356 = vld [vmem:[%s323 + $0x38] sm:$0xff]
        %v357 = vld [vmem:[%s323 + $0x40] sm:$0xff]
        %v358 = vld [vmem:[%s323 + $0x48] sm:$0xff]
        %v359 = vld [vmem:[%s323 + $0x50] sm:$0xff]
        %v360 = vld [vmem:[%s323 + $0x58] sm:$0xff]
        %v361 = vld [vmem:[%s323 + $0x60] sm:$0xff]
        %v362 = vld [vmem:[%s323 + $0x68] sm:$0xff]
        %v363 = vld [vmem:[%s323 + $0x70] sm:$0xff]
        %v364 = vld [vmem:[%s323 + $0x78] sm:$0xff]
        %v365 = vld [vmem:[%s323 + $0x80] sm:$0xff]
        %v366 = vld [vmem:[%s323 + $0x88] sm:$0xff]
        %v367 = vld [vmem:[%s323 + $0x90] sm:$0xff]
        %v368 = vld [vmem:[%s323 + $0x98] sm:$0xff]
        %v369 = vld [vmem:[%s323 + $0xa0] sm:$0xff]
        %v370 = vld [vmem:[%s323 + $0xa8] sm:$0xff]
        %v371 = vld [vmem:[%s323 + $0xb0] sm:$0xff]
        %v372 = vld [vmem:[%s323 + $0xb8] sm:$0xff]
        %v373 = vld [vmem:[%s323 + $0xc0] sm:$0xff]
        %v374 = vld [vmem:[%s323 + $0xc8] sm:$0xff]
        %v375 = vld [vmem:[%s323 + $0xd0] sm:$0xff]
        %v376 = vld [vmem:[%s323 + $0xd8] sm:$0xff]
        %v377 = vld [vmem:[%s323 + $0xe0] sm:$0xff]
        %v378 = vld [vmem:[%s323 + $0xe8] sm:$0xff]
        %v379 = vld [vmem:[%s323 + $0xf0] sm:$0xff]
        %v380 = vld [vmem:[%s323 + $0xf8] sm:$0xff]
        %v381 = vld [vmem:[%s323 + $0x100] sm:$0xff]
        %v382 = vld [vmem:[%s323 + $0x108] sm:$0xff]
        %v383 = vld [vmem:[%s323 + $0x110] sm:$0xff]
        %v384 = vld [vmem:[%s323 + $0x118] sm:$0xff]
        %v385 = vld [vmem:[%s323 + $0x120] sm:$0xff]
        %v386 = vld [vmem:[%s323 + $0x128] sm:$0xff]
        %v387 = vld [vmem:[%s323 + $0x130] sm:$0xff]
        %v388 = vld [vmem:[%s323 + $0x138] sm:$0xff]
        %v389 = vld [vmem:[%s323 + $0x140] sm:$0xff]
        %v390 = vld [vmem:[%s323 + $0x148] sm:$0xff]
        %v391 = vld [vmem:[%s323 + $0x150] sm:$0xff]
        %v392 = vld [vmem:[%s323 + $0x158] sm:$0xff]
        %v393 = vld [vmem:[%s323 + $0x160] sm:$0xff]
        %v394 = vld [vmem:[%s323 + $0x168] sm:$0xff]
        %v395 = vld [vmem:[%s323 + $0x170] sm:$0xff]
        %v396 = vld [vmem:[%s323 + $0x178] sm:$0xff]
        %v397 = vld [vmem:[%s323 + $0x180] sm:$0xff]
        %v398 = vld [vmem:[%s323 + $0x188] sm:$0xff]
        %v399 = vld [vmem:[%s323 + $0x190] sm:$0xff]
        %v400 = vld [vmem:[%s323 + $0x198] sm:$0xff]
        %v401 = vld [vmem:[%s323 + $0x1a0] sm:$0xff]
        %v402 = vld [vmem:[%s323 + $0x1a8] sm:$0xff]
        %v403 = vld [vmem:[%s323 + $0x1b0] sm:$0xff]
        %v404 = vld [vmem:[%s323 + $0x1b8] sm:$0xff]
        %v405 = vld [vmem:[%s323 + $0x1c0] sm:$0xff]
        %v406 = vld [vmem:[%s323 + $0x1c8] sm:$0xff]
        %v407 = vld [vmem:[%s323 + $0x1d0] sm:$0xff]
        %v408 = vld [vmem:[%s323 + $0x1d8] sm:$0xff]
        %v409 = vld [vmem:[%s323 + $0x1e0] sm:$0xff]
        %v410 = vld [vmem:[%s323 + $0x1e8] sm:$0xff]
        %v411 = vld [vmem:[%s323 + $0x1f0] sm:$0xff]
        %v412 = vld [vmem:[%s323 + $0x1f8] sm:$0xff]
        %v413 = vld [vmem:[%s323 + $0x200] sm:$0xff]
        %v414 = vld [vmem:[%s323 + $0x208] sm:$0xff]
        %v415 = vld [vmem:[%s323 + $0x210] sm:$0xff]
        %v416 = vld [vmem:[%s323 + $0x218] sm:$0xff]
        %v417 = vld [vmem:[%s323 + $0x220] sm:$0xff]
        %v418 = vld [vmem:[%s323 + $0x228] sm:$0xff]
        %v419 = vld [vmem:[%s323 + $0x230] sm:$0xff]
        %v420 = vld [vmem:[%s323 + $0x238] sm:$0xff]
        %v421 = vld [vmem:[%s323 + $0x240] sm:$0xff]
        %v422 = vld [vmem:[%s323 + $0x248] sm:$0xff]
        %v423 = vld [vmem:[%s323 + $0x250] sm:$0xff]
        %v424 = vld [vmem:[%s323 + $0x258] sm:$0xff]
        %v425 = vld [vmem:[%s323 + $0x260] sm:$0xff]
        %v426 = vld [vmem:[%s323 + $0x268] sm:$0xff]
        %v427 = vld [vmem:[%s323 + $0x270] sm:$0xff]
        %v428 = vld [vmem:[%s323 + $0x278] sm:$0xff]
        %v429 = vld [vmem:[%s2] sm:$0xff]
        %v430 = vld [vmem:[%s2 + $0x8] sm:$0xff]
        %v431 = vld [vmem:[%s2 + $0x10] sm:$0xff]
        %v432 = vld [vmem:[%s2 + $0x18] sm:$0xff]
        %434 = vset.pattern.permute.xlu0 0
        %435 = vperm.xlu0 %434, %v429
        %v436 = vpop.permute.xlu0 %435
        %439 = vset.pattern.permute.xlu0 0
        %440 = vperm.xlu0 %439, %v430
        %v441 = vpop.permute.xlu0 %440
        %444 = vset.pattern.permute.xlu0 0
        %445 = vperm.xlu0 %444, %v431
        %v446 = vpop.permute.xlu0 %445
        %449 = vset.pattern.permute.xlu0 0
        %450 = vperm.xlu0 %449, %v432
        %v451 = vpop.permute.xlu0 %450
        %vm453 = vcmask 654336
        %v455 = vsel %vm453, %v345, 0
        %v458 = vsel %vm453, %v346, 0
        %v461 = vsel %vm453, %v347, 0
        %v464 = vsel %vm453, %v348, 0
        %466 = vmatprep.subr.mxu0 0.0
        %467 = vmatpush1.msra.mxu0 0.0
        %468 = vmatprep.subr.mxu0 0.0
        %469 = vmatpush1.msra.mxu0 0.0
        %470 = vmatprep.subr.mxu0 0.0
        %471 = vmatpush1.msra.mxu0 0.0
        %472 = vmatprep.subr.mxu0 0.0
        %473 = vmatpush1.msra.mxu0 0.0
        %474 = vmatprep.subr.mxu0 0.0
        %475 = vmatpush1.msra.mxu0 0.0
        %476 = vmatprep.subr.mxu0 0.0
        %477 = vmatpush1.msra.mxu0 0.0
        %478 = vmatprep.subr.mxu0 %v422
        %479 = vmatpush1.msra.mxu0 %v421
        %480 = vmatprep.subr.mxu0 %v414
        %481 = vmatpush1.msra.mxu0 %v413
        %482 = vmatprep.subr.mxu0 %v406
        %483 = vmatpush1.msra.mxu0 %v405
        %484 = vmatprep.subr.mxu0 %v398
        %485 = vmatpush1.msra.mxu0 %v397
        %486 = vmatprep.subr.mxu0 %v390
        %487 = vmatpush1.msra.mxu0 %v389
        %488 = vmatprep.subr.mxu0 %v382
        %489 = vmatpush1.msra.mxu0 %v381
        %490 = vmatprep.subr.mxu0 %v374
        %491 = vmatpush1.msra.mxu0 %v373
        %492 = vmatprep.subr.mxu0 %v366
        %493 = vmatpush1.msra.mxu0 %v365
        %494 = vmatprep.subr.mxu0 %v358
        %495 = vmatpush1.msra.mxu0 %v357
        %496 = vmatprep.subr.mxu0 %v350
        %497 = vmatpush1.msra.mxu0 %v349
        %498 = vmatprep.subr.mxu0 0.0
        %499 = vmatpush2.msra.mxu0 0.0
        %500 = vmatprep.subr.mxu0 0.0
        %501 = vmatpush2.msra.mxu0 0.0
        %502 = vmatprep.subr.mxu0 0.0
        %503 = vmatpush2.msra.mxu0 0.0
        %504 = vmatprep.subr.mxu0 0.0
        %505 = vmatpush2.msra.mxu0 0.0
        %506 = vmatprep.subr.mxu0 0.0
        %507 = vmatpush2.msra.mxu0 0.0
        %508 = vmatprep.subr.mxu0 0.0
        %509 = vmatpush2.msra.mxu0 0.0
        %510 = vmatprep.subr.mxu0 0.0
        %511 = vmatpush2.msra.mxu0 0.0
        %512 = vmatprep.subr.mxu0 0.0
        %513 = vmatpush2.msra.mxu0 0.0
        %514 = vmatprep.subr.mxu0 0.0
        %515 = vmatpush2.msra.mxu0 0.0
        %516 = vmatprep.subr.mxu0 0.0
        %517 = vmatpush2.msra.mxu0 0.0
        %518 = vmatprep.subr.mxu0 0.0
        %519 = vmatpush2.msra.mxu0 0.0
        %520 = vmatprep.subr.mxu0 0.0
        %521 = vmatpush2.msra.mxu0 0.0
        %522 = vmatprep.subr.mxu0 0.0
        %523 = vmatpush2.msra.mxu0 0.0
        %524 = vmatprep.subr.mxu0 0.0
        %525 = vmatpush2.msra.mxu0 0.0
        %526 = vmatprep.subr.mxu0 0.0
        %527 = vmatpush2.msra.mxu0 0.0
        %528 = vmatprep.subr.mxu0 0.0
        %529 = vmatpush2.msra.mxu0 0.0
        %530 = vmatprep.mubr.f32.mxu0 0.0
        %531 = vmatmul.mubr.f32.gmra.mxu0 %v455
        %v532 = vpop.f32.mrf.mxu0
        %v533 = vadd.f32 %v436, %v532
        %v534 = vpop.f32.mrf.mxu0
        %v535 = vadd.f32 %v436, %v534
        %536 = vmatprep.mubr.f32.mxu0 0.0
        %537 = vmatmul.mubr.f32.gmra.mxu0 %v458
        %v538 = vpop.f32.mrf.mxu0
        %v539 = vadd.f32 %v441, %v538
        %v540 = vpop.f32.mrf.mxu0
        %v541 = vadd.f32 %v441, %v540
        %542 = vmatprep.mubr.f32.mxu0 0.0
        %543 = vmatmul.mubr.f32.gmra.mxu0 %v461
        %v544 = vpop.f32.mrf.mxu0
        %v545 = vadd.f32 %v446, %v544
        %v546 = vpop.f32.mrf.mxu0
        %v547 = vadd.f32 %v446, %v546
        %548 = vmatprep.mubr.f32.mxu0 0.0
        %549 = vmatmul.mubr.f32.gmra.mxu0 %v464
        %v550 = vpop.f32.mrf.mxu0
        %v551 = vadd.f32 %v451, %v550
        %v552 = vpop.f32.mrf.mxu0
        %v553 = vadd.f32 %v451, %v552
        %554 = vdwg.mxu0
        %555 = vmatprep.subr.mxu0 0.0
        %556 = vmatpush1.msra.mxu0 0.0
        %557 = vmatprep.subr.mxu0 0.0
        %558 = vmatpush1.msra.mxu0 0.0
        %559 = vmatprep.subr.mxu0 0.0
        %560 = vmatpush1.msra.mxu0 0.0
        %561 = vmatprep.subr.mxu0 0.0
        %562 = vmatpush1.msra.mxu0 0.0
        %563 = vmatprep.subr.mxu0 0.0
        %564 = vmatpush1.msra.mxu0 0.0
        %565 = vmatprep.subr.mxu0 0.0
        %566 = vmatpush1.msra.mxu0 0.0
        %567 = vmatprep.subr.mxu0 %v424
        %568 = vmatpush1.msra.mxu0 %v423
        %569 = vmatprep.subr.mxu0 %v416
        %570 = vmatpush1.msra.mxu0 %v415
        %571 = vmatprep.subr.mxu0 %v408
        %572 = vmatpush1.msra.mxu0 %v407
        %573 = vmatprep.subr.mxu0 %v400
        %574 = vmatpush1.msra.mxu0 %v399
        %575 = vmatprep.subr.mxu0 %v392
        %576 = vmatpush1.msra.mxu0 %v391
        %577 = vmatprep.subr.mxu0 %v384
        %578 = vmatpush1.msra.mxu0 %v383
        %579 = vmatprep.subr.mxu0 %v376
        %580 = vmatpush1.msra.mxu0 %v375
        %581 = vmatprep.subr.mxu0 %v368
        %582 = vmatpush1.msra.mxu0 %v367
        %583 = vmatprep.subr.mxu0 %v360
        %584 = vmatpush1.msra.mxu0 %v359
        %585 = vmatprep.subr.mxu0 %v352
        %586 = vmatpush1.msra.mxu0 %v351
        %587 = vmatprep.subr.mxu0 0.0
        %588 = vmatpush2.msra.mxu0 0.0
        %589 = vmatprep.subr.mxu0 0.0
        %590 = vmatpush2.msra.mxu0 0.0
        %591 = vmatprep.subr.mxu0 0.0
        %592 = vmatpush2.msra.mxu0 0.0
        %593 = vmatprep.subr.mxu0 0.0
        %594 = vmatpush2.msra.mxu0 0.0
        %595 = vmatprep.subr.mxu0 0.0
        %596 = vmatpush2.msra.mxu0 0.0
        %597 = vmatprep.subr.mxu0 0.0
        %598 = vmatpush2.msra.mxu0 0.0
        %599 = vmatprep.subr.mxu0 0.0
        %600 = vmatpush2.msra.mxu0 0.0
        %601 = vmatprep.subr.mxu0 0.0
        %602 = vmatpush2.msra.mxu0 0.0
        %603 = vmatprep.subr.mxu0 0.0
        %604 = vmatpush2.msra.mxu0 0.0
        %605 = vmatprep.subr.mxu0 0.0
        %606 = vmatpush2.msra.mxu0 0.0
        %607 = vmatprep.subr.mxu0 0.0
        %608 = vmatpush2.msra.mxu0 0.0
        %609 = vmatprep.subr.mxu0 0.0
        %610 = vmatpush2.msra.mxu0 0.0
        %611 = vmatprep.subr.mxu0 0.0
        %612 = vmatpush2.msra.mxu0 0.0
        %613 = vmatprep.subr.mxu0 0.0
        %614 = vmatpush2.msra.mxu0 0.0
        %615 = vmatprep.subr.mxu0 0.0
        %616 = vmatpush2.msra.mxu0 0.0
        %617 = vmatprep.subr.mxu0 0.0
        %618 = vmatpush2.msra.mxu0 0.0
        %619 = vmatprep.mubr.f32.mxu0 0.0
        %620 = vmatmul.mubr.f32.gmra.mxu0 %v455
        %v621 = vpop.f32.mrf.mxu0
        %v622 = vadd.f32 %v436, %v621
        %v623 = vpop.f32.mrf.mxu0
        %v624 = vadd.f32 %v436, %v623
        %625 = vmatprep.mubr.f32.mxu0 0.0
        %626 = vmatmul.mubr.f32.gmra.mxu0 %v458
        %v627 = vpop.f32.mrf.mxu0
        %v628 = vadd.f32 %v441, %v627
        %v629 = vpop.f32.mrf.mxu0
        %v630 = vadd.f32 %v441, %v629
        %631 = vmatprep.mubr.f32.mxu0 0.0
        %632 = vmatmul.mubr.f32.gmra.mxu0 %v461
        %v633 = vpop.f32.mrf.mxu0
        %v634 = vadd.f32 %v446, %v633
        %v635 = vpop.f32.mrf.mxu0
        %v636 = vadd.f32 %v446, %v635
        %637 = vmatprep.mubr.f32.mxu0 0.0
        %638 = vmatmul.mubr.f32.gmra.mxu0 %v464
        %v639 = vpop.f32.mrf.mxu0
        %v640 = vadd.f32 %v451, %v639
        %v641 = vpop.f32.mrf.mxu0
        %v642 = vadd.f32 %v451, %v641
        %643 = vdwg.mxu0
        %644 = vmatprep.subr.mxu0 0.0
        %645 = vmatpush1.msra.mxu0 0.0
        %646 = vmatprep.subr.mxu0 0.0
        %647 = vmatpush1.msra.mxu0 0.0
        %648 = vmatprep.subr.mxu0 0.0
        %649 = vmatpush1.msra.mxu0 0.0
        %650 = vmatprep.subr.mxu0 0.0
        %651 = vmatpush1.msra.mxu0 0.0
        %652 = vmatprep.subr.mxu0 0.0
        %653 = vmatpush1.msra.mxu0 0.0
        %654 = vmatprep.subr.mxu0 0.0
        %655 = vmatpush1.msra.mxu0 0.0
        %656 = vmatprep.subr.mxu0 %v426
        %657 = vmatpush1.msra.mxu0 %v425
        %658 = vmatprep.subr.mxu0 %v418
        %659 = vmatpush1.msra.mxu0 %v417
        %660 = vmatprep.subr.mxu0 %v410
        %661 = vmatpush1.msra.mxu0 %v409
        %662 = vmatprep.subr.mxu0 %v402
        %663 = vmatpush1.msra.mxu0 %v401
        %664 = vmatprep.subr.mxu0 %v394
        %665 = vmatpush1.msra.mxu0 %v393
        %666 = vmatprep.subr.mxu0 %v386
        %667 = vmatpush1.msra.mxu0 %v385
        %668 = vmatprep.subr.mxu0 %v378
        %669 = vmatpush1.msra.mxu0 %v377
        %670 = vmatprep.subr.mxu0 %v370
        %671 = vmatpush1.msra.mxu0 %v369
        %672 = vmatprep.subr.mxu0 %v362
        %673 = vmatpush1.msra.mxu0 %v361
        %674 = vmatprep.subr.mxu0 %v354
        %675 = vmatpush1.msra.mxu0 %v353
        %676 = vmatprep.subr.mxu0 0.0
        %677 = vmatpush2.msra.mxu0 0.0
        %678 = vmatprep.subr.mxu0 0.0
        %679 = vmatpush2.msra.mxu0 0.0
        %680 = vmatprep.subr.mxu0 0.0
        %681 = vmatpush2.msra.mxu0 0.0
        %682 = vmatprep.subr.mxu0 0.0
        %683 = vmatpush2.msra.mxu0 0.0
        %684 = vmatprep.subr.mxu0 0.0
        %685 = vmatpush2.msra.mxu0 0.0
        %686 = vmatprep.subr.mxu0 0.0
        %687 = vmatpush2.msra.mxu0 0.0
        %688 = vmatprep.subr.mxu0 0.0
        %689 = vmatpush2.msra.mxu0 0.0
        %690 = vmatprep.subr.mxu0 0.0
        %691 = vmatpush2.msra.mxu0 0.0
        %692 = vmatprep.subr.mxu0 0.0
        %693 = vmatpush2.msra.mxu0 0.0
        %694 = vmatprep.subr.mxu0 0.0
        %695 = vmatpush2.msra.mxu0 0.0
        %696 = vmatprep.subr.mxu0 0.0
        %697 = vmatpush2.msra.mxu0 0.0
        %698 = vmatprep.subr.mxu0 0.0
        %699 = vmatpush2.msra.mxu0 0.0
        %700 = vmatprep.subr.mxu0 0.0
        %701 = vmatpush2.msra.mxu0 0.0
        %702 = vmatprep.subr.mxu0 0.0
        %703 = vmatpush2.msra.mxu0 0.0
        %704 = vmatprep.subr.mxu0 0.0
        %705 = vmatpush2.msra.mxu0 0.0
        %706 = vmatprep.subr.mxu0 0.0
        %707 = vmatpush2.msra.mxu0 0.0
        %708 = vmatprep.mubr.f32.mxu0 0.0
        %709 = vmatmul.mubr.f32.gmra.mxu0 %v455
        %v710 = vpop.f32.mrf.mxu0
        %v711 = vadd.f32 %v436, %v710
        %v712 = vpop.f32.mrf.mxu0
        %v713 = vadd.f32 %v436, %v712
        %714 = vmatprep.mubr.f32.mxu0 0.0
        %715 = vmatmul.mubr.f32.gmra.mxu0 %v458
        %v716 = vpop.f32.mrf.mxu0
        %v717 = vadd.f32 %v441, %v716
        %v718 = vpop.f32.mrf.mxu0
        %v719 = vadd.f32 %v441, %v718
        %720 = vmatprep.mubr.f32.mxu0 0.0
        %721 = vmatmul.mubr.f32.gmra.mxu0 %v461
        %v722 = vpop.f32.mrf.mxu0
        %v723 = vadd.f32 %v446, %v722
        %v724 = vpop.f32.mrf.mxu0
        %v725 = vadd.f32 %v446, %v724
        %726 = vmatprep.mubr.f32.mxu0 0.0
        %727 = vmatmul.mubr.f32.gmra.mxu0 %v464
        %v728 = vpop.f32.mrf.mxu0
        %v729 = vadd.f32 %v451, %v728
        %v730 = vpop.f32.mrf.mxu0
        %v731 = vadd.f32 %v451, %v730
        %732 = vdwg.mxu0
        %733 = vmatprep.subr.mxu0 0.0
        %734 = vmatpush1.msra.mxu0 0.0
        %735 = vmatprep.subr.mxu0 0.0
        %736 = vmatpush1.msra.mxu0 0.0
        %737 = vmatprep.subr.mxu0 0.0
        %738 = vmatpush1.msra.mxu0 0.0
        %739 = vmatprep.subr.mxu0 0.0
        %740 = vmatpush1.msra.mxu0 0.0
        %741 = vmatprep.subr.mxu0 0.0
        %742 = vmatpush1.msra.mxu0 0.0
        %743 = vmatprep.subr.mxu0 0.0
        %744 = vmatpush1.msra.mxu0 0.0
        %745 = vmatprep.subr.mxu0 %v428
        %746 = vmatpush1.msra.mxu0 %v427
        %747 = vmatprep.subr.mxu0 %v420
        %748 = vmatpush1.msra.mxu0 %v419
        %749 = vmatprep.subr.mxu0 %v412
        %750 = vmatpush1.msra.mxu0 %v411
        %751 = vmatprep.subr.mxu0 %v404
        %752 = vmatpush1.msra.mxu0 %v403
        %753 = vmatprep.subr.mxu0 %v396
        %754 = vmatpush1.msra.mxu0 %v395
        %755 = vmatprep.subr.mxu0 %v388
        %756 = vmatpush1.msra.mxu0 %v387
        %757 = vmatprep.subr.mxu0 %v380
        %758 = vmatpush1.msra.mxu0 %v379
        %759 = vmatprep.subr.mxu0 %v372
        %760 = vmatpush1.msra.mxu0 %v371
        %761 = vmatprep.subr.mxu0 %v364
        %762 = vmatpush1.msra.mxu0 %v363
        %763 = vmatprep.subr.mxu0 %v356
        %764 = vmatpush1.msra.mxu0 %v355
        %765 = vmatprep.subr.mxu0 0.0
        %766 = vmatpush2.msra.mxu0 0.0
        %767 = vmatprep.subr.mxu0 0.0
        %768 = vmatpush2.msra.mxu0 0.0
        %769 = vmatprep.subr.mxu0 0.0
        %770 = vmatpush2.msra.mxu0 0.0
        %771 = vmatprep.subr.mxu0 0.0
        %772 = vmatpush2.msra.mxu0 0.0
        %773 = vmatprep.subr.mxu0 0.0
        %774 = vmatpush2.msra.mxu0 0.0
        %775 = vmatprep.subr.mxu0 0.0
        %776 = vmatpush2.msra.mxu0 0.0
        %777 = vmatprep.subr.mxu0 0.0
        %778 = vmatpush2.msra.mxu0 0.0
        %779 = vmatprep.subr.mxu0 0.0
        %780 = vmatpush2.msra.mxu0 0.0
        %781 = vmatprep.subr.mxu0 0.0
        %782 = vmatpush2.msra.mxu0 0.0
        %783 = vmatprep.subr.mxu0 0.0
        %784 = vmatpush2.msra.mxu0 0.0
        %785 = vmatprep.subr.mxu0 0.0
        %786 = vmatpush2.msra.mxu0 0.0
        %787 = vmatprep.subr.mxu0 0.0
        %788 = vmatpush2.msra.mxu0 0.0
        %789 = vmatprep.subr.mxu0 0.0
        %790 = vmatpush2.msra.mxu0 0.0
        %791 = vmatprep.subr.mxu0 0.0
        %792 = vmatpush2.msra.mxu0 0.0
        %793 = vmatprep.subr.mxu0 0.0
        %794 = vmatpush2.msra.mxu0 0.0
        %795 = vmatprep.subr.mxu0 0.0
        %796 = vmatpush2.msra.mxu0 0.0
        %797 = vmatprep.mubr.f32.mxu0 0.0
        %798 = vmatmul.mubr.f32.gmra.mxu0 %v455
        %v799 = vpop.f32.mrf.mxu0
        %v800 = vadd.f32 %v436, %v799
        %v801 = vpop.f32.mrf.mxu0
        %v802 = vadd.f32 %v436, %v801
        %803 = vmatprep.mubr.f32.mxu0 0.0
        %804 = vmatmul.mubr.f32.gmra.mxu0 %v458
        %v805 = vpop.f32.mrf.mxu0
        %v806 = vadd.f32 %v441, %v805
        %v807 = vpop.f32.mrf.mxu0
        %v808 = vadd.f32 %v441, %v807
        %809 = vmatprep.mubr.f32.mxu0 0.0
        %810 = vmatmul.mubr.f32.gmra.mxu0 %v461
        %v811 = vpop.f32.mrf.mxu0
        %v812 = vadd.f32 %v446, %v811
        %v813 = vpop.f32.mrf.mxu0
        %v814 = vadd.f32 %v446, %v813
        %815 = vmatprep.mubr.f32.mxu0 0.0
        %816 = vmatmul.mubr.f32.gmra.mxu0 %v464
        %v817 = vpop.f32.mrf.mxu0
        %v818 = vadd.f32 %v451, %v817
        %v819 = vpop.f32.mrf.mxu0
        %v820 = vadd.f32 %v451, %v819
        %821 = vdwg.mxu0
        %v822 = vmax.f32 %v533, 0.0
        %v823 = vmax.f32 %v535, 0.0
        %v824 = vmax.f32 %v622, 0.0
        %v825 = vmax.f32 %v624, 0.0
        %v826 = vmax.f32 %v711, 0.0
        %v827 = vmax.f32 %v713, 0.0
        %v828 = vmax.f32 %v800, 0.0
        %v829 = vmax.f32 %v802, 0.0
        %v830 = vmax.f32 %v539, 0.0
        %v831 = vmax.f32 %v541, 0.0
        %v832 = vmax.f32 %v628, 0.0
        %v833 = vmax.f32 %v630, 0.0
        %v834 = vmax.f32 %v717, 0.0
        %v835 = vmax.f32 %v719, 0.0
        %v836 = vmax.f32 %v806, 0.0
        %v837 = vmax.f32 %v808, 0.0
        %v838 = vmax.f32 %v545, 0.0
        %v839 = vmax.f32 %v547, 0.0
        %v840 = vmax.f32 %v634, 0.0
        %v841 = vmax.f32 %v636, 0.0
        %v842 = vmax.f32 %v723, 0.0
        %v843 = vmax.f32 %v725, 0.0
        %v844 = vmax.f32 %v812, 0.0
        %v845 = vmax.f32 %v814, 0.0
        %v846 = vmax.f32 %v551, 0.0
        %v847 = vmax.f32 %v553, 0.0
        %v848 = vmax.f32 %v640, 0.0
        %v849 = vmax.f32 %v642, 0.0
        %v850 = vmax.f32 %v729, 0.0
        %v851 = vmax.f32 %v731, 0.0
        %v852 = vmax.f32 %v818, 0.0
        %v853 = vmax.f32 %v820, 0.0
        %854 = vst [vmem:[%s342] sm:$0xff] %v822
        %855 = vst [vmem:[%s342 + $0x8] sm:$0xff] %v823
        %856 = vst [vmem:[%s342 + $0x10] sm:$0xff] %v824
        %857 = vst [vmem:[%s342 + $0x18] sm:$0xff] %v825
        %858 = vst [vmem:[%s342 + $0x20] sm:$0xff] %v826
        %859 = vst [vmem:[%s342 + $0x28] sm:$0xff] %v827
        %860 = vst [vmem:[%s342 + $0x30] sm:$0xff] %v828
        %861 = vst [vmem:[%s342 + $0x38] sm:$0xff] %v829
        %862 = vst [vmem:[%s342 + $0x40] sm:$0xff] %v830
        %863 = vst [vmem:[%s342 + $0x48] sm:$0xff] %v831
        %864 = vst [vmem:[%s342 + $0x50] sm:$0xff] %v832
        %865 = vst [vmem:[%s342 + $0x58] sm:$0xff] %v833
        %866 = vst [vmem:[%s342 + $0x60] sm:$0xff] %v834
        %867 = vst [vmem:[%s342 + $0x68] sm:$0xff] %v835
        %868 = vst [vmem:[%s342 + $0x70] sm:$0xff] %v836
        %869 = vst [vmem:[%s342 + $0x78] sm:$0xff] %v837
        %870 = vst [vmem:[%s342 + $0x80] sm:$0xff] %v838
        %871 = vst [vmem:[%s342 + $0x88] sm:$0xff] %v839
        %872 = vst [vmem:[%s342 + $0x90] sm:$0xff] %v840
        %873 = vst [vmem:[%s342 + $0x98] sm:$0xff] %v841
        %874 = vst [vmem:[%s342 + $0xa0] sm:$0xff] %v842
        %875 = vst [vmem:[%s342 + $0xa8] sm:$0xff] %v843
        %876 = vst [vmem:[%s342 + $0xb0] sm:$0xff] %v844
        %877 = vst [vmem:[%s342 + $0xb8] sm:$0xff] %v845
        %878 = vst [vmem:[%s342 + $0xc0] sm:$0xff] %v846
        %879 = vst [vmem:[%s342 + $0xc8] sm:$0xff] %v847
        %880 = vst [vmem:[%s342 + $0xd0] sm:$0xff] %v848
        %881 = vst [vmem:[%s342 + $0xd8] sm:$0xff] %v849
        %882 = vst [vmem:[%s342 + $0xe0] sm:$0xff] %v850
        %883 = vst [vmem:[%s342 + $0xe8] sm:$0xff] %v851
        %884 = vst [vmem:[%s342 + $0xf0] sm:$0xff] %v852
        %885 = vst [vmem:[%s342 + $0xf8] sm:$0xff] %v853
        %s886 = sand.u32 %s90, 1
        %s887 = sand.u32 %s90, 1
        %s888 = smul.addr %s887, 256
        %s889 = scalar_lea.vmem [#allocation3], %s888
        // Predicated region
        $region56: #{convolutional_net_forward.8} parent=50 // pred_check
          %p890 = pneg %p100
        $region57: #{convolutional_net_forward.8} parent=50 // pred_check_branch
          %892 = sbr.rel (%p890) target = $region59
        $region58: #{convolutional_net_forward.8} parent=50 // pred_region
          %s893 = smul.u32 8, %s14
          %s894 = smul.addr %s893, 8
          %s895 = scalar_lea.vmem %s3, %s894
          // Predicated region
          $region60: #{convolutional_net_forward.8} parent=58 // pred_check
            _
          $region61: #{convolutional_net_forward.8} parent=58 // pred_check_branch
            %897 = sbr.rel (0) target = $region63
          $region62: #{convolutional_net_forward.8} parent=58 // pred_region
            // Predicated region
            $region64: #{convolutional_net_forward.8} parent=62 // pred_check
              _
            $region65: #{convolutional_net_forward.8} parent=62 // pred_check_branch
              %899 = sbr.rel (0) target = $region67
            $region66: #{convolutional_net_forward.8} parent=62 // pred_region
              loop: start=0, step=1, limit=1
              $region68: #{convolutional_net_forward.8} parent=66 // loop_pre_header
                _
              $region69: #{convolutional_net_forward.8} parent=66 // loop_header
                %s901 = sphi 0, %s905
                %p902 = scmp.ge.s32.totalorder %s901, 1
                %s906 = sphi %s889, %s889
                %s907 = sphi %s895, %s895
              $region70: #{convolutional_net_forward.8} parent=66 // loop_header_branch
                %904 = sbr.rel (%p902) target = $region74
              $region71: #{convolutional_net_forward.8} parent=66 // loop_body
                %v908 = vld [vmem:[%s906] sm:$0xff]
                %909 = vst [vmem:[%s907] sm:$0xff] %v908
                %v910 = vld [vmem:[%s906 + $0x8] sm:$0xff]
                %911 = vst [vmem:[%s907 + $0x8] sm:$0xff] %v910
                %v912 = vld [vmem:[%s906 + $0x10] sm:$0xff]
                %913 = vst [vmem:[%s907 + $0x10] sm:$0xff] %v912
                %v914 = vld [vmem:[%s906 + $0x18] sm:$0xff]
                %915 = vst [vmem:[%s907 + $0x18] sm:$0xff] %v914
                %v916 = vld [vmem:[%s906 + $0x20] sm:$0xff]
                %917 = vst [vmem:[%s907 + $0x20] sm:$0xff] %v916
                %v918 = vld [vmem:[%s906 + $0x28] sm:$0xff]
                %919 = vst [vmem:[%s907 + $0x28] sm:$0xff] %v918
                %v920 = vld [vmem:[%s906 + $0x30] sm:$0xff]
                %921 = vst [vmem:[%s907 + $0x30] sm:$0xff] %v920
                %v922 = vld [vmem:[%s906 + $0x38] sm:$0xff]
                %923 = vst [vmem:[%s907 + $0x38] sm:$0xff] %v922
                %v924 = vld [vmem:[%s906 + $0x40] sm:$0xff]
                %925 = vst [vmem:[%s907 + $0x140] sm:$0xff] %v924
                %v926 = vld [vmem:[%s906 + $0x48] sm:$0xff]
                %927 = vst [vmem:[%s907 + $0x148] sm:$0xff] %v926
                %v928 = vld [vmem:[%s906 + $0x50] sm:$0xff]
                %929 = vst [vmem:[%s907 + $0x150] sm:$0xff] %v928
                %v930 = vld [vmem:[%s906 + $0x58] sm:$0xff]
                %931 = vst [vmem:[%s907 + $0x158] sm:$0xff] %v930
                %v932 = vld [vmem:[%s906 + $0x60] sm:$0xff]
                %933 = vst [vmem:[%s907 + $0x160] sm:$0xff] %v932
                %v934 = vld [vmem:[%s906 + $0x68] sm:$0xff]
                %935 = vst [vmem:[%s907 + $0x168] sm:$0xff] %v934
                %v936 = vld [vmem:[%s906 + $0x70] sm:$0xff]
                %937 = vst [vmem:[%s907 + $0x170] sm:$0xff] %v936
                %v938 = vld [vmem:[%s906 + $0x78] sm:$0xff]
                %939 = vst [vmem:[%s907 + $0x178] sm:$0xff] %v938
                %v940 = vld [vmem:[%s906 + $0x80] sm:$0xff]
                %941 = vst [vmem:[%s907 + $0x280] sm:$0xff] %v940
                %v942 = vld [vmem:[%s906 + $0x88] sm:$0xff]
                %943 = vst [vmem:[%s907 + $0x288] sm:$0xff] %v942
                %v944 = vld [vmem:[%s906 + $0x90] sm:$0xff]
                %945 = vst [vmem:[%s907 + $0x290] sm:$0xff] %v944
                %v946 = vld [vmem:[%s906 + $0x98] sm:$0xff]
                %947 = vst [vmem:[%s907 + $0x298] sm:$0xff] %v946
                %v948 = vld [vmem:[%s906 + $0xa0] sm:$0xff]
                %949 = vst [vmem:[%s907 + $0x2a0] sm:$0xff] %v948
                %v950 = vld [vmem:[%s906 + $0xa8] sm:$0xff]
                %951 = vst [vmem:[%s907 + $0x2a8] sm:$0xff] %v950
                %v952 = vld [vmem:[%s906 + $0xb0] sm:$0xff]
                %953 = vst [vmem:[%s907 + $0x2b0] sm:$0xff] %v952
                %v954 = vld [vmem:[%s906 + $0xb8] sm:$0xff]
                %955 = vst [vmem:[%s907 + $0x2b8] sm:$0xff] %v954
                %v956 = vld [vmem:[%s906 + $0xc0] sm:$0xff]
                %957 = vst [vmem:[%s907 + $0x3c0] sm:$0xff] %v956
                %v958 = vld [vmem:[%s906 + $0xc8] sm:$0xff]
                %959 = vst [vmem:[%s907 + $0x3c8] sm:$0xff] %v958
                %v960 = vld [vmem:[%s906 + $0xd0] sm:$0xff]
                %961 = vst [vmem:[%s907 + $0x3d0] sm:$0xff] %v960
                %v962 = vld [vmem:[%s906 + $0xd8] sm:$0xff]
                %963 = vst [vmem:[%s907 + $0x3d8] sm:$0xff] %v962
                %v964 = vld [vmem:[%s906 + $0xe0] sm:$0xff]
                %965 = vst [vmem:[%s907 + $0x3e0] sm:$0xff] %v964
                %v966 = vld [vmem:[%s906 + $0xe8] sm:$0xff]
                %967 = vst [vmem:[%s907 + $0x3e8] sm:$0xff] %v966
                %v968 = vld [vmem:[%s906 + $0xf0] sm:$0xff]
                %969 = vst [vmem:[%s907 + $0x3f0] sm:$0xff] %v968
                %v970 = vld [vmem:[%s906 + $0xf8] sm:$0xff]
                %971 = vst [vmem:[%s907 + $0x3f8] sm:$0xff] %v970
              $region72: #{convolutional_net_forward.8} parent=66 // loop_footer
                %s905 = sadd.s32 1, %s901
              $region73: #{convolutional_net_forward.8} parent=66 // loop_footer_branch
                %900 = sbr.rel target = $region69
              $region74: #{convolutional_net_forward.8} parent=66 // loop_exit
                _
            $region67: #{convolutional_net_forward.8} parent=62 // pred_fallthru
              _
            // Predicated region
            $region75: #{convolutional_net_forward.8} parent=62 // pred_check
              _
            $region76: #{convolutional_net_forward.8} parent=62 // pred_check_branch
              %973 = sbr.rel target = $region78
            $region77: #{convolutional_net_forward.8} parent=62 // pred_region
              _
            $region78: #{convolutional_net_forward.8} parent=62 // pred_fallthru
              _
          $region63: #{convolutional_net_forward.8} parent=58 // pred_fallthru
            _
          %974 = vnop
        $region59: #{convolutional_net_forward.8} parent=50 // pred_fallthru
          _
      $region51: #{convolutional_net_forward.8} parent=5 // pred_fallthru
        _
      %p975 = scmp.le.s32.totalorder 2, %s9
      // Predicated region
      $region79: #{convolutional_net_forward.8} parent=5 // pred_check
        %p976 = pneg %p975
      $region80: #{convolutional_net_forward.8} parent=5 // pred_check_branch
        %978 = sbr.rel (%p976) target = $region82
      $region81: #{convolutional_net_forward.8} parent=5 // pred_region
        %s979 = ssub.s32 %s9, 2
        // Predicated region
        $region83: #{convolutional_net_forward.8} parent=81 // pred_check
          %p980 = pneg %p106
        $region84: #{convolutional_net_forward.8} parent=81 // pred_check_branch
          %982 = sbr.rel (%p980) target = $region86
        $region85: #{convolutional_net_forward.8} parent=81 // pred_region
          %s983 = sand.u32 %s91, 1
          %s984 = sand.u32 %s91, 1
          %s985 = smul.addr %s984, 256
          %s986 = scalar_lea.vmem [#allocation3], %s985
        $region86: #{convolutional_net_forward.8} parent=81 // pred_fallthru
          _
      $region82: #{convolutional_net_forward.8} parent=5 // pred_fallthru
        _
    $region6: #{convolutional_net_forward.8} parent=1 // loop_footer
      %s13 = sadd.s32 1, %s9
    $region7: #{convolutional_net_forward.8} parent=1 // loop_footer_branch
      %8 = sbr.rel target = $region3
    $region8: #{convolutional_net_forward.8} parent=1 // loop_exit
      _

// kernel: convolutional_net_forward.9
$region0: #{convolutional_net_forward.9}
  #allocation0 [shape = 'u32[]', space=smem, size = 0x4, offset = 0x4, fixed_abs, tag = 'smem constant byte address 0x4 - core index']
  #allocation1 [shape = 'u32[144,128]{1,0:T(1,128)}', space=vmem, size = 0x12000, scoped, tag = 'internal scratch']
  %s0 = inlined_call_operand.vmem [shape: f32[64,160], index: 0, kind: input, shape index: {}]
  %s1 = inlined_call_operand.vmem [shape: f32[160,896], index: 1, kind: input, shape index: {}]
  %s2 = inlined_call_operand.vmem [shape: f32[64,1], index: 2, kind: input, shape index: {}]
  %s3 = inlined_call_operand.vmem [shape: f32[64,896], index: 3, kind: output, shape index: {}]
  %s4 = sld [smem:[#allocation0]]
  $region22: #{convolutional_net_forward.9} parent=0
    _
  %s6 = ssub.s32 1, %s4
  %s7 = scalar_select 0, %s6, %s4
  // Predicated region
  $region2: #{convolutional_net_forward.9} parent=0 // pred_check
    _
  $region3: #{convolutional_net_forward.9} parent=0 // pred_check_branch
    %9 = sbr.rel (0) target = $region5
  $region4: #{convolutional_net_forward.9} parent=0 // pred_region
    _
  $region5: #{convolutional_net_forward.9} parent=0 // pred_fallthru
    _
  // Predicated region
  $region6: #{convolutional_net_forward.9} parent=0 // pred_check
    _
  $region7: #{convolutional_net_forward.9} parent=0 // pred_check_branch
    %11 = sbr.rel (0) target = $region9
  $region8: #{convolutional_net_forward.9} parent=0 // pred_region
    _
  $region9: #{convolutional_net_forward.9} parent=0 // pred_fallthru
    _
  // Predicated region
  $region10: #{convolutional_net_forward.9} parent=0 // pred_check
    _
  $region11: #{convolutional_net_forward.9} parent=0 // pred_check_branch
    %13 = sbr.rel (0) target = $region13
  $region12: #{convolutional_net_forward.9} parent=0 // pred_region
    _
  $region13: #{convolutional_net_forward.9} parent=0 // pred_fallthru
    _
  %v14 = vld [vmem:[%s0] sm:$0xff]
  %v15 = vld [vmem:[%s0 + $0x8] sm:$0xff]
  %v16 = vld [vmem:[%s0 + $0x10] sm:$0xff]
  %v17 = vld [vmem:[%s0 + $0x18] sm:$0xff]
  %v18 = vld [vmem:[%s0 + $0x20] sm:$0xff]
  %v19 = vld [vmem:[%s0 + $0x28] sm:$0xff]
  %v20 = vld [vmem:[%s0 + $0x30] sm:$0xff]
  %v21 = vld [vmem:[%s0 + $0x38] sm:$0xff]
  %v22 = vld [vmem:[%s0 + $0x40] sm:$0xff]
  %v23 = vld [vmem:[%s0 + $0x48] sm:$0xff]
  %v24 = vld [vmem:[%s0 + $0x50] sm:$0xff]
  %v25 = vld [vmem:[%s0 + $0x58] sm:$0xff]
  %v26 = vld [vmem:[%s0 + $0x60] sm:$0xff]
  %v27 = vld [vmem:[%s0 + $0x68] sm:$0xff]
  %v28 = vld [vmem:[%s0 + $0x70] sm:$0xff]
  %v29 = vld [vmem:[%s0 + $0x78] sm:$0xff]
  %v30 = vld [vmem:[%s1] sm:$0xff]
  %v31 = vld [vmem:[%s1 + $0x8] sm:$0xff]
  %v32 = vld [vmem:[%s1 + $0x10] sm:$0xff]
  %v33 = vld [vmem:[%s1 + $0x18] sm:$0xff]
  %v34 = vld [vmem:[%s1 + $0x20] sm:$0xff]
  %v35 = vld [vmem:[%s1 + $0x28] sm:$0xff]
  %v36 = vld [vmem:[%s1 + $0x30] sm:$0xff]
  %v37 = vld [vmem:[%s1 + $0x38] sm:$0xff]
  %v38 = vld [vmem:[%s1 + $0x40] sm:$0xff]
  %v39 = vld [vmem:[%s1 + $0x48] sm:$0xff]
  %v40 = vld [vmem:[%s1 + $0x50] sm:$0xff]
  %v41 = vld [vmem:[%s1 + $0x58] sm:$0xff]
  %v42 = vld [vmem:[%s1 + $0x60] sm:$0xff]
  %v43 = vld [vmem:[%s1 + $0x68] sm:$0xff]
  %v44 = vld [vmem:[%s1 + $0x70] sm:$0xff]
  %v45 = vld [vmem:[%s1 + $0x78] sm:$0xff]
  %v46 = vld [vmem:[%s1 + $0x80] sm:$0xff]
  %v47 = vld [vmem:[%s1 + $0x88] sm:$0xff]
  %v48 = vld [vmem:[%s1 + $0x90] sm:$0xff]
  %v49 = vld [vmem:[%s1 + $0x98] sm:$0xff]
  %v50 = vld [vmem:[%s1 + $0xa0] sm:$0xff]
  %v51 = vld [vmem:[%s1 + $0xa8] sm:$0xff]
  %v52 = vld [vmem:[%s1 + $0xb0] sm:$0xff]
  %v53 = vld [vmem:[%s1 + $0xb8] sm:$0xff]
  %v54 = vld [vmem:[%s1 + $0xc0] sm:$0xff]
  %v55 = vld [vmem:[%s1 + $0xc8] sm:$0xff]
  %v56 = vld [vmem:[%s1 + $0xd0] sm:$0xff]
  %v57 = vld [vmem:[%s1 + $0xd8] sm:$0xff]
  %v58 = vld [vmem:[%s1 + $0xe0] sm:$0xff]
  %v59 = vld [vmem:[%s1 + $0xe8] sm:$0xff]
  %v60 = vld [vmem:[%s1 + $0xf0] sm:$0xff]
  %v61 = vld [vmem:[%s1 + $0xf8] sm:$0xff]
  %v62 = vld [vmem:[%s1 + $0x100] sm:$0xff]
  %v63 = vld [vmem:[%s1 + $0x108] sm:$0xff]
  %v64 = vld [vmem:[%s1 + $0x110] sm:$0xff]
  %v65 = vld [vmem:[%s1 + $0x118] sm:$0xff]
  %v66 = vld [vmem:[%s1 + $0x120] sm:$0xff]
  %v67 = vld [vmem:[%s1 + $0x128] sm:$0xff]
  %v68 = vld [vmem:[%s1 + $0x130] sm:$0xff]
  %v69 = vld [vmem:[%s1 + $0x138] sm:$0xff]
  %v70 = vld [vmem:[%s1 + $0x140] sm:$0xff]
  %v71 = vld [vmem:[%s1 + $0x148] sm:$0xff]
  %v72 = vld [vmem:[%s1 + $0x150] sm:$0xff]
  %v73 = vld [vmem:[%s1 + $0x158] sm:$0xff]
  %v74 = vld [vmem:[%s1 + $0x160] sm:$0xff]
  %v75 = vld [vmem:[%s1 + $0x168] sm:$0xff]
  %v76 = vld [vmem:[%s1 + $0x170] sm:$0xff]
  %v77 = vld [vmem:[%s1 + $0x178] sm:$0xff]
  %v78 = vld [vmem:[%s1 + $0x180] sm:$0xff]
  %v79 = vld [vmem:[%s1 + $0x188] sm:$0xff]
  %v80 = vld [vmem:[%s1 + $0x190] sm:$0xff]
  %v81 = vld [vmem:[%s1 + $0x198] sm:$0xff]
  %v82 = vld [vmem:[%s1 + $0x1a0] sm:$0xff]
  %v83 = vld [vmem:[%s1 + $0x1a8] sm:$0xff]
  %v84 = vld [vmem:[%s1 + $0x1b0] sm:$0xff]
  %v85 = vld [vmem:[%s1 + $0x1b8] sm:$0xff]
  %v86 = vld [vmem:[%s1 + $0x1c0] sm:$0xff]
  %v87 = vld [vmem:[%s1 + $0x1c8] sm:$0xff]
  %v88 = vld [vmem:[%s1 + $0x1d0] sm:$0xff]
  %v89 = vld [vmem:[%s1 + $0x1d8] sm:$0xff]
  %v90 = vld [vmem:[%s1 + $0x1e0] sm:$0xff]
  %v91 = vld [vmem:[%s1 + $0x1e8] sm:$0xff]
  %v92 = vld [vmem:[%s1 + $0x1f0] sm:$0xff]
  %v93 = vld [vmem:[%s1 + $0x1f8] sm:$0xff]
  %v94 = vld [vmem:[%s1 + $0x200] sm:$0xff]
  %v95 = vld [vmem:[%s1 + $0x208] sm:$0xff]
  %v96 = vld [vmem:[%s1 + $0x210] sm:$0xff]
  %v97 = vld [vmem:[%s1 + $0x218] sm:$0xff]
  %v98 = vld [vmem:[%s1 + $0x220] sm:$0xff]
  %v99 = vld [vmem:[%s1 + $0x228] sm:$0xff]
  %v100 = vld [vmem:[%s1 + $0x230] sm:$0xff]
  %v101 = vld [vmem:[%s1 + $0x238] sm:$0xff]
  %v102 = vld [vmem:[%s1 + $0x240] sm:$0xff]
  %v103 = vld [vmem:[%s1 + $0x248] sm:$0xff]
  %v104 = vld [vmem:[%s1 + $0x250] sm:$0xff]
  %v105 = vld [vmem:[%s1 + $0x258] sm:$0xff]
  %v106 = vld [vmem:[%s1 + $0x260] sm:$0xff]
  %v107 = vld [vmem:[%s1 + $0x268] sm:$0xff]
  %v108 = vld [vmem:[%s1 + $0x270] sm:$0xff]
  %v109 = vld [vmem:[%s1 + $0x278] sm:$0xff]
  %v110 = vld [vmem:[%s1 + $0x280] sm:$0xff]
  %v111 = vld [vmem:[%s1 + $0x288] sm:$0xff]
  %v112 = vld [vmem:[%s1 + $0x290] sm:$0xff]
  %v113 = vld [vmem:[%s1 + $0x298] sm:$0xff]
  %v114 = vld [vmem:[%s1 + $0x2a0] sm:$0xff]
  %v115 = vld [vmem:[%s1 + $0x2a8] sm:$0xff]
  %v116 = vld [vmem:[%s1 + $0x2b0] sm:$0xff]
  %v117 = vld [vmem:[%s1 + $0x2b8] sm:$0xff]
  %v118 = vld [vmem:[%s1 + $0x2c0] sm:$0xff]
  %v119 = vld [vmem:[%s1 + $0x2c8] sm:$0xff]
  %v120 = vld [vmem:[%s1 + $0x2d0] sm:$0xff]
  %v121 = vld [vmem:[%s1 + $0x2d8] sm:$0xff]
  %v122 = vld [vmem:[%s1 + $0x2e0] sm:$0xff]
  %v123 = vld [vmem:[%s1 + $0x2e8] sm:$0xff]
  %v124 = vld [vmem:[%s1 + $0x2f0] sm:$0xff]
  %v125 = vld [vmem:[%s1 + $0x2f8] sm:$0xff]
  %v126 = vld [vmem:[%s1 + $0x300] sm:$0xff]
  %v127 = vld [vmem:[%s1 + $0x308] sm:$0xff]
  %v128 = vld [vmem:[%s1 + $0x310] sm:$0xff]
  %v129 = vld [vmem:[%s1 + $0x318] sm:$0xff]
  %v130 = vld [vmem:[%s1 + $0x320] sm:$0xff]
  %v131 = vld [vmem:[%s1 + $0x328] sm:$0xff]
  %v132 = vld [vmem:[%s1 + $0x330] sm:$0xff]
  %v133 = vld [vmem:[%s1 + $0x338] sm:$0xff]
  %v134 = vld [vmem:[%s1 + $0x340] sm:$0xff]
  %v135 = vld [vmem:[%s1 + $0x348] sm:$0xff]
  %v136 = vld [vmem:[%s1 + $0x350] sm:$0xff]
  %v137 = vld [vmem:[%s1 + $0x358] sm:$0xff]
  %v138 = vld [vmem:[%s1 + $0x360] sm:$0xff]
  %v139 = vld [vmem:[%s1 + $0x368] sm:$0xff]
  %v140 = vld [vmem:[%s1 + $0x370] sm:$0xff]
  %v141 = vld [vmem:[%s1 + $0x378] sm:$0xff]
  %v142 = vld [vmem:[%s1 + $0x380] sm:$0xff]
  %v143 = vld [vmem:[%s1 + $0x388] sm:$0xff]
  %v144 = vld [vmem:[%s1 + $0x390] sm:$0xff]
  %v145 = vld [vmem:[%s1 + $0x398] sm:$0xff]
  %v146 = vld [vmem:[%s1 + $0x3a0] sm:$0xff]
  %v147 = vld [vmem:[%s1 + $0x3a8] sm:$0xff]
  %v148 = vld [vmem:[%s1 + $0x3b0] sm:$0xff]
  %v149 = vld [vmem:[%s1 + $0x3b8] sm:$0xff]
  %v150 = vld [vmem:[%s1 + $0x3c0] sm:$0xff]
  %v151 = vld [vmem:[%s1 + $0x3c8] sm:$0xff]
  %v152 = vld [vmem:[%s1 + $0x3d0] sm:$0xff]
  %v153 = vld [vmem:[%s1 + $0x3d8] sm:$0xff]
  %v154 = vld [vmem:[%s1 + $0x3e0] sm:$0xff]
  %v155 = vld [vmem:[%s1 + $0x3e8] sm:$0xff]
  %v156 = vld [vmem:[%s1 + $0x3f0] sm:$0xff]
  %v157 = vld [vmem:[%s1 + $0x3f8] sm:$0xff]
  %v158 = vld [vmem:[%s1 + $0x400] sm:$0xff]
  %v159 = vld [vmem:[%s1 + $0x408] sm:$0xff]
  %v160 = vld [vmem:[%s1 + $0x410] sm:$0xff]
  %v161 = vld [vmem:[%s1 + $0x418] sm:$0xff]
  %v162 = vld [vmem:[%s1 + $0x420] sm:$0xff]
  %v163 = vld [vmem:[%s1 + $0x428] sm:$0xff]
  %v164 = vld [vmem:[%s1 + $0x430] sm:$0xff]
  %v165 = vld [vmem:[%s1 + $0x438] sm:$0xff]
  %v166 = vld [vmem:[%s1 + $0x440] sm:$0xff]
  %v167 = vld [vmem:[%s1 + $0x448] sm:$0xff]
  %v168 = vld [vmem:[%s1 + $0x450] sm:$0xff]
  %v169 = vld [vmem:[%s1 + $0x458] sm:$0xff]
  %v170 = vld [vmem:[%s2] sm:$0xff]
  %v171 = vld [vmem:[%s2 + $0x8] sm:$0xff]
  %v172 = vld [vmem:[%s2 + $0x10] sm:$0xff]
  %v173 = vld [vmem:[%s2 + $0x18] sm:$0xff]
  %v174 = vld [vmem:[%s2 + $0x20] sm:$0xff]
  %v175 = vld [vmem:[%s2 + $0x28] sm:$0xff]
  %v176 = vld [vmem:[%s2 + $0x30] sm:$0xff]
  %v177 = vld [vmem:[%s2 + $0x38] sm:$0xff]
  %179 = vset.pattern.permute.xlu0 0
  %180 = vperm.xlu0 %179, %v170
  %v181 = vpop.permute.xlu0 %180
  %184 = vset.pattern.permute.xlu0 0
  %185 = vperm.xlu0 %184, %v171
  %v186 = vpop.permute.xlu0 %185
  %189 = vset.pattern.permute.xlu0 0
  %190 = vperm.xlu0 %189, %v172
  %v191 = vpop.permute.xlu0 %190
  %194 = vset.pattern.permute.xlu0 0
  %195 = vperm.xlu0 %194, %v173
  %v196 = vpop.permute.xlu0 %195
  %199 = vset.pattern.permute.xlu0 0
  %200 = vperm.xlu0 %199, %v174
  %v201 = vpop.permute.xlu0 %200
  %204 = vset.pattern.permute.xlu0 0
  %205 = vperm.xlu0 %204, %v175
  %v206 = vpop.permute.xlu0 %205
  %209 = vset.pattern.permute.xlu0 0
  %210 = vperm.xlu0 %209, %v176
  %v211 = vpop.permute.xlu0 %210
  %214 = vset.pattern.permute.xlu0 0
  %215 = vperm.xlu0 %214, %v177
  %v216 = vpop.permute.xlu0 %215
  %vm218 = vcmask 261120
  %v220 = vsel %vm218, %v15, 0
  %v223 = vsel %vm218, %v17, 0
  %v226 = vsel %vm218, %v19, 0
  %v229 = vsel %vm218, %v21, 0
  %v232 = vsel %vm218, %v23, 0
  %v235 = vsel %vm218, %v25, 0
  %v238 = vsel %vm218, %v27, 0
  %v241 = vsel %vm218, %v29, 0
  %243 = vmatprep.subr.mxu0 %v136
  %244 = vmatpush1.msra.mxu0 %v135
  %245 = vmatprep.subr.mxu0 %v129
  %246 = vmatpush1.msra.mxu0 %v128
  %247 = vmatprep.subr.mxu0 %v122
  %248 = vmatpush1.msra.mxu0 %v121
  %249 = vmatprep.subr.mxu0 %v115
  %250 = vmatpush1.msra.mxu0 %v114
  %251 = vmatprep.subr.mxu0 %v108
  %252 = vmatpush1.msra.mxu0 %v107
  %253 = vmatprep.subr.mxu0 %v101
  %254 = vmatpush1.msra.mxu0 %v100
  %255 = vmatprep.subr.mxu0 %v94
  %256 = vmatpush1.msra.mxu0 %v93
  %257 = vmatprep.subr.mxu0 %v87
  %258 = vmatpush1.msra.mxu0 %v86
  %259 = vmatprep.subr.mxu0 %v80
  %260 = vmatpush1.msra.mxu0 %v79
  %261 = vmatprep.subr.mxu0 %v73
  %262 = vmatpush1.msra.mxu0 %v72
  %263 = vmatprep.subr.mxu0 %v66
  %264 = vmatpush1.msra.mxu0 %v65
  %265 = vmatprep.subr.mxu0 %v59
  %266 = vmatpush1.msra.mxu0 %v58
  %267 = vmatprep.subr.mxu0 %v52
  %268 = vmatpush1.msra.mxu0 %v51
  %269 = vmatprep.subr.mxu0 %v45
  %270 = vmatpush1.msra.mxu0 %v44
  %271 = vmatprep.subr.mxu0 %v38
  %272 = vmatpush1.msra.mxu0 %v37
  %273 = vmatprep.subr.mxu0 %v31
  %274 = vmatpush1.msra.mxu0 %v30
  %275 = vmatprep.subr.mxu0 0.0
  %276 = vmatpush2.msra.mxu0 0.0
  %277 = vmatprep.subr.mxu0 0.0
  %278 = vmatpush2.msra.mxu0 0.0
  %279 = vmatprep.subr.mxu0 0.0
  %280 = vmatpush2.msra.mxu0 0.0
  %281 = vmatprep.subr.mxu0 0.0
  %282 = vmatpush2.msra.mxu0 0.0
  %283 = vmatprep.subr.mxu0 0.0
  %284 = vmatpush2.msra.mxu0 0.0
  %285 = vmatprep.subr.mxu0 0.0
  %286 = vmatpush2.msra.mxu0 0.0
  %287 = vmatprep.subr.mxu0 0.0
  %288 = vmatpush2.msra.mxu0 0.0
  %289 = vmatprep.subr.mxu0 0.0
  %290 = vmatpush2.msra.mxu0 0.0
  %291 = vmatprep.subr.mxu0 0.0
  %292 = vmatpush2.msra.mxu0 0.0
  %293 = vmatprep.subr.mxu0 0.0
  %294 = vmatpush2.msra.mxu0 0.0
  %295 = vmatprep.subr.mxu0 0.0
  %296 = vmatpush2.msra.mxu0 0.0
  %297 = vmatprep.subr.mxu0 0.0
  %298 = vmatpush2.msra.mxu0 0.0
  %299 = vmatprep.subr.mxu0 %v164
  %300 = vmatpush2.msra.mxu0 %v163
  %301 = vmatprep.subr.mxu0 %v157
  %302 = vmatpush2.msra.mxu0 %v156
  %303 = vmatprep.subr.mxu0 %v150
  %304 = vmatpush2.msra.mxu0 %v149
  %305 = vmatprep.subr.mxu0 %v143
  %306 = vmatpush2.msra.mxu0 %v142
  %307 = vmatprep.mubr.f32.mxu0 %v220
  %308 = vmatmul.mubr.f32.gmra.mxu0 %v14
  %v309 = vpop.f32.mrf.mxu0
  %v310 = vadd.f32 %v181, %v309
  %v311 = vpop.f32.mrf.mxu0
  %v312 = vadd.f32 %v181, %v311
  %313 = vmatprep.mubr.f32.mxu0 %v223
  %314 = vmatmul.mubr.f32.gmra.mxu0 %v16
  %v315 = vpop.f32.mrf.mxu0
  %v316 = vadd.f32 %v186, %v315
  %v317 = vpop.f32.mrf.mxu0
  %v318 = vadd.f32 %v186, %v317
  %319 = vmatprep.mubr.f32.mxu0 %v226
  %320 = vmatmul.mubr.f32.gmra.mxu0 %v18
  %v321 = vpop.f32.mrf.mxu0
  %v322 = vadd.f32 %v191, %v321
  %v323 = vpop.f32.mrf.mxu0
  %v324 = vadd.f32 %v191, %v323
  %325 = vmatprep.mubr.f32.mxu0 %v229
  %326 = vmatmul.mubr.f32.gmra.mxu0 %v20
  %v327 = vpop.f32.mrf.mxu0
  %v328 = vadd.f32 %v196, %v327
  %v329 = vpop.f32.mrf.mxu0
  %v330 = vadd.f32 %v196, %v329
  %331 = vmatprep.mubr.f32.mxu0 %v232
  %332 = vmatmul.mubr.f32.gmra.mxu0 %v22
  %v333 = vpop.f32.mrf.mxu0
  %v334 = vadd.f32 %v201, %v333
  %v335 = vpop.f32.mrf.mxu0
  %v336 = vadd.f32 %v201, %v335
  %337 = vmatprep.mubr.f32.mxu0 %v235
  %338 = vmatmul.mubr.f32.gmra.mxu0 %v24
  %v339 = vpop.f32.mrf.mxu0
  %v340 = vadd.f32 %v206, %v339
  %v341 = vpop.f32.mrf.mxu0
  %v342 = vadd.f32 %v206, %v341
  %343 = vmatprep.mubr.f32.mxu0 %v238
  %344 = vmatmul.mubr.f32.gmra.mxu0 %v26
  %v345 = vpop.f32.mrf.mxu0
  %v346 = vadd.f32 %v211, %v345
  %v347 = vpop.f32.mrf.mxu0
  %v348 = vadd.f32 %v211, %v347
  %349 = vmatprep.mubr.f32.mxu0 %v241
  %350 = vmatmul.mubr.f32.gmra.mxu0 %v28
  %v351 = vpop.f32.mrf.mxu0
  %v352 = vadd.f32 %v216, %v351
  %v353 = vpop.f32.mrf.mxu0
  %v354 = vadd.f32 %v216, %v353
  %355 = vdwg.mxu0
  %356 = vmatprep.subr.mxu0 %v138
  %357 = vmatpush1.msra.mxu0 %v137
  %358 = vmatprep.subr.mxu0 %v131
  %359 = vmatpush1.msra.mxu0 %v130
  %360 = vmatprep.subr.mxu0 %v124
  %361 = vmatpush1.msra.mxu0 %v123
  %362 = vmatprep.subr.mxu0 %v117
  %363 = vmatpush1.msra.mxu0 %v116
  %364 = vmatprep.subr.mxu0 %v110
  %365 = vmatpush1.msra.mxu0 %v109
  %366 = vmatprep.subr.mxu0 %v103
  %367 = vmatpush1.msra.mxu0 %v102
  %368 = vmatprep.subr.mxu0 %v96
  %369 = vmatpush1.msra.mxu0 %v95
  %370 = vmatprep.subr.mxu0 %v89
  %371 = vmatpush1.msra.mxu0 %v88
  %372 = vmatprep.subr.mxu0 %v82
  %373 = vmatpush1.msra.mxu0 %v81
  %374 = vmatprep.subr.mxu0 %v75
  %375 = vmatpush1.msra.mxu0 %v74
  %376 = vmatprep.subr.mxu0 %v68
  %377 = vmatpush1.msra.mxu0 %v67
  %378 = vmatprep.subr.mxu0 %v61
  %379 = vmatpush1.msra.mxu0 %v60
  %380 = vmatprep.subr.mxu0 %v54
  %381 = vmatpush1.msra.mxu0 %v53
  %382 = vmatprep.subr.mxu0 %v47
  %383 = vmatpush1.msra.mxu0 %v46
  %384 = vmatprep.subr.mxu0 %v40
  %385 = vmatpush1.msra.mxu0 %v39
  %386 = vmatprep.subr.mxu0 %v33
  %387 = vmatpush1.msra.mxu0 %v32
  %388 = vmatprep.subr.mxu0 0.0
  %389 = vmatpush2.msra.mxu0 0.0
  %390 = vmatprep.subr.mxu0 0.0
  %391 = vmatpush2.msra.mxu0 0.0
  %392 = vmatprep.subr.mxu0 0.0
  %393 = vmatpush2.msra.mxu0 0.0
  %394 = vmatprep.subr.mxu0 0.0
  %395 = vmatpush2.msra.mxu0 0.0
  %396 = vmatprep.subr.mxu0 0.0
  %397 = vmatpush2.msra.mxu0 0.0
  %398 = vmatprep.subr.mxu0 0.0
  %399 = vmatpush2.msra.mxu0 0.0
  %400 = vmatprep.subr.mxu0 0.0
  %401 = vmatpush2.msra.mxu0 0.0
  %402 = vmatprep.subr.mxu0 0.0
  %403 = vmatpush2.msra.mxu0 0.0
  %404 = vmatprep.subr.mxu0 0.0
  %405 = vmatpush2.msra.mxu0 0.0
  %406 = vmatprep.subr.mxu0 0.0
  %407 = vmatpush2.msra.mxu0 0.0
  %408 = vmatprep.subr.mxu0 0.0
  %409 = vmatpush2.msra.mxu0 0.0
  %410 = vmatprep.subr.mxu0 0.0
  %411 = vmatpush2.msra.mxu0 0.0
  %412 = vmatprep.subr.mxu0 %v166
  %413 = vmatpush2.msra.mxu0 %v165
  %414 = vmatprep.subr.mxu0 %v159
  %415 = vmatpush2.msra.mxu0 %v158
  %416 = vmatprep.subr.mxu0 %v152
  %417 = vmatpush2.msra.mxu0 %v151
  %418 = vmatprep.subr.mxu0 %v145
  %419 = vmatpush2.msra.mxu0 %v144
  %420 = vmatprep.mubr.f32.mxu0 %v220
  %421 = vmatmul.mubr.f32.gmra.mxu0 %v14
  %v422 = vpop.f32.mrf.mxu0
  %v423 = vadd.f32 %v181, %v422
  %v424 = vpop.f32.mrf.mxu0
  %v425 = vadd.f32 %v181, %v424
  %426 = vmatprep.mubr.f32.mxu0 %v223
  %427 = vmatmul.mubr.f32.gmra.mxu0 %v16
  %v428 = vpop.f32.mrf.mxu0
  %v429 = vadd.f32 %v186, %v428
  %v430 = vpop.f32.mrf.mxu0
  %v431 = vadd.f32 %v186, %v430
  %432 = vmatprep.mubr.f32.mxu0 %v226
  %433 = vmatmul.mubr.f32.gmra.mxu0 %v18
  %v434 = vpop.f32.mrf.mxu0
  %v435 = vadd.f32 %v191, %v434
  %v436 = vpop.f32.mrf.mxu0
  %v437 = vadd.f32 %v191, %v436
  %438 = vmatprep.mubr.f32.mxu0 %v229
  %439 = vmatmul.mubr.f32.gmra.mxu0 %v20
  %v440 = vpop.f32.mrf.mxu0
  %v441 = vadd.f32 %v196, %v440
  %v442 = vpop.f32.mrf.mxu0
  %v443 = vadd.f32 %v196, %v442
  %444 = vmatprep.mubr.f32.mxu0 %v232
  %445 = vmatmul.mubr.f32.gmra.mxu0 %v22
  %v446 = vpop.f32.mrf.mxu0
  %v447 = vadd.f32 %v201, %v446
  %v448 = vpop.f32.mrf.mxu0
  %v449 = vadd.f32 %v201, %v448
  %450 = vmatprep.mubr.f32.mxu0 %v235
  %451 = vmatmul.mubr.f32.gmra.mxu0 %v24
  %v452 = vpop.f32.mrf.mxu0
  %v453 = vadd.f32 %v206, %v452
  %v454 = vpop.f32.mrf.mxu0
  %v455 = vadd.f32 %v206, %v454
  %456 = vmatprep.mubr.f32.mxu0 %v238
  %457 = vmatmul.mubr.f32.gmra.mxu0 %v26
  %v458 = vpop.f32.mrf.mxu0
  %v459 = vadd.f32 %v211, %v458
  %v460 = vpop.f32.mrf.mxu0
  %v461 = vadd.f32 %v211, %v460
  %462 = vmatprep.mubr.f32.mxu0 %v241
  %463 = vmatmul.mubr.f32.gmra.mxu0 %v28
  %v464 = vpop.f32.mrf.mxu0
  %v465 = vadd.f32 %v216, %v464
  %v466 = vpop.f32.mrf.mxu0
  %v467 = vadd.f32 %v216, %v466
  %468 = vdwg.mxu0
  %469 = vmatprep.subr.mxu0 %v140
  %470 = vmatpush1.msra.mxu0 %v139
  %471 = vmatprep.subr.mxu0 %v133
  %472 = vmatpush1.msra.mxu0 %v132
  %473 = vmatprep.subr.mxu0 %v126
  %474 = vmatpush1.msra.mxu0 %v125
  %475 = vmatprep.subr.mxu0 %v119
  %476 = vmatpush1.msra.mxu0 %v118
  %477 = vmatprep.subr.mxu0 %v112
  %478 = vmatpush1.msra.mxu0 %v111
  %479 = vmatprep.subr.mxu0 %v105
  %480 = vmatpush1.msra.mxu0 %v104
  %481 = vmatprep.subr.mxu0 %v98
  %482 = vmatpush1.msra.mxu0 %v97
  %483 = vmatprep.subr.mxu0 %v91
  %484 = vmatpush1.msra.mxu0 %v90
  %485 = vmatprep.subr.mxu0 %v84
  %486 = vmatpush1.msra.mxu0 %v83
  %487 = vmatprep.subr.mxu0 %v77
  %488 = vmatpush1.msra.mxu0 %v76
  %489 = vmatprep.subr.mxu0 %v70
  %490 = vmatpush1.msra.mxu0 %v69
  %491 = vmatprep.subr.mxu0 %v63
  %492 = vmatpush1.msra.mxu0 %v62
  %493 = vmatprep.subr.mxu0 %v56
  %494 = vmatpush1.msra.mxu0 %v55
  %495 = vmatprep.subr.mxu0 %v49
  %496 = vmatpush1.msra.mxu0 %v48
  %497 = vmatprep.subr.mxu0 %v42
  %498 = vmatpush1.msra.mxu0 %v41
  %499 = vmatprep.subr.mxu0 %v35
  %500 = vmatpush1.msra.mxu0 %v34
  %501 = vmatprep.subr.mxu0 0.0
  %502 = vmatpush2.msra.mxu0 0.0
  %503 = vmatprep.subr.mxu0 0.0
  %504 = vmatpush2.msra.mxu0 0.0
  %505 = vmatprep.subr.mxu0 0.0
  %506 = vmatpush2.msra.mxu0 0.0
  %507 = vmatprep.subr.mxu0 0.0
  %508 = vmatpush2.msra.mxu0 0.0
  %509 = vmatprep.subr.mxu0 0.0
  %510 = vmatpush2.msra.mxu0 0.0
  %511 = vmatprep.subr.mxu0 0.0
  %512 = vmatpush2.msra.mxu0 0.0
  %513 = vmatprep.subr.mxu0 0.0
  %514 = vmatpush2.msra.mxu0 0.0
  %515 = vmatprep.subr.mxu0 0.0
  %516 = vmatpush2.msra.mxu0 0.0
  %517 = vmatprep.subr.mxu0 0.0
  %518 = vmatpush2.msra.mxu0 0.0
  %519 = vmatprep.subr.mxu0 0.0
  %520 = vmatpush2.msra.mxu0 0.0
  %521 = vmatprep.subr.mxu0 0.0
  %522 = vmatpush2.msra.mxu0 0.0
  %523 = vmatprep.subr.mxu0 0.0
  %524 = vmatpush2.msra.mxu0 0.0
  %525 = vmatprep.subr.mxu0 %v168
  %526 = vmatpush2.msra.mxu0 %v167
  %527 = vmatprep.subr.mxu0 %v161
  %528 = vmatpush2.msra.mxu0 %v160
  %529 = vmatprep.subr.mxu0 %v154
  %530 = vmatpush2.msra.mxu0 %v153
  %531 = vmatprep.subr.mxu0 %v147
  %532 = vmatpush2.msra.mxu0 %v146
  %533 = vmatprep.mubr.f32.mxu0 %v220
  %534 = vmatmul.mubr.f32.gmra.mxu0 %v14
  %v535 = vpop.f32.mrf.mxu0
  %v536 = vadd.f32 %v181, %v535
  %v537 = vpop.f32.mrf.mxu0
  %v538 = vadd.f32 %v181, %v537
  %539 = vmatprep.mubr.f32.mxu0 %v223
  %540 = vmatmul.mubr.f32.gmra.mxu0 %v16
  %v541 = vpop.f32.mrf.mxu0
  %v542 = vadd.f32 %v186, %v541
  %v543 = vpop.f32.mrf.mxu0
  %v544 = vadd.f32 %v186, %v543
  %545 = vmatprep.mubr.f32.mxu0 %v226
  %546 = vmatmul.mubr.f32.gmra.mxu0 %v18
  %v547 = vpop.f32.mrf.mxu0
  %v548 = vadd.f32 %v191, %v547
  %v549 = vpop.f32.mrf.mxu0
  %v550 = vadd.f32 %v191, %v549
  %551 = vmatprep.mubr.f32.mxu0 %v229
  %552 = vmatmul.mubr.f32.gmra.mxu0 %v20
  %v553 = vpop.f32.mrf.mxu0
  %v554 = vadd.f32 %v196, %v553
  %v555 = vpop.f32.mrf.mxu0
  %v556 = vadd.f32 %v196, %v555
  %557 = vmatprep.mubr.f32.mxu0 %v232
  %558 = vmatmul.mubr.f32.gmra.mxu0 %v22
  %v559 = vpop.f32.mrf.mxu0
  %v560 = vadd.f32 %v201, %v559
  %v561 = vpop.f32.mrf.mxu0
  %v562 = vadd.f32 %v201, %v561
  %563 = vmatprep.mubr.f32.mxu0 %v235
  %564 = vmatmul.mubr.f32.gmra.mxu0 %v24
  %v565 = vpop.f32.mrf.mxu0
  %v566 = vadd.f32 %v206, %v565
  %v567 = vpop.f32.mrf.mxu0
  %v568 = vadd.f32 %v206, %v567
  %569 = vmatprep.mubr.f32.mxu0 %v238
  %570 = vmatmul.mubr.f32.gmra.mxu0 %v26
  %v571 = vpop.f32.mrf.mxu0
  %v572 = vadd.f32 %v211, %v571
  %v573 = vpop.f32.mrf.mxu0
  %v574 = vadd.f32 %v211, %v573
  %575 = vmatprep.mubr.f32.mxu0 %v241
  %576 = vmatmul.mubr.f32.gmra.mxu0 %v28
  %v577 = vpop.f32.mrf.mxu0
  %v578 = vadd.f32 %v216, %v577
  %v579 = vpop.f32.mrf.mxu0
  %v580 = vadd.f32 %v216, %v579
  %581 = vdwg.mxu0
  %582 = vmatprep.subr.mxu0 0.0
  %583 = vmatpush1.msra.mxu0 %v141
  %584 = vmatprep.subr.mxu0 0.0
  %585 = vmatpush1.msra.mxu0 %v134
  %586 = vmatprep.subr.mxu0 0.0
  %587 = vmatpush1.msra.mxu0 %v127
  %588 = vmatprep.subr.mxu0 0.0
  %589 = vmatpush1.msra.mxu0 %v120
  %590 = vmatprep.subr.mxu0 0.0
  %591 = vmatpush1.msra.mxu0 %v113
  %592 = vmatprep.subr.mxu0 0.0
  %593 = vmatpush1.msra.mxu0 %v106
  %594 = vmatprep.subr.mxu0 0.0
  %595 = vmatpush1.msra.mxu0 %v99
  %596 = vmatprep.subr.mxu0 0.0
  %597 = vmatpush1.msra.mxu0 %v92
  %598 = vmatprep.subr.mxu0 0.0
  %599 = vmatpush1.msra.mxu0 %v85
  %600 = vmatprep.subr.mxu0 0.0
  %601 = vmatpush1.msra.mxu0 %v78
  %602 = vmatprep.subr.mxu0 0.0
  %603 = vmatpush1.msra.mxu0 %v71
  %604 = vmatprep.subr.mxu0 0.0
  %605 = vmatpush1.msra.mxu0 %v64
  %606 = vmatprep.subr.mxu0 0.0
  %607 = vmatpush1.msra.mxu0 %v57
  %608 = vmatprep.subr.mxu0 0.0
  %609 = vmatpush1.msra.mxu0 %v50
  %610 = vmatprep.subr.mxu0 0.0
  %611 = vmatpush1.msra.mxu0 %v43
  %612 = vmatprep.subr.mxu0 0.0
  %613 = vmatpush1.msra.mxu0 %v36
  %614 = vmatprep.subr.mxu0 0.0
  %615 = vmatpush2.msra.mxu0 0.0
  %616 = vmatprep.subr.mxu0 0.0
  %617 = vmatpush2.msra.mxu0 0.0
  %618 = vmatprep.subr.mxu0 0.0
  %619 = vmatpush2.msra.mxu0 0.0
  %620 = vmatprep.subr.mxu0 0.0
  %621 = vmatpush2.msra.mxu0 0.0
  %622 = vmatprep.subr.mxu0 0.0
  %623 = vmatpush2.msra.mxu0 0.0
  %624 = vmatprep.subr.mxu0 0.0
  %625 = vmatpush2.msra.mxu0 0.0
  %626 = vmatprep.subr.mxu0 0.0
  %627 = vmatpush2.msra.mxu0 0.0
  %628 = vmatprep.subr.mxu0 0.0
  %629 = vmatpush2.msra.mxu0 0.0
  %630 = vmatprep.subr.mxu0 0.0
  %631 = vmatpush2.msra.mxu0 0.0
  %632 = vmatprep.subr.mxu0 0.0
  %633 = vmatpush2.msra.mxu0 0.0
  %634 = vmatprep.subr.mxu0 0.0
  %635 = vmatpush2.msra.mxu0 0.0
  %636 = vmatprep.subr.mxu0 0.0
  %637 = vmatpush2.msra.mxu0 0.0
  %638 = vmatprep.subr.mxu0 0.0
  %639 = vmatpush2.msra.mxu0 %v169
  %640 = vmatprep.subr.mxu0 0.0
  %641 = vmatpush2.msra.mxu0 %v162
  %642 = vmatprep.subr.mxu0 0.0
  %643 = vmatpush2.msra.mxu0 %v155
  %644 = vmatprep.subr.mxu0 0.0
  %645 = vmatpush2.msra.mxu0 %v148
  %646 = vmatprep.mubr.f32.mxu0 %v220
  %647 = vmatmul.mubr.f32.gmra.mxu0 %v14
  %v648 = vpop.f32.mrf.mxu0
  %v649 = vadd.f32 %v181, %v648
  %v650 = vpop.f32.mrf.mxu0
  %651 = vmatprep.mubr.f32.mxu0 %v223
  %652 = vmatmul.mubr.f32.gmra.mxu0 %v16
  %v653 = vpop.f32.mrf.mxu0
  %v654 = vadd.f32 %v186, %v653
  %v655 = vpop.f32.mrf.mxu0
  %656 = vmatprep.mubr.f32.mxu0 %v226
  %657 = vmatmul.mubr.f32.gmra.mxu0 %v18
  %v658 = vpop.f32.mrf.mxu0
  %v659 = vadd.f32 %v191, %v658
  %v660 = vpop.f32.mrf.mxu0
  %661 = vmatprep.mubr.f32.mxu0 %v229
  %662 = vmatmul.mubr.f32.gmra.mxu0 %v20
  %v663 = vpop.f32.mrf.mxu0
  %v664 = vadd.f32 %v196, %v663
  %v665 = vpop.f32.mrf.mxu0
  %666 = vmatprep.mubr.f32.mxu0 %v232
  %667 = vmatmul.mubr.f32.gmra.mxu0 %v22
  %v668 = vpop.f32.mrf.mxu0
  %v669 = vadd.f32 %v201, %v668
  %v670 = vpop.f32.mrf.mxu0
  %671 = vmatprep.mubr.f32.mxu0 %v235
  %672 = vmatmul.mubr.f32.gmra.mxu0 %v24
  %v673 = vpop.f32.mrf.mxu0
  %v674 = vadd.f32 %v206, %v673
  %v675 = vpop.f32.mrf.mxu0
  %676 = vmatprep.mubr.f32.mxu0 %v238
  %677 = vmatmul.mubr.f32.gmra.mxu0 %v26
  %v678 = vpop.f32.mrf.mxu0
  %v679 = vadd.f32 %v211, %v678
  %v680 = vpop.f32.mrf.mxu0
  %681 = vmatprep.mubr.f32.mxu0 %v241
  %682 = vmatmul.mubr.f32.gmra.mxu0 %v28
  %v683 = vpop.f32.mrf.mxu0
  %v684 = vadd.f32 %v216, %v683
  %v685 = vpop.f32.mrf.mxu0
  %686 = vdwg.mxu0
  %v687 = vmax.f32 %v310, 0.0
  %v688 = vmax.f32 %v312, 0.0
  %v689 = vmax.f32 %v423, 0.0
  %v690 = vmax.f32 %v425, 0.0
  %v691 = vmax.f32 %v536, 0.0
  %v692 = vmax.f32 %v538, 0.0
  %v693 = vmax.f32 %v649, 0.0
  %v694 = vmax.f32 %v316, 0.0
  %v695 = vmax.f32 %v318, 0.0
  %v696 = vmax.f32 %v429, 0.0
  %v697 = vmax.f32 %v431, 0.0
  %v698 = vmax.f32 %v542, 0.0
  %v699 = vmax.f32 %v544, 0.0
  %v700 = vmax.f32 %v654, 0.0
  %v701 = vmax.f32 %v322, 0.0
  %v702 = vmax.f32 %v324, 0.0
  %v703 = vmax.f32 %v435, 0.0
  %v704 = vmax.f32 %v437, 0.0
  %v705 = vmax.f32 %v548, 0.0
  %v706 = vmax.f32 %v550, 0.0
  %v707 = vmax.f32 %v659, 0.0
  %v708 = vmax.f32 %v328, 0.0
  %v709 = vmax.f32 %v330, 0.0
  %v710 = vmax.f32 %v441, 0.0
  %v711 = vmax.f32 %v443, 0.0
  %v712 = vmax.f32 %v554, 0.0
  %v713 = vmax.f32 %v556, 0.0
  %v714 = vmax.f32 %v664, 0.0
  %v715 = vmax.f32 %v334, 0.0
  %v716 = vmax.f32 %v336, 0.0
  %v717 = vmax.f32 %v447, 0.0
  %v718 = vmax.f32 %v449, 0.0
  %v719 = vmax.f32 %v560, 0.0
  %v720 = vmax.f32 %v562, 0.0
  %v721 = vmax.f32 %v669, 0.0
  %v722 = vmax.f32 %v340, 0.0
  %v723 = vmax.f32 %v342, 0.0
  %v724 = vmax.f32 %v453, 0.0
  %v725 = vmax.f32 %v455, 0.0
  %v726 = vmax.f32 %v566, 0.0
  %v727 = vmax.f32 %v568, 0.0
  %v728 = vmax.f32 %v674, 0.0
  %v729 = vmax.f32 %v346, 0.0
  %v730 = vmax.f32 %v348, 0.0
  %v731 = vmax.f32 %v459, 0.0
  %v732 = vmax.f32 %v461, 0.0
  %v733 = vmax.f32 %v572, 0.0
  %v734 = vmax.f32 %v574, 0.0
  %v735 = vmax.f32 %v679, 0.0
  %v736 = vmax.f32 %v352, 0.0
  %v737 = vmax.f32 %v354, 0.0
  %v738 = vmax.f32 %v465, 0.0
  %v739 = vmax.f32 %v467, 0.0
  %v740 = vmax.f32 %v578, 0.0
  %v741 = vmax.f32 %v580, 0.0
  %v742 = vmax.f32 %v684, 0.0
  %743 = vst [vmem:[%s3] sm:$0xff] %v687
  %744 = vst [vmem:[%s3 + $0x8] sm:$0xff] %v688
  %745 = vst [vmem:[%s3 + $0x10] sm:$0xff] %v689
  %746 = vst [vmem:[%s3 + $0x18] sm:$0xff] %v690
  %747 = vst [vmem:[%s3 + $0x20] sm:$0xff] %v691
  %748 = vst [vmem:[%s3 + $0x28] sm:$0xff] %v692
  %749 = vst [vmem:[%s3 + $0x30] sm:$0xff] %v693
  %750 = vst [vmem:[%s3 + $0x38] sm:$0xff] %v694
  %751 = vst [vmem:[%s3 + $0x40] sm:$0xff] %v695
  %752 = vst [vmem:[%s3 + $0x48] sm:$0xff] %v696
  %753 = vst [vmem:[%s3 + $0x50] sm:$0xff] %v697
  %754 = vst [vmem:[%s3 + $0x58] sm:$0xff] %v698
  %755 = vst [vmem:[%s3 + $0x60] sm:$0xff] %v699
  %756 = vst [vmem:[%s3 + $0x68] sm:$0xff] %v700
  %757 = vst [vmem:[%s3 + $0x70] sm:$0xff] %v701
  %758 = vst [vmem:[%s3 + $0x78] sm:$0xff] %v702
  %759 = vst [vmem:[%s3 + $0x80] sm:$0xff] %v703
  %760 = vst [vmem:[%s3 + $0x88] sm:$0xff] %v704
  %761 = vst [vmem:[%s3 + $0x90] sm:$0xff] %v705
  %762 = vst [vmem:[%s3 + $0x98] sm:$0xff] %v706
  %763 = vst [vmem:[%s3 + $0xa0] sm:$0xff] %v707
  %764 = vst [vmem:[%s3 + $0xa8] sm:$0xff] %v708
  %765 = vst [vmem:[%s3 + $0xb0] sm:$0xff] %v709
  %766 = vst [vmem:[%s3 + $0xb8] sm:$0xff] %v710
  %767 = vst [vmem:[%s3 + $0xc0] sm:$0xff] %v711
  %768 = vst [vmem:[%s3 + $0xc8] sm:$0xff] %v712
  %769 = vst [vmem:[%s3 + $0xd0] sm:$0xff] %v713
  %770 = vst [vmem:[%s3 + $0xd8] sm:$0xff] %v714
  %771 = vst [vmem:[%s3 + $0xe0] sm:$0xff] %v715
  %772 = vst [vmem:[%s3 + $0xe8] sm:$0xff] %v716
  %773 = vst [vmem:[%s3 + $0xf0] sm:$0xff] %v717
  %774 = vst [vmem:[%s3 + $0xf8] sm:$0xff] %v718
  %775 = vst [vmem:[%s3 + $0x100] sm:$0xff] %v719
  %776 = vst [vmem:[%s3 + $0x108] sm:$0xff] %v720
  %777 = vst [vmem:[%s3 + $0x110] sm:$0xff] %v721
  %778 = vst [vmem:[%s3 + $0x118] sm:$0xff] %v722
  %779 = vst [vmem:[%s3 + $0x120] sm:$0xff] %v723
  %780 = vst [vmem:[%s3 + $0x128] sm:$0xff] %v724
  %781 = vst [vmem:[%s3 + $0x130] sm:$0xff] %v725
  %782 = vst [vmem:[%s3 + $0x138] sm:$0xff] %v726
  %783 = vst [vmem:[%s3 + $0x140] sm:$0xff] %v727
  %784 = vst [vmem:[%s3 + $0x148] sm:$0xff] %v728
  %785 = vst [vmem:[%s3 + $0x150] sm:$0xff] %v729
  %786 = vst [vmem:[%s3 + $0x158] sm:$0xff] %v730
  %787 = vst [vmem:[%s3 + $0x160] sm:$0xff] %v731
  %788 = vst [vmem:[%s3 + $0x168] sm:$0xff] %v732
  %789 = vst [vmem:[%s3 + $0x170] sm:$0xff] %v733
  %790 = vst [vmem:[%s3 + $0x178] sm:$0xff] %v734
  %791 = vst [vmem:[%s3 + $0x180] sm:$0xff] %v735
  %792 = vst [vmem:[%s3 + $0x188] sm:$0xff] %v736
  %793 = vst [vmem:[%s3 + $0x190] sm:$0xff] %v737
  %794 = vst [vmem:[%s3 + $0x198] sm:$0xff] %v738
  %795 = vst [vmem:[%s3 + $0x1a0] sm:$0xff] %v739
  %796 = vst [vmem:[%s3 + $0x1a8] sm:$0xff] %v740
  %797 = vst [vmem:[%s3 + $0x1b0] sm:$0xff] %v741
  %798 = vst [vmem:[%s3 + $0x1b8] sm:$0xff] %v742
  // Predicated region
  $region14: #{convolutional_net_forward.9} parent=0 // pred_check
    _
  $region15: #{convolutional_net_forward.9} parent=0 // pred_check_branch
    %800 = sbr.rel (0) target = $region17
  $region16: #{convolutional_net_forward.9} parent=0 // pred_region
    _
  $region17: #{convolutional_net_forward.9} parent=0 // pred_fallthru
    _
  // Predicated region
  $region18: #{convolutional_net_forward.9} parent=0 // pred_check
    _
  $region19: #{convolutional_net_forward.9} parent=0 // pred_check_branch
    %802 = sbr.rel (0) target = $region21
  $region20: #{convolutional_net_forward.9} parent=0 // pred_region
    _
  $region21: #{convolutional_net_forward.9} parent=0 // pred_fallthru
    _

// kernel: convolutional_net_forward.10
$region0: #{convolutional_net_forward.10}
  #allocation0 [shape = 'u32[]', space=smem, size = 0x4, offset = 0x4, fixed_abs, tag = 'smem constant byte address 0x4 - core index']
  #allocation1 [shape = 'u32[144,128]{1,0:T(1,128)}', space=vmem, size = 0x12000, scoped, tag = 'internal scratch']
  %s0 = inlined_call_operand.vmem [shape: f32[64,320], index: 0, kind: input, shape index: {}]
  %s1 = inlined_call_operand.vmem [shape: f32[320,256], index: 1, kind: input, shape index: {}]
  %s2 = inlined_call_operand.vmem [shape: f32[64,1], index: 2, kind: input, shape index: {}]
  %s3 = inlined_call_operand.vmem [shape: f32[64,256], index: 3, kind: output, shape index: {}]
  %s4 = sld [smem:[#allocation0]]
  $region22: #{convolutional_net_forward.10} parent=0
    _
  %s6 = ssub.s32 1, %s4
  %s7 = scalar_select 0, %s6, %s4
  // Predicated region
  $region2: #{convolutional_net_forward.10} parent=0 // pred_check
    _
  $region3: #{convolutional_net_forward.10} parent=0 // pred_check_branch
    %9 = sbr.rel (0) target = $region5
  $region4: #{convolutional_net_forward.10} parent=0 // pred_region
    _
  $region5: #{convolutional_net_forward.10} parent=0 // pred_fallthru
    _
  // Predicated region
  $region6: #{convolutional_net_forward.10} parent=0 // pred_check
    _
  $region7: #{convolutional_net_forward.10} parent=0 // pred_check_branch
    %11 = sbr.rel (0) target = $region9
  $region8: #{convolutional_net_forward.10} parent=0 // pred_region
    _
  $region9: #{convolutional_net_forward.10} parent=0 // pred_fallthru
    _
  // Predicated region
  $region10: #{convolutional_net_forward.10} parent=0 // pred_check
    _
  $region11: #{convolutional_net_forward.10} parent=0 // pred_check_branch
    %13 = sbr.rel (0) target = $region13
  $region12: #{convolutional_net_forward.10} parent=0 // pred_region
    _
  $region13: #{convolutional_net_forward.10} parent=0 // pred_fallthru
    _
  %v14 = vld [vmem:[%s0] sm:$0xff]
  %v15 = vld [vmem:[%s0 + $0x8] sm:$0xff]
  %v16 = vld [vmem:[%s0 + $0x10] sm:$0xff]
  %v17 = vld [vmem:[%s0 + $0x18] sm:$0xff]
  %v18 = vld [vmem:[%s0 + $0x20] sm:$0xff]
  %v19 = vld [vmem:[%s0 + $0x28] sm:$0xff]
  %v20 = vld [vmem:[%s0 + $0x30] sm:$0xff]
  %v21 = vld [vmem:[%s0 + $0x38] sm:$0xff]
  %v22 = vld [vmem:[%s0 + $0x40] sm:$0xff]
  %v23 = vld [vmem:[%s0 + $0x48] sm:$0xff]
  %v24 = vld [vmem:[%s0 + $0x50] sm:$0xff]
  %v25 = vld [vmem:[%s0 + $0x58] sm:$0xff]
  %v26 = vld [vmem:[%s0 + $0x60] sm:$0xff]
  %v27 = vld [vmem:[%s0 + $0x68] sm:$0xff]
  %v28 = vld [vmem:[%s0 + $0x70] sm:$0xff]
  %v29 = vld [vmem:[%s0 + $0x78] sm:$0xff]
  %v30 = vld [vmem:[%s0 + $0x80] sm:$0xff]
  %v31 = vld [vmem:[%s0 + $0x88] sm:$0xff]
  %v32 = vld [vmem:[%s0 + $0x90] sm:$0xff]
  %v33 = vld [vmem:[%s0 + $0x98] sm:$0xff]
  %v34 = vld [vmem:[%s0 + $0xa0] sm:$0xff]
  %v35 = vld [vmem:[%s0 + $0xa8] sm:$0xff]
  %v36 = vld [vmem:[%s0 + $0xb0] sm:$0xff]
  %v37 = vld [vmem:[%s0 + $0xb8] sm:$0xff]
  %v38 = vld [vmem:[%s1] sm:$0xff]
  %v39 = vld [vmem:[%s1 + $0x8] sm:$0xff]
  %v40 = vld [vmem:[%s1 + $0x10] sm:$0xff]
  %v41 = vld [vmem:[%s1 + $0x18] sm:$0xff]
  %v42 = vld [vmem:[%s1 + $0x20] sm:$0xff]
  %v43 = vld [vmem:[%s1 + $0x28] sm:$0xff]
  %v44 = vld [vmem:[%s1 + $0x30] sm:$0xff]
  %v45 = vld [vmem:[%s1 + $0x38] sm:$0xff]
  %v46 = vld [vmem:[%s1 + $0x40] sm:$0xff]
  %v47 = vld [vmem:[%s1 + $0x48] sm:$0xff]
  %v48 = vld [vmem:[%s1 + $0x50] sm:$0xff]
  %v49 = vld [vmem:[%s1 + $0x58] sm:$0xff]
  %v50 = vld [vmem:[%s1 + $0x60] sm:$0xff]
  %v51 = vld [vmem:[%s1 + $0x68] sm:$0xff]
  %v52 = vld [vmem:[%s1 + $0x70] sm:$0xff]
  %v53 = vld [vmem:[%s1 + $0x78] sm:$0xff]
  %v54 = vld [vmem:[%s1 + $0x80] sm:$0xff]
  %v55 = vld [vmem:[%s1 + $0x88] sm:$0xff]
  %v56 = vld [vmem:[%s1 + $0x90] sm:$0xff]
  %v57 = vld [vmem:[%s1 + $0x98] sm:$0xff]
  %v58 = vld [vmem:[%s1 + $0xa0] sm:$0xff]
  %v59 = vld [vmem:[%s1 + $0xa8] sm:$0xff]
  %v60 = vld [vmem:[%s1 + $0xb0] sm:$0xff]
  %v61 = vld [vmem:[%s1 + $0xb8] sm:$0xff]
  %v62 = vld [vmem:[%s1 + $0xc0] sm:$0xff]
  %v63 = vld [vmem:[%s1 + $0xc8] sm:$0xff]
  %v64 = vld [vmem:[%s1 + $0xd0] sm:$0xff]
  %v65 = vld [vmem:[%s1 + $0xd8] sm:$0xff]
  %v66 = vld [vmem:[%s1 + $0xe0] sm:$0xff]
  %v67 = vld [vmem:[%s1 + $0xe8] sm:$0xff]
  %v68 = vld [vmem:[%s1 + $0xf0] sm:$0xff]
  %v69 = vld [vmem:[%s1 + $0xf8] sm:$0xff]
  %v70 = vld [vmem:[%s1 + $0x100] sm:$0xff]
  %v71 = vld [vmem:[%s1 + $0x108] sm:$0xff]
  %v72 = vld [vmem:[%s1 + $0x110] sm:$0xff]
  %v73 = vld [vmem:[%s1 + $0x118] sm:$0xff]
  %v74 = vld [vmem:[%s1 + $0x120] sm:$0xff]
  %v75 = vld [vmem:[%s1 + $0x128] sm:$0xff]
  %v76 = vld [vmem:[%s1 + $0x130] sm:$0xff]
  %v77 = vld [vmem:[%s1 + $0x138] sm:$0xff]
  %v78 = vld [vmem:[%s1 + $0x140] sm:$0xff]
  %v79 = vld [vmem:[%s1 + $0x148] sm:$0xff]
  %v80 = vld [vmem:[%s1 + $0x150] sm:$0xff]
  %v81 = vld [vmem:[%s1 + $0x158] sm:$0xff]
  %v82 = vld [vmem:[%s1 + $0x160] sm:$0xff]
  %v83 = vld [vmem:[%s1 + $0x168] sm:$0xff]
  %v84 = vld [vmem:[%s1 + $0x170] sm:$0xff]
  %v85 = vld [vmem:[%s1 + $0x178] sm:$0xff]
  %v86 = vld [vmem:[%s1 + $0x180] sm:$0xff]
  %v87 = vld [vmem:[%s1 + $0x188] sm:$0xff]
  %v88 = vld [vmem:[%s1 + $0x190] sm:$0xff]
  %v89 = vld [vmem:[%s1 + $0x198] sm:$0xff]
  %v90 = vld [vmem:[%s1 + $0x1a0] sm:$0xff]
  %v91 = vld [vmem:[%s1 + $0x1a8] sm:$0xff]
  %v92 = vld [vmem:[%s1 + $0x1b0] sm:$0xff]
  %v93 = vld [vmem:[%s1 + $0x1b8] sm:$0xff]
  %v94 = vld [vmem:[%s1 + $0x1c0] sm:$0xff]
  %v95 = vld [vmem:[%s1 + $0x1c8] sm:$0xff]
  %v96 = vld [vmem:[%s1 + $0x1d0] sm:$0xff]
  %v97 = vld [vmem:[%s1 + $0x1d8] sm:$0xff]
  %v98 = vld [vmem:[%s1 + $0x1e0] sm:$0xff]
  %v99 = vld [vmem:[%s1 + $0x1e8] sm:$0xff]
  %v100 = vld [vmem:[%s1 + $0x1f0] sm:$0xff]
  %v101 = vld [vmem:[%s1 + $0x1f8] sm:$0xff]
  %v102 = vld [vmem:[%s1 + $0x200] sm:$0xff]
  %v103 = vld [vmem:[%s1 + $0x208] sm:$0xff]
  %v104 = vld [vmem:[%s1 + $0x210] sm:$0xff]
  %v105 = vld [vmem:[%s1 + $0x218] sm:$0xff]
  %v106 = vld [vmem:[%s1 + $0x220] sm:$0xff]
  %v107 = vld [vmem:[%s1 + $0x228] sm:$0xff]
  %v108 = vld [vmem:[%s1 + $0x230] sm:$0xff]
  %v109 = vld [vmem:[%s1 + $0x238] sm:$0xff]
  %v110 = vld [vmem:[%s1 + $0x240] sm:$0xff]
  %v111 = vld [vmem:[%s1 + $0x248] sm:$0xff]
  %v112 = vld [vmem:[%s1 + $0x250] sm:$0xff]
  %v113 = vld [vmem:[%s1 + $0x258] sm:$0xff]
  %v114 = vld [vmem:[%s1 + $0x260] sm:$0xff]
  %v115 = vld [vmem:[%s1 + $0x268] sm:$0xff]
  %v116 = vld [vmem:[%s1 + $0x270] sm:$0xff]
  %v117 = vld [vmem:[%s1 + $0x278] sm:$0xff]
  %v118 = vld [vmem:[%s2] sm:$0xff]
  %v119 = vld [vmem:[%s2 + $0x8] sm:$0xff]
  %v120 = vld [vmem:[%s2 + $0x10] sm:$0xff]
  %v121 = vld [vmem:[%s2 + $0x18] sm:$0xff]
  %v122 = vld [vmem:[%s2 + $0x20] sm:$0xff]
  %v123 = vld [vmem:[%s2 + $0x28] sm:$0xff]
  %v124 = vld [vmem:[%s2 + $0x30] sm:$0xff]
  %v125 = vld [vmem:[%s2 + $0x38] sm:$0xff]
  %127 = vset.pattern.permute.xlu0 0
  %128 = vperm.xlu0 %127, %v118
  %v129 = vpop.permute.xlu0 %128
  %132 = vset.pattern.permute.xlu0 0
  %133 = vperm.xlu0 %132, %v119
  %v134 = vpop.permute.xlu0 %133
  %137 = vset.pattern.permute.xlu0 0
  %138 = vperm.xlu0 %137, %v120
  %v139 = vpop.permute.xlu0 %138
  %142 = vset.pattern.permute.xlu0 0
  %143 = vperm.xlu0 %142, %v121
  %v144 = vpop.permute.xlu0 %143
  %147 = vset.pattern.permute.xlu0 0
  %148 = vperm.xlu0 %147, %v122
  %v149 = vpop.permute.xlu0 %148
  %152 = vset.pattern.permute.xlu0 0
  %153 = vperm.xlu0 %152, %v123
  %v154 = vpop.permute.xlu0 %153
  %157 = vset.pattern.permute.xlu0 0
  %158 = vperm.xlu0 %157, %v124
  %v159 = vpop.permute.xlu0 %158
  %162 = vset.pattern.permute.xlu0 0
  %163 = vperm.xlu0 %162, %v125
  %v164 = vpop.permute.xlu0 %163
  %vm166 = vcmask 523264
  %v168 = vsel %vm166, %v16, 0
  %v171 = vsel %vm166, %v19, 0
  %v174 = vsel %vm166, %v22, 0
  %v177 = vsel %vm166, %v25, 0
  %v180 = vsel %vm166, %v28, 0
  %v183 = vsel %vm166, %v31, 0
  %v186 = vsel %vm166, %v34, 0
  %v189 = vsel %vm166, %v37, 0
  %191 = vmatprep.subr.mxu0 %v69
  %192 = vmatpush1.msra.mxu0 %v68
  %193 = vmatprep.subr.mxu0 %v67
  %194 = vmatpush1.msra.mxu0 %v66
  %195 = vmatprep.subr.mxu0 %v65
  %196 = vmatpush1.msra.mxu0 %v64
  %197 = vmatprep.subr.mxu0 %v63
  %198 = vmatpush1.msra.mxu0 %v62
  %199 = vmatprep.subr.mxu0 %v61
  %200 = vmatpush1.msra.mxu0 %v60
  %201 = vmatprep.subr.mxu0 %v59
  %202 = vmatpush1.msra.mxu0 %v58
  %203 = vmatprep.subr.mxu0 %v57
  %204 = vmatpush1.msra.mxu0 %v56
  %205 = vmatprep.subr.mxu0 %v55
  %206 = vmatpush1.msra.mxu0 %v54
  %207 = vmatprep.subr.mxu0 %v53
  %208 = vmatpush1.msra.mxu0 %v52
  %209 = vmatprep.subr.mxu0 %v51
  %210 = vmatpush1.msra.mxu0 %v50
  %211 = vmatprep.subr.mxu0 %v49
  %212 = vmatpush1.msra.mxu0 %v48
  %213 = vmatprep.subr.mxu0 %v47
  %214 = vmatpush1.msra.mxu0 %v46
  %215 = vmatprep.subr.mxu0 %v45
  %216 = vmatpush1.msra.mxu0 %v44
  %217 = vmatprep.subr.mxu0 %v43
  %218 = vmatpush1.msra.mxu0 %v42
  %219 = vmatprep.subr.mxu0 %v41
  %220 = vmatpush1.msra.mxu0 %v40
  %221 = vmatprep.subr.mxu0 %v39
  %222 = vmatpush1.msra.mxu0 %v38
  %223 = vmatprep.subr.mxu0 %v101
  %224 = vmatpush2.msra.mxu0 %v100
  %225 = vmatprep.subr.mxu0 %v99
  %226 = vmatpush2.msra.mxu0 %v98
  %227 = vmatprep.subr.mxu0 %v97
  %228 = vmatpush2.msra.mxu0 %v96
  %229 = vmatprep.subr.mxu0 %v95
  %230 = vmatpush2.msra.mxu0 %v94
  %231 = vmatprep.subr.mxu0 %v93
  %232 = vmatpush2.msra.mxu0 %v92
  %233 = vmatprep.subr.mxu0 %v91
  %234 = vmatpush2.msra.mxu0 %v90
  %235 = vmatprep.subr.mxu0 %v89
  %236 = vmatpush2.msra.mxu0 %v88
  %237 = vmatprep.subr.mxu0 %v87
  %238 = vmatpush2.msra.mxu0 %v86
  %239 = vmatprep.subr.mxu0 %v85
  %240 = vmatpush2.msra.mxu0 %v84
  %241 = vmatprep.subr.mxu0 %v83
  %242 = vmatpush2.msra.mxu0 %v82
  %243 = vmatprep.subr.mxu0 %v81
  %244 = vmatpush2.msra.mxu0 %v80
  %245 = vmatprep.subr.mxu0 %v79
  %246 = vmatpush2.msra.mxu0 %v78
  %247 = vmatprep.subr.mxu0 %v77
  %248 = vmatpush2.msra.mxu0 %v76
  %249 = vmatprep.subr.mxu0 %v75
  %250 = vmatpush2.msra.mxu0 %v74
  %251 = vmatprep.subr.mxu0 %v73
  %252 = vmatpush2.msra.mxu0 %v72
  %253 = vmatprep.subr.mxu0 %v71
  %254 = vmatpush2.msra.mxu0 %v70
  %255 = vmatprep.mubr.f32.mxu0 %v15
  %256 = vmatmul.mubr.f32.gmra.mxu0 %v14
  %v257 = vpop.f32.mrf.mxu0
  %v258 = vadd.f32 %v129, %v257
  %v259 = vpop.f32.mrf.mxu0
  %v260 = vadd.f32 %v129, %v259
  %261 = vmatprep.mubr.f32.mxu0 %v18
  %262 = vmatmul.mubr.f32.gmra.mxu0 %v17
  %v263 = vpop.f32.mrf.mxu0
  %v264 = vadd.f32 %v134, %v263
  %v265 = vpop.f32.mrf.mxu0
  %v266 = vadd.f32 %v134, %v265
  %267 = vmatprep.mubr.f32.mxu0 %v21
  %268 = vmatmul.mubr.f32.gmra.mxu0 %v20
  %v269 = vpop.f32.mrf.mxu0
  %v270 = vadd.f32 %v139, %v269
  %v271 = vpop.f32.mrf.mxu0
  %v272 = vadd.f32 %v139, %v271
  %273 = vmatprep.mubr.f32.mxu0 %v24
  %274 = vmatmul.mubr.f32.gmra.mxu0 %v23
  %v275 = vpop.f32.mrf.mxu0
  %v276 = vadd.f32 %v144, %v275
  %v277 = vpop.f32.mrf.mxu0
  %v278 = vadd.f32 %v144, %v277
  %279 = vmatprep.mubr.f32.mxu0 %v27
  %280 = vmatmul.mubr.f32.gmra.mxu0 %v26
  %v281 = vpop.f32.mrf.mxu0
  %v282 = vadd.f32 %v149, %v281
  %v283 = vpop.f32.mrf.mxu0
  %v284 = vadd.f32 %v149, %v283
  %285 = vmatprep.mubr.f32.mxu0 %v30
  %286 = vmatmul.mubr.f32.gmra.mxu0 %v29
  %v287 = vpop.f32.mrf.mxu0
  %v288 = vadd.f32 %v154, %v287
  %v289 = vpop.f32.mrf.mxu0
  %v290 = vadd.f32 %v154, %v289
  %291 = vmatprep.mubr.f32.mxu0 %v33
  %292 = vmatmul.mubr.f32.gmra.mxu0 %v32
  %v293 = vpop.f32.mrf.mxu0
  %v294 = vadd.f32 %v159, %v293
  %v295 = vpop.f32.mrf.mxu0
  %v296 = vadd.f32 %v159, %v295
  %297 = vmatprep.mubr.f32.mxu0 %v36
  %298 = vmatmul.mubr.f32.gmra.mxu0 %v35
  %v299 = vpop.f32.mrf.mxu0
  %v300 = vadd.f32 %v164, %v299
  %v301 = vpop.f32.mrf.mxu0
  %v302 = vadd.f32 %v164, %v301
  %303 = vdwg.mxu0
  %304 = vmatprep.subr.mxu0 0.0
  %305 = vmatpush1.msra.mxu0 0.0
  %306 = vmatprep.subr.mxu0 0.0
  %307 = vmatpush1.msra.mxu0 0.0
  %308 = vmatprep.subr.mxu0 0.0
  %309 = vmatpush1.msra.mxu0 0.0
  %310 = vmatprep.subr.mxu0 0.0
  %311 = vmatpush1.msra.mxu0 0.0
  %312 = vmatprep.subr.mxu0 0.0
  %313 = vmatpush1.msra.mxu0 0.0
  %314 = vmatprep.subr.mxu0 0.0
  %315 = vmatpush1.msra.mxu0 0.0
  %316 = vmatprep.subr.mxu0 0.0
  %317 = vmatpush1.msra.mxu0 0.0
  %318 = vmatprep.subr.mxu0 0.0
  %319 = vmatpush1.msra.mxu0 0.0
  %320 = vmatprep.subr.mxu0 %v117
  %321 = vmatpush1.msra.mxu0 %v116
  %322 = vmatprep.subr.mxu0 %v115
  %323 = vmatpush1.msra.mxu0 %v114
  %324 = vmatprep.subr.mxu0 %v113
  %325 = vmatpush1.msra.mxu0 %v112
  %326 = vmatprep.subr.mxu0 %v111
  %327 = vmatpush1.msra.mxu0 %v110
  %328 = vmatprep.subr.mxu0 %v109
  %329 = vmatpush1.msra.mxu0 %v108
  %330 = vmatprep.subr.mxu0 %v107
  %331 = vmatpush1.msra.mxu0 %v106
  %332 = vmatprep.subr.mxu0 %v105
  %333 = vmatpush1.msra.mxu0 %v104
  %334 = vmatprep.subr.mxu0 %v103
  %335 = vmatpush1.msra.mxu0 %v102
  %336 = vmatprep.subr.mxu0 0.0
  %337 = vmatpush2.msra.mxu0 0.0
  %338 = vmatprep.subr.mxu0 0.0
  %339 = vmatpush2.msra.mxu0 0.0
  %340 = vmatprep.subr.mxu0 0.0
  %341 = vmatpush2.msra.mxu0 0.0
  %342 = vmatprep.subr.mxu0 0.0
  %343 = vmatpush2.msra.mxu0 0.0
  %344 = vmatprep.subr.mxu0 0.0
  %345 = vmatpush2.msra.mxu0 0.0
  %346 = vmatprep.subr.mxu0 0.0
  %347 = vmatpush2.msra.mxu0 0.0
  %348 = vmatprep.subr.mxu0 0.0
  %349 = vmatpush2.msra.mxu0 0.0
  %350 = vmatprep.subr.mxu0 0.0
  %351 = vmatpush2.msra.mxu0 0.0
  %352 = vmatprep.subr.mxu0 0.0
  %353 = vmatpush2.msra.mxu0 0.0
  %354 = vmatprep.subr.mxu0 0.0
  %355 = vmatpush2.msra.mxu0 0.0
  %356 = vmatprep.subr.mxu0 0.0
  %357 = vmatpush2.msra.mxu0 0.0
  %358 = vmatprep.subr.mxu0 0.0
  %359 = vmatpush2.msra.mxu0 0.0
  %360 = vmatprep.subr.mxu0 0.0
  %361 = vmatpush2.msra.mxu0 0.0
  %362 = vmatprep.subr.mxu0 0.0
  %363 = vmatpush2.msra.mxu0 0.0
  %364 = vmatprep.subr.mxu0 0.0
  %365 = vmatpush2.msra.mxu0 0.0
  %366 = vmatprep.subr.mxu0 0.0
  %367 = vmatpush2.msra.mxu0 0.0
  %368 = vmatprep.mubr.f32.mxu0 0.0
  %369 = vmatmul.mubr.f32.gmra.mxu0 %v168
  %v370 = vpop.f32.mrf.mxu0
  %v371 = vadd.f32 %v258, %v370
  %v372 = vpop.f32.mrf.mxu0
  %v373 = vadd.f32 %v260, %v372
  %374 = vmatprep.mubr.f32.mxu0 0.0
  %375 = vmatmul.mubr.f32.gmra.mxu0 %v171
  %v376 = vpop.f32.mrf.mxu0
  %v377 = vadd.f32 %v264, %v376
  %v378 = vpop.f32.mrf.mxu0
  %v379 = vadd.f32 %v266, %v378
  %380 = vmatprep.mubr.f32.mxu0 0.0
  %381 = vmatmul.mubr.f32.gmra.mxu0 %v174
  %v382 = vpop.f32.mrf.mxu0
  %v383 = vadd.f32 %v270, %v382
  %v384 = vpop.f32.mrf.mxu0
  %v385 = vadd.f32 %v272, %v384
  %386 = vmatprep.mubr.f32.mxu0 0.0
  %387 = vmatmul.mubr.f32.gmra.mxu0 %v177
  %v388 = vpop.f32.mrf.mxu0
  %v389 = vadd.f32 %v276, %v388
  %v390 = vpop.f32.mrf.mxu0
  %v391 = vadd.f32 %v278, %v390
  %392 = vmatprep.mubr.f32.mxu0 0.0
  %393 = vmatmul.mubr.f32.gmra.mxu0 %v180
  %v394 = vpop.f32.mrf.mxu0
  %v395 = vadd.f32 %v282, %v394
  %v396 = vpop.f32.mrf.mxu0
  %v397 = vadd.f32 %v284, %v396
  %398 = vmatprep.mubr.f32.mxu0 0.0
  %399 = vmatmul.mubr.f32.gmra.mxu0 %v183
  %v400 = vpop.f32.mrf.mxu0
  %v401 = vadd.f32 %v288, %v400
  %v402 = vpop.f32.mrf.mxu0
  %v403 = vadd.f32 %v290, %v402
  %404 = vmatprep.mubr.f32.mxu0 0.0
  %405 = vmatmul.mubr.f32.gmra.mxu0 %v186
  %v406 = vpop.f32.mrf.mxu0
  %v407 = vadd.f32 %v294, %v406
  %v408 = vpop.f32.mrf.mxu0
  %v409 = vadd.f32 %v296, %v408
  %410 = vmatprep.mubr.f32.mxu0 0.0
  %411 = vmatmul.mubr.f32.gmra.mxu0 %v189
  %v412 = vpop.f32.mrf.mxu0
  %v413 = vadd.f32 %v300, %v412
  %v414 = vpop.f32.mrf.mxu0
  %v415 = vadd.f32 %v302, %v414
  %416 = vdwg.mxu0
  %v417 = vmax.f32 %v371, 0.0
  %v418 = vmax.f32 %v373, 0.0
  %v419 = vmax.f32 %v377, 0.0
  %v420 = vmax.f32 %v379, 0.0
  %v421 = vmax.f32 %v383, 0.0
  %v422 = vmax.f32 %v385, 0.0
  %v423 = vmax.f32 %v389, 0.0
  %v424 = vmax.f32 %v391, 0.0
  %v425 = vmax.f32 %v395, 0.0
  %v426 = vmax.f32 %v397, 0.0
  %v427 = vmax.f32 %v401, 0.0
  %v428 = vmax.f32 %v403, 0.0
  %v429 = vmax.f32 %v407, 0.0
  %v430 = vmax.f32 %v409, 0.0
  %v431 = vmax.f32 %v413, 0.0
  %v432 = vmax.f32 %v415, 0.0
  %433 = vst [vmem:[%s3] sm:$0xff] %v417
  %434 = vst [vmem:[%s3 + $0x8] sm:$0xff] %v418
  %435 = vst [vmem:[%s3 + $0x10] sm:$0xff] %v419
  %436 = vst [vmem:[%s3 + $0x18] sm:$0xff] %v420
  %437 = vst [vmem:[%s3 + $0x20] sm:$0xff] %v421
  %438 = vst [vmem:[%s3 + $0x28] sm:$0xff] %v422
  %439 = vst [vmem:[%s3 + $0x30] sm:$0xff] %v423
  %440 = vst [vmem:[%s3 + $0x38] sm:$0xff] %v424
  %441 = vst [vmem:[%s3 + $0x40] sm:$0xff] %v425
  %442 = vst [vmem:[%s3 + $0x48] sm:$0xff] %v426
  %443 = vst [vmem:[%s3 + $0x50] sm:$0xff] %v427
  %444 = vst [vmem:[%s3 + $0x58] sm:$0xff] %v428
  %445 = vst [vmem:[%s3 + $0x60] sm:$0xff] %v429
  %446 = vst [vmem:[%s3 + $0x68] sm:$0xff] %v430
  %447 = vst [vmem:[%s3 + $0x70] sm:$0xff] %v431
  %448 = vst [vmem:[%s3 + $0x78] sm:$0xff] %v432
  // Predicated region
  $region14: #{convolutional_net_forward.10} parent=0 // pred_check
    _
  $region15: #{convolutional_net_forward.10} parent=0 // pred_check_branch
    %450 = sbr.rel (0) target = $region17
  $region16: #{convolutional_net_forward.10} parent=0 // pred_region
    _
  $region17: #{convolutional_net_forward.10} parent=0 // pred_fallthru
    _
  // Predicated region
  $region18: #{convolutional_net_forward.10} parent=0 // pred_check
    _
  $region19: #{convolutional_net_forward.10} parent=0 // pred_check_branch
    %452 = sbr.rel (0) target = $region21
  $region20: #{convolutional_net_forward.10} parent=0 // pred_region
    _
  $region21: #{convolutional_net_forward.10} parent=0 // pred_fallthru
    _

// kernel: convolutional_net_forward.11
$region0: #{convolutional_net_forward.11}
  #allocation0 [shape = 'u32[]', space=smem, size = 0x4, offset = 0x4, fixed_abs, tag = 'smem constant byte address 0x4 - core index']
  #allocation1 [shape = 'u32[144,128]{1,0:T(1,128)}', space=vmem, size = 0x12000, scoped, tag = 'internal scratch']
  %s0 = inlined_call_operand.vmem [shape: f32[5,64], index: 0, kind: input, shape index: {}]
  %s1 = inlined_call_operand.vmem [shape: f32[64,256], index: 1, kind: input, shape index: {}]
  %s2 = inlined_call_operand.vmem [shape: f32[5,1], index: 2, kind: input, shape index: {}]
  %s3 = inlined_call_operand.vmem [shape: f32[5,256], index: 3, kind: output, shape index: {}]
  %s4 = sld [smem:[#allocation0]]
  $region22: #{convolutional_net_forward.11} parent=0
    _
  %s6 = ssub.s32 1, %s4
  %s7 = scalar_select 0, %s6, %s4
  // Predicated region
  $region2: #{convolutional_net_forward.11} parent=0 // pred_check
    _
  $region3: #{convolutional_net_forward.11} parent=0 // pred_check_branch
    %9 = sbr.rel (0) target = $region5
  $region4: #{convolutional_net_forward.11} parent=0 // pred_region
    _
  $region5: #{convolutional_net_forward.11} parent=0 // pred_fallthru
    _
  // Predicated region
  $region6: #{convolutional_net_forward.11} parent=0 // pred_check
    _
  $region7: #{convolutional_net_forward.11} parent=0 // pred_check_branch
    %11 = sbr.rel (0) target = $region9
  $region8: #{convolutional_net_forward.11} parent=0 // pred_region
    _
  $region9: #{convolutional_net_forward.11} parent=0 // pred_fallthru
    _
  // Predicated region
  $region10: #{convolutional_net_forward.11} parent=0 // pred_check
    _
  $region11: #{convolutional_net_forward.11} parent=0 // pred_check_branch
    %13 = sbr.rel (0) target = $region13
  $region12: #{convolutional_net_forward.11} parent=0 // pred_region
    _
  $region13: #{convolutional_net_forward.11} parent=0 // pred_fallthru
    _
  %v14 = vld [vmem:[%s0] sm:$0x1f]
  %v15 = vld [vmem:[%s1] sm:$0xff]
  %v16 = vld [vmem:[%s1 + $0x8] sm:$0xff]
  %v17 = vld [vmem:[%s1 + $0x10] sm:$0xff]
  %v18 = vld [vmem:[%s1 + $0x18] sm:$0xff]
  %v19 = vld [vmem:[%s1 + $0x20] sm:$0xff]
  %v20 = vld [vmem:[%s1 + $0x28] sm:$0xff]
  %v21 = vld [vmem:[%s1 + $0x30] sm:$0xff]
  %v22 = vld [vmem:[%s1 + $0x38] sm:$0xff]
  %v23 = vld [vmem:[%s1 + $0x40] sm:$0xff]
  %v24 = vld [vmem:[%s1 + $0x48] sm:$0xff]
  %v25 = vld [vmem:[%s1 + $0x50] sm:$0xff]
  %v26 = vld [vmem:[%s1 + $0x58] sm:$0xff]
  %v27 = vld [vmem:[%s1 + $0x60] sm:$0xff]
  %v28 = vld [vmem:[%s1 + $0x68] sm:$0xff]
  %v29 = vld [vmem:[%s1 + $0x70] sm:$0xff]
  %v30 = vld [vmem:[%s1 + $0x78] sm:$0xff]
  %v31 = vld [vmem:[%s2] sm:$0x1f]
  %33 = vset.pattern.permute.xlu0 0
  %34 = vperm.xlu0 %33, %v31
  %v35 = vpop.permute.xlu0 %34
  %vm37 = vcmask 523264
  %v39 = vsel %vm37, %v14, 0
  %41 = vmatprep.subr.mxu0 0.0
  %42 = vmatpush1.msra.mxu0 0.0
  %43 = vmatprep.subr.mxu0 0.0
  %44 = vmatpush1.msra.mxu0 0.0
  %45 = vmatprep.subr.mxu0 0.0
  %46 = vmatpush1.msra.mxu0 0.0
  %47 = vmatprep.subr.mxu0 0.0
  %48 = vmatpush1.msra.mxu0 0.0
  %49 = vmatprep.subr.mxu0 0.0
  %50 = vmatpush1.msra.mxu0 0.0
  %51 = vmatprep.subr.mxu0 0.0
  %52 = vmatpush1.msra.mxu0 0.0
  %53 = vmatprep.subr.mxu0 0.0
  %54 = vmatpush1.msra.mxu0 0.0
  %55 = vmatprep.subr.mxu0 0.0
  %56 = vmatpush1.msra.mxu0 0.0
  %57 = vmatprep.subr.mxu0 %v30
  %58 = vmatpush1.msra.mxu0 %v29
  %59 = vmatprep.subr.mxu0 %v28
  %60 = vmatpush1.msra.mxu0 %v27
  %61 = vmatprep.subr.mxu0 %v26
  %62 = vmatpush1.msra.mxu0 %v25
  %63 = vmatprep.subr.mxu0 %v24
  %64 = vmatpush1.msra.mxu0 %v23
  %65 = vmatprep.subr.mxu0 %v22
  %66 = vmatpush1.msra.mxu0 %v21
  %67 = vmatprep.subr.mxu0 %v20
  %68 = vmatpush1.msra.mxu0 %v19
  %69 = vmatprep.subr.mxu0 %v18
  %70 = vmatpush1.msra.mxu0 %v17
  %71 = vmatprep.subr.mxu0 %v16
  %72 = vmatpush1.msra.mxu0 %v15
  %73 = vmatprep.subr.mxu0 0.0
  %74 = vmatpush2.msra.mxu0 0.0
  %75 = vmatprep.subr.mxu0 0.0
  %76 = vmatpush2.msra.mxu0 0.0
  %77 = vmatprep.subr.mxu0 0.0
  %78 = vmatpush2.msra.mxu0 0.0
  %79 = vmatprep.subr.mxu0 0.0
  %80 = vmatpush2.msra.mxu0 0.0
  %81 = vmatprep.subr.mxu0 0.0
  %82 = vmatpush2.msra.mxu0 0.0
  %83 = vmatprep.subr.mxu0 0.0
  %84 = vmatpush2.msra.mxu0 0.0
  %85 = vmatprep.subr.mxu0 0.0
  %86 = vmatpush2.msra.mxu0 0.0
  %87 = vmatprep.subr.mxu0 0.0
  %88 = vmatpush2.msra.mxu0 0.0
  %89 = vmatprep.subr.mxu0 0.0
  %90 = vmatpush2.msra.mxu0 0.0
  %91 = vmatprep.subr.mxu0 0.0
  %92 = vmatpush2.msra.mxu0 0.0
  %93 = vmatprep.subr.mxu0 0.0
  %94 = vmatpush2.msra.mxu0 0.0
  %95 = vmatprep.subr.mxu0 0.0
  %96 = vmatpush2.msra.mxu0 0.0
  %97 = vmatprep.subr.mxu0 0.0
  %98 = vmatpush2.msra.mxu0 0.0
  %99 = vmatprep.subr.mxu0 0.0
  %100 = vmatpush2.msra.mxu0 0.0
  %101 = vmatprep.subr.mxu0 0.0
  %102 = vmatpush2.msra.mxu0 0.0
  %103 = vmatprep.subr.mxu0 0.0
  %104 = vmatpush2.msra.mxu0 0.0
  %105 = vmatprep.mubr.f32.mxu0 0.0
  %106 = vmatmul.mubr.f32.gmra.mxu0 %v39
  %v107 = vpop.f32.mrf.mxu0
  %v108 = vadd.f32 %v35, %v107
  %v109 = vpop.f32.mrf.mxu0
  %v110 = vadd.f32 %v35, %v109
  %111 = vdwg.mxu0
  %v112 = vmax.f32 %v108, 0.0
  %v113 = vmax.f32 %v110, 0.0
  %114 = vst [vmem:[%s3] sm:$0x1f] %v112
  %115 = vst [vmem:[%s3 + $0x8] sm:$0x1f] %v113
  // Predicated region
  $region14: #{convolutional_net_forward.11} parent=0 // pred_check
    _
  $region15: #{convolutional_net_forward.11} parent=0 // pred_check_branch
    %117 = sbr.rel (0) target = $region17
  $region16: #{convolutional_net_forward.11} parent=0 // pred_region
    _
  $region17: #{convolutional_net_forward.11} parent=0 // pred_fallthru
    _
  // Predicated region
  $region18: #{convolutional_net_forward.11} parent=0 // pred_check
    _
  $region19: #{convolutional_net_forward.11} parent=0 // pred_check_branch
    %119 = sbr.rel (0) target = $region21
  $region20: #{convolutional_net_forward.11} parent=0 // pred_region
    _
  $region21: #{convolutional_net_forward.11} parent=0 // pred_fallthru
    _

// kernel: convolutional_net_forward.13
$region0: #{convolutional_net_forward.13}
  #allocation0 [shape = 'u32[]', space=smem, size = 0x4, offset = 0x4, fixed_abs, tag = 'smem constant byte address 0x4 - core index']
  #allocation1 [shape = 'u32[144,128]{1,0:T(1,128)}', space=vmem, size = 0x12000, scoped, tag = 'internal scratch']
  %s0 = inlined_call_operand.vmem [shape: f32[12,104], index: 0, kind: input, shape index: {}]
  %s1 = inlined_call_operand.vmem [shape: f32[104,128], index: 1, kind: input, shape index: {}]
  %s2 = inlined_call_operand.vmem [shape: f32[12,1], index: 2, kind: input, shape index: {}]
  %s3 = inlined_call_operand.vmem [shape: f32[12,128], index: 3, kind: output, shape index: {}]
  %s4 = sld [smem:[#allocation0]]
  $region22: #{convolutional_net_forward.13} parent=0
    _
  %s6 = ssub.s32 1, %s4
  %s7 = scalar_select 0, %s6, %s4
  // Predicated region
  $region2: #{convolutional_net_forward.13} parent=0 // pred_check
    _
  $region3: #{convolutional_net_forward.13} parent=0 // pred_check_branch
    %9 = sbr.rel (0) target = $region5
  $region4: #{convolutional_net_forward.13} parent=0 // pred_region
    _
  $region5: #{convolutional_net_forward.13} parent=0 // pred_fallthru
    _
  // Predicated region
  $region6: #{convolutional_net_forward.13} parent=0 // pred_check
    _
  $region7: #{convolutional_net_forward.13} parent=0 // pred_check_branch
    %11 = sbr.rel (0) target = $region9
  $region8: #{convolutional_net_forward.13} parent=0 // pred_region
    _
  $region9: #{convolutional_net_forward.13} parent=0 // pred_fallthru
    _
  // Predicated region
  $region10: #{convolutional_net_forward.13} parent=0 // pred_check
    _
  $region11: #{convolutional_net_forward.13} parent=0 // pred_check_branch
    %13 = sbr.rel (0) target = $region13
  $region12: #{convolutional_net_forward.13} parent=0 // pred_region
    _
  $region13: #{convolutional_net_forward.13} parent=0 // pred_fallthru
    _
  %v14 = vld [vmem:[%s0] sm:$0xff]
  %v15 = vld [vmem:[%s0 + $0x8] sm:$0xf]
  %v16 = vld [vmem:[%s1] sm:$0xff]
  %v17 = vld [vmem:[%s1 + $0x8] sm:$0xff]
  %v18 = vld [vmem:[%s1 + $0x10] sm:$0xff]
  %v19 = vld [vmem:[%s1 + $0x18] sm:$0xff]
  %v20 = vld [vmem:[%s1 + $0x20] sm:$0xff]
  %v21 = vld [vmem:[%s1 + $0x28] sm:$0xff]
  %v22 = vld [vmem:[%s1 + $0x30] sm:$0xff]
  %v23 = vld [vmem:[%s1 + $0x38] sm:$0xff]
  %v24 = vld [vmem:[%s1 + $0x40] sm:$0xff]
  %v25 = vld [vmem:[%s1 + $0x48] sm:$0xff]
  %v26 = vld [vmem:[%s1 + $0x50] sm:$0xff]
  %v27 = vld [vmem:[%s1 + $0x58] sm:$0xff]
  %v28 = vld [vmem:[%s1 + $0x60] sm:$0xff]
  %v29 = vld [vmem:[%s2] sm:$0xff]
  %v30 = vld [vmem:[%s2 + $0x8] sm:$0xf]
  %32 = vset.pattern.permute.xlu0 0
  %33 = vperm.xlu0 %32, %v29
  %v34 = vpop.permute.xlu0 %33
  %37 = vset.pattern.permute.xlu0 0
  %38 = vperm.xlu0 %37, %v30
  %v39 = vpop.permute.xlu0 %38
  %vm41 = vcmask 850944
  %v43 = vsel %vm41, %v14, 0
  %v46 = vsel %vm41, %v15, 0
  %48 = vmatprep.subr.mxu0 0.0
  %49 = vmatpush1.msra.mxu0 0.0
  %50 = vmatprep.subr.mxu0 0.0
  %51 = vmatpush1.msra.mxu0 0.0
  %52 = vmatprep.subr.mxu0 0.0
  %53 = vmatpush1.msra.mxu0 0.0
  %54 = vmatprep.subr.mxu0 0.0
  %55 = vmatpush1.msra.mxu0 %v28
  %56 = vmatprep.subr.mxu0 0.0
  %57 = vmatpush1.msra.mxu0 %v27
  %58 = vmatprep.subr.mxu0 0.0
  %59 = vmatpush1.msra.mxu0 %v26
  %60 = vmatprep.subr.mxu0 0.0
  %61 = vmatpush1.msra.mxu0 %v25
  %62 = vmatprep.subr.mxu0 0.0
  %63 = vmatpush1.msra.mxu0 %v24
  %64 = vmatprep.subr.mxu0 0.0
  %65 = vmatpush1.msra.mxu0 %v23
  %66 = vmatprep.subr.mxu0 0.0
  %67 = vmatpush1.msra.mxu0 %v22
  %68 = vmatprep.subr.mxu0 0.0
  %69 = vmatpush1.msra.mxu0 %v21
  %70 = vmatprep.subr.mxu0 0.0
  %71 = vmatpush1.msra.mxu0 %v20
  %72 = vmatprep.subr.mxu0 0.0
  %73 = vmatpush1.msra.mxu0 %v19
  %74 = vmatprep.subr.mxu0 0.0
  %75 = vmatpush1.msra.mxu0 %v18
  %76 = vmatprep.subr.mxu0 0.0
  %77 = vmatpush1.msra.mxu0 %v17
  %78 = vmatprep.subr.mxu0 0.0
  %79 = vmatpush1.msra.mxu0 %v16
  %80 = vmatprep.subr.mxu0 0.0
  %81 = vmatpush2.msra.mxu0 0.0
  %82 = vmatprep.subr.mxu0 0.0
  %83 = vmatpush2.msra.mxu0 0.0
  %84 = vmatprep.subr.mxu0 0.0
  %85 = vmatpush2.msra.mxu0 0.0
  %86 = vmatprep.subr.mxu0 0.0
  %87 = vmatpush2.msra.mxu0 0.0
  %88 = vmatprep.subr.mxu0 0.0
  %89 = vmatpush2.msra.mxu0 0.0
  %90 = vmatprep.subr.mxu0 0.0
  %91 = vmatpush2.msra.mxu0 0.0
  %92 = vmatprep.subr.mxu0 0.0
  %93 = vmatpush2.msra.mxu0 0.0
  %94 = vmatprep.subr.mxu0 0.0
  %95 = vmatpush2.msra.mxu0 0.0
  %96 = vmatprep.subr.mxu0 0.0
  %97 = vmatpush2.msra.mxu0 0.0
  %98 = vmatprep.subr.mxu0 0.0
  %99 = vmatpush2.msra.mxu0 0.0
  %100 = vmatprep.subr.mxu0 0.0
  %101 = vmatpush2.msra.mxu0 0.0
  %102 = vmatprep.subr.mxu0 0.0
  %103 = vmatpush2.msra.mxu0 0.0
  %104 = vmatprep.subr.mxu0 0.0
  %105 = vmatpush2.msra.mxu0 0.0
  %106 = vmatprep.subr.mxu0 0.0
  %107 = vmatpush2.msra.mxu0 0.0
  %108 = vmatprep.subr.mxu0 0.0
  %109 = vmatpush2.msra.mxu0 0.0
  %110 = vmatprep.subr.mxu0 0.0
  %111 = vmatpush2.msra.mxu0 0.0
  %112 = vmatprep.mubr.f32.mxu0 0.0
  %113 = vmatmul.mubr.f32.gmra.mxu0 %v43
  %v114 = vpop.f32.mrf.mxu0
  %v115 = vadd.f32 %v34, %v114
  %v116 = vpop.f32.mrf.mxu0
  %117 = vmatprep.mubr.f32.mxu0 0.0
  %118 = vmatmul.mubr.f32.gmra.mxu0 %v46
  %v119 = vpop.f32.mrf.mxu0
  %v120 = vadd.f32 %v39, %v119
  %v121 = vpop.f32.mrf.mxu0
  %122 = vdwg.mxu0
  %123 = vst [vmem:[%s3] sm:$0xff] %v115
  %124 = vst [vmem:[%s3 + $0x8] sm:$0xf] %v120
  // Predicated region
  $region14: #{convolutional_net_forward.13} parent=0 // pred_check
    _
  $region15: #{convolutional_net_forward.13} parent=0 // pred_check_branch
    %126 = sbr.rel (0) target = $region17
  $region16: #{convolutional_net_forward.13} parent=0 // pred_region
    _
  $region17: #{convolutional_net_forward.13} parent=0 // pred_fallthru
    _
  // Predicated region
  $region18: #{convolutional_net_forward.13} parent=0 // pred_check
    _
  $region19: #{convolutional_net_forward.13} parent=0 // pred_check_branch
    %128 = sbr.rel (0) target = $region21
  $region20: #{convolutional_net_forward.13} parent=0 // pred_region
    _
  $region21: #{convolutional_net_forward.13} parent=0 // pred_fallthru
    _

// kernel: convolutional_net_forward.12
$region0: #{convolutional_net_forward.12}
  #allocation0 [shape = 'u32[]', space=smem, size = 0x4, offset = 0x4, fixed_abs, tag = 'smem constant byte address 0x4 - core index']
  #allocation1 [shape = 'u32[144,128]{1,0:T(1,128)}', space=vmem, size = 0x12000, scoped, tag = 'internal scratch']
  %s0 = inlined_call_operand.vmem [shape: f32[100,416], index: 0, kind: input, shape index: {}]
  %s1 = inlined_call_operand.vmem [shape: f32[416,128], index: 1, kind: input, shape index: {}]
  %s2 = inlined_call_operand.vmem [shape: f32[100,1], index: 2, kind: input, shape index: {}]
  %s3 = inlined_call_operand.vmem [shape: f32[100,128], index: 3, kind: output, shape index: {}]
  %s4 = sld [smem:[#allocation0]]
  $region22: #{convolutional_net_forward.12} parent=0
    _
  %s6 = ssub.s32 1, %s4
  %s7 = scalar_select 0, %s6, %s4
  // Predicated region
  $region2: #{convolutional_net_forward.12} parent=0 // pred_check
    _
  $region3: #{convolutional_net_forward.12} parent=0 // pred_check_branch
    %9 = sbr.rel (0) target = $region5
  $region4: #{convolutional_net_forward.12} parent=0 // pred_region
    _
  $region5: #{convolutional_net_forward.12} parent=0 // pred_fallthru
    _
  // Predicated region
  $region6: #{convolutional_net_forward.12} parent=0 // pred_check
    _
  $region7: #{convolutional_net_forward.12} parent=0 // pred_check_branch
    %11 = sbr.rel (0) target = $region9
  $region8: #{convolutional_net_forward.12} parent=0 // pred_region
    _
  $region9: #{convolutional_net_forward.12} parent=0 // pred_fallthru
    _
  // Predicated region
  $region10: #{convolutional_net_forward.12} parent=0 // pred_check
    _
  $region11: #{convolutional_net_forward.12} parent=0 // pred_check_branch
    %13 = sbr.rel (0) target = $region13
  $region12: #{convolutional_net_forward.12} parent=0 // pred_region
    _
  $region13: #{convolutional_net_forward.12} parent=0 // pred_fallthru
    _
  %v14 = vld [vmem:[%s0] sm:$0xff]
  %v15 = vld [vmem:[%s0 + $0x8] sm:$0xff]
  %v16 = vld [vmem:[%s0 + $0x10] sm:$0xff]
  %v17 = vld [vmem:[%s0 + $0x18] sm:$0xff]
  %v18 = vld [vmem:[%s0 + $0x20] sm:$0xff]
  %v19 = vld [vmem:[%s0 + $0x28] sm:$0xff]
  %v20 = vld [vmem:[%s0 + $0x30] sm:$0xff]
  %v21 = vld [vmem:[%s0 + $0x38] sm:$0xff]
  %v22 = vld [vmem:[%s0 + $0x40] sm:$0xff]
  %v23 = vld [vmem:[%s0 + $0x48] sm:$0xff]
  %v24 = vld [vmem:[%s0 + $0x50] sm:$0xff]
  %v25 = vld [vmem:[%s0 + $0x58] sm:$0xff]
  %v26 = vld [vmem:[%s0 + $0x60] sm:$0xff]
  %v27 = vld [vmem:[%s0 + $0x68] sm:$0xff]
  %v28 = vld [vmem:[%s0 + $0x70] sm:$0xff]
  %v29 = vld [vmem:[%s0 + $0x78] sm:$0xff]
  %v30 = vld [vmem:[%s0 + $0x80] sm:$0xff]
  %v31 = vld [vmem:[%s0 + $0x88] sm:$0xff]
  %v32 = vld [vmem:[%s0 + $0x90] sm:$0xff]
  %v33 = vld [vmem:[%s0 + $0x98] sm:$0xff]
  %v34 = vld [vmem:[%s0 + $0xa0] sm:$0xff]
  %v35 = vld [vmem:[%s0 + $0xa8] sm:$0xff]
  %v36 = vld [vmem:[%s0 + $0xb0] sm:$0xff]
  %v37 = vld [vmem:[%s0 + $0xb8] sm:$0xff]
  %v38 = vld [vmem:[%s0 + $0xc0] sm:$0xff]
  %v39 = vld [vmem:[%s0 + $0xc8] sm:$0xff]
  %v40 = vld [vmem:[%s0 + $0xd0] sm:$0xff]
  %v41 = vld [vmem:[%s0 + $0xd8] sm:$0xff]
  %v42 = vld [vmem:[%s0 + $0xe0] sm:$0xff]
  %v43 = vld [vmem:[%s0 + $0xe8] sm:$0xff]
  %v44 = vld [vmem:[%s0 + $0xf0] sm:$0xff]
  %v45 = vld [vmem:[%s0 + $0xf8] sm:$0xff]
  %v46 = vld [vmem:[%s0 + $0x100] sm:$0xff]
  %v47 = vld [vmem:[%s0 + $0x108] sm:$0xff]
  %v48 = vld [vmem:[%s0 + $0x110] sm:$0xff]
  %v49 = vld [vmem:[%s0 + $0x118] sm:$0xff]
  %v50 = vld [vmem:[%s0 + $0x120] sm:$0xff]
  %v51 = vld [vmem:[%s0 + $0x128] sm:$0xff]
  %v52 = vld [vmem:[%s0 + $0x130] sm:$0xff]
  %v53 = vld [vmem:[%s0 + $0x138] sm:$0xff]
  %v54 = vld [vmem:[%s0 + $0x140] sm:$0xff]
  %v55 = vld [vmem:[%s0 + $0x148] sm:$0xff]
  %v56 = vld [vmem:[%s0 + $0x150] sm:$0xff]
  %v57 = vld [vmem:[%s0 + $0x158] sm:$0xff]
  %v58 = vld [vmem:[%s0 + $0x160] sm:$0xff]
  %v59 = vld [vmem:[%s0 + $0x168] sm:$0xff]
  %v60 = vld [vmem:[%s0 + $0x170] sm:$0xff]
  %v61 = vld [vmem:[%s0 + $0x178] sm:$0xff]
  %v62 = vld [vmem:[%s0 + $0x180] sm:$0xf]
  %v63 = vld [vmem:[%s0 + $0x188] sm:$0xf]
  %v64 = vld [vmem:[%s0 + $0x190] sm:$0xf]
  %v65 = vld [vmem:[%s0 + $0x198] sm:$0xf]
  %v66 = vld [vmem:[%s1] sm:$0xff]
  %v67 = vld [vmem:[%s1 + $0x8] sm:$0xff]
  %v68 = vld [vmem:[%s1 + $0x10] sm:$0xff]
  %v69 = vld [vmem:[%s1 + $0x18] sm:$0xff]
  %v70 = vld [vmem:[%s1 + $0x20] sm:$0xff]
  %v71 = vld [vmem:[%s1 + $0x28] sm:$0xff]
  %v72 = vld [vmem:[%s1 + $0x30] sm:$0xff]
  %v73 = vld [vmem:[%s1 + $0x38] sm:$0xff]
  %v74 = vld [vmem:[%s1 + $0x40] sm:$0xff]
  %v75 = vld [vmem:[%s1 + $0x48] sm:$0xff]
  %v76 = vld [vmem:[%s1 + $0x50] sm:$0xff]
  %v77 = vld [vmem:[%s1 + $0x58] sm:$0xff]
  %v78 = vld [vmem:[%s1 + $0x60] sm:$0xff]
  %v79 = vld [vmem:[%s1 + $0x68] sm:$0xff]
  %v80 = vld [vmem:[%s1 + $0x70] sm:$0xff]
  %v81 = vld [vmem:[%s1 + $0x78] sm:$0xff]
  %v82 = vld [vmem:[%s1 + $0x80] sm:$0xff]
  %v83 = vld [vmem:[%s1 + $0x88] sm:$0xff]
  %v84 = vld [vmem:[%s1 + $0x90] sm:$0xff]
  %v85 = vld [vmem:[%s1 + $0x98] sm:$0xff]
  %v86 = vld [vmem:[%s1 + $0xa0] sm:$0xff]
  %v87 = vld [vmem:[%s1 + $0xa8] sm:$0xff]
  %v88 = vld [vmem:[%s1 + $0xb0] sm:$0xff]
  %v89 = vld [vmem:[%s1 + $0xb8] sm:$0xff]
  %v90 = vld [vmem:[%s1 + $0xc0] sm:$0xff]
  %v91 = vld [vmem:[%s1 + $0xc8] sm:$0xff]
  %v92 = vld [vmem:[%s1 + $0xd0] sm:$0xff]
  %v93 = vld [vmem:[%s1 + $0xd8] sm:$0xff]
  %v94 = vld [vmem:[%s1 + $0xe0] sm:$0xff]
  %v95 = vld [vmem:[%s1 + $0xe8] sm:$0xff]
  %v96 = vld [vmem:[%s1 + $0xf0] sm:$0xff]
  %v97 = vld [vmem:[%s1 + $0xf8] sm:$0xff]
  %v98 = vld [vmem:[%s1 + $0x100] sm:$0xff]
  %v99 = vld [vmem:[%s1 + $0x108] sm:$0xff]
  %v100 = vld [vmem:[%s1 + $0x110] sm:$0xff]
  %v101 = vld [vmem:[%s1 + $0x118] sm:$0xff]
  %v102 = vld [vmem:[%s1 + $0x120] sm:$0xff]
  %v103 = vld [vmem:[%s1 + $0x128] sm:$0xff]
  %v104 = vld [vmem:[%s1 + $0x130] sm:$0xff]
  %v105 = vld [vmem:[%s1 + $0x138] sm:$0xff]
  %v106 = vld [vmem:[%s1 + $0x140] sm:$0xff]
  %v107 = vld [vmem:[%s1 + $0x148] sm:$0xff]
  %v108 = vld [vmem:[%s1 + $0x150] sm:$0xff]
  %v109 = vld [vmem:[%s1 + $0x158] sm:$0xff]
  %v110 = vld [vmem:[%s1 + $0x160] sm:$0xff]
  %v111 = vld [vmem:[%s1 + $0x168] sm:$0xff]
  %v112 = vld [vmem:[%s1 + $0x170] sm:$0xff]
  %v113 = vld [vmem:[%s1 + $0x178] sm:$0xff]
  %v114 = vld [vmem:[%s1 + $0x180] sm:$0xff]
  %v115 = vld [vmem:[%s1 + $0x188] sm:$0xff]
  %v116 = vld [vmem:[%s1 + $0x190] sm:$0xff]
  %v117 = vld [vmem:[%s1 + $0x198] sm:$0xff]
  %v118 = vld [vmem:[%s2] sm:$0xff]
  %v119 = vld [vmem:[%s2 + $0x8] sm:$0xff]
  %v120 = vld [vmem:[%s2 + $0x10] sm:$0xff]
  %v121 = vld [vmem:[%s2 + $0x18] sm:$0xff]
  %v122 = vld [vmem:[%s2 + $0x20] sm:$0xff]
  %v123 = vld [vmem:[%s2 + $0x28] sm:$0xff]
  %v124 = vld [vmem:[%s2 + $0x30] sm:$0xff]
  %v125 = vld [vmem:[%s2 + $0x38] sm:$0xff]
  %v126 = vld [vmem:[%s2 + $0x40] sm:$0xff]
  %v127 = vld [vmem:[%s2 + $0x48] sm:$0xff]
  %v128 = vld [vmem:[%s2 + $0x50] sm:$0xff]
  %v129 = vld [vmem:[%s2 + $0x58] sm:$0xff]
  %v130 = vld [vmem:[%s2 + $0x60] sm:$0xf]
  %132 = vset.pattern.permute.xlu0 0
  %133 = vperm.xlu0 %132, %v118
  %v134 = vpop.permute.xlu0 %133
  %137 = vset.pattern.permute.xlu0 0
  %138 = vperm.xlu0 %137, %v119
  %v139 = vpop.permute.xlu0 %138
  %142 = vset.pattern.permute.xlu0 0
  %143 = vperm.xlu0 %142, %v120
  %v144 = vpop.permute.xlu0 %143
  %147 = vset.pattern.permute.xlu0 0
  %148 = vperm.xlu0 %147, %v121
  %v149 = vpop.permute.xlu0 %148
  %152 = vset.pattern.permute.xlu0 0
  %153 = vperm.xlu0 %152, %v122
  %v154 = vpop.permute.xlu0 %153
  %157 = vset.pattern.permute.xlu0 0
  %158 = vperm.xlu0 %157, %v123
  %v159 = vpop.permute.xlu0 %158
  %162 = vset.pattern.permute.xlu0 0
  %163 = vperm.xlu0 %162, %v124
  %v164 = vpop.permute.xlu0 %163
  %167 = vset.pattern.permute.xlu0 0
  %168 = vperm.xlu0 %167, %v125
  %v169 = vpop.permute.xlu0 %168
  %172 = vset.pattern.permute.xlu0 0
  %173 = vperm.xlu0 %172, %v126
  %v174 = vpop.permute.xlu0 %173
  %177 = vset.pattern.permute.xlu0 0
  %178 = vperm.xlu0 %177, %v127
  %v179 = vpop.permute.xlu0 %178
  %182 = vset.pattern.permute.xlu0 0
  %183 = vperm.xlu0 %182, %v128
  %v184 = vpop.permute.xlu0 %183
  %187 = vset.pattern.permute.xlu0 0
  %188 = vperm.xlu0 %187, %v129
  %v189 = vpop.permute.xlu0 %188
  %192 = vset.pattern.permute.xlu0 0
  %193 = vperm.xlu0 %192, %v130
  %v194 = vpop.permute.xlu0 %193
  %vm196 = vcmask 261120
  %v198 = vsel %vm196, %v17, 0
  %v201 = vsel %vm196, %v21, 0
  %v204 = vsel %vm196, %v25, 0
  %v207 = vsel %vm196, %v29, 0
  %v210 = vsel %vm196, %v33, 0
  %v213 = vsel %vm196, %v37, 0
  %v216 = vsel %vm196, %v41, 0
  %v219 = vsel %vm196, %v45, 0
  %v222 = vsel %vm196, %v49, 0
  %v225 = vsel %vm196, %v53, 0
  %v228 = vsel %vm196, %v57, 0
  %v231 = vsel %vm196, %v61, 0
  %v234 = vsel %vm196, %v65, 0
  %236 = vmatprep.subr.mxu0 0.0
  %237 = vmatpush1.msra.mxu0 %v81
  %238 = vmatprep.subr.mxu0 0.0
  %239 = vmatpush1.msra.mxu0 %v80
  %240 = vmatprep.subr.mxu0 0.0
  %241 = vmatpush1.msra.mxu0 %v79
  %242 = vmatprep.subr.mxu0 0.0
  %243 = vmatpush1.msra.mxu0 %v78
  %244 = vmatprep.subr.mxu0 0.0
  %245 = vmatpush1.msra.mxu0 %v77
  %246 = vmatprep.subr.mxu0 0.0
  %247 = vmatpush1.msra.mxu0 %v76
  %248 = vmatprep.subr.mxu0 0.0
  %249 = vmatpush1.msra.mxu0 %v75
  %250 = vmatprep.subr.mxu0 0.0
  %251 = vmatpush1.msra.mxu0 %v74
  %252 = vmatprep.subr.mxu0 0.0
  %253 = vmatpush1.msra.mxu0 %v73
  %254 = vmatprep.subr.mxu0 0.0
  %255 = vmatpush1.msra.mxu0 %v72
  %256 = vmatprep.subr.mxu0 0.0
  %257 = vmatpush1.msra.mxu0 %v71
  %258 = vmatprep.subr.mxu0 0.0
  %259 = vmatpush1.msra.mxu0 %v70
  %260 = vmatprep.subr.mxu0 0.0
  %261 = vmatpush1.msra.mxu0 %v69
  %262 = vmatprep.subr.mxu0 0.0
  %263 = vmatpush1.msra.mxu0 %v68
  %264 = vmatprep.subr.mxu0 0.0
  %265 = vmatpush1.msra.mxu0 %v67
  %266 = vmatprep.subr.mxu0 0.0
  %267 = vmatpush1.msra.mxu0 %v66
  %268 = vmatprep.subr.mxu0 0.0
  %269 = vmatpush2.msra.mxu0 %v97
  %270 = vmatprep.subr.mxu0 0.0
  %271 = vmatpush2.msra.mxu0 %v96
  %272 = vmatprep.subr.mxu0 0.0
  %273 = vmatpush2.msra.mxu0 %v95
  %274 = vmatprep.subr.mxu0 0.0
  %275 = vmatpush2.msra.mxu0 %v94
  %276 = vmatprep.subr.mxu0 0.0
  %277 = vmatpush2.msra.mxu0 %v93
  %278 = vmatprep.subr.mxu0 0.0
  %279 = vmatpush2.msra.mxu0 %v92
  %280 = vmatprep.subr.mxu0 0.0
  %281 = vmatpush2.msra.mxu0 %v91
  %282 = vmatprep.subr.mxu0 0.0
  %283 = vmatpush2.msra.mxu0 %v90
  %284 = vmatprep.subr.mxu0 0.0
  %285 = vmatpush2.msra.mxu0 %v89
  %286 = vmatprep.subr.mxu0 0.0
  %287 = vmatpush2.msra.mxu0 %v88
  %288 = vmatprep.subr.mxu0 0.0
  %289 = vmatpush2.msra.mxu0 %v87
  %290 = vmatprep.subr.mxu0 0.0
  %291 = vmatpush2.msra.mxu0 %v86
  %292 = vmatprep.subr.mxu0 0.0
  %293 = vmatpush2.msra.mxu0 %v85
  %294 = vmatprep.subr.mxu0 0.0
  %295 = vmatpush2.msra.mxu0 %v84
  %296 = vmatprep.subr.mxu0 0.0
  %297 = vmatpush2.msra.mxu0 %v83
  %298 = vmatprep.subr.mxu0 0.0
  %299 = vmatpush2.msra.mxu0 %v82
  %300 = vmatprep.mubr.f32.mxu0 %v15
  %301 = vmatmul.mubr.f32.gmra.mxu0 %v14
  %v302 = vpop.f32.mrf.mxu0
  %v303 = vadd.f32 %v134, %v302
  %v304 = vpop.f32.mrf.mxu0
  %305 = vmatprep.mubr.f32.mxu0 %v19
  %306 = vmatmul.mubr.f32.gmra.mxu0 %v18
  %v307 = vpop.f32.mrf.mxu0
  %v308 = vadd.f32 %v139, %v307
  %v309 = vpop.f32.mrf.mxu0
  %310 = vmatprep.mubr.f32.mxu0 %v23
  %311 = vmatmul.mubr.f32.gmra.mxu0 %v22
  %v312 = vpop.f32.mrf.mxu0
  %v313 = vadd.f32 %v144, %v312
  %v314 = vpop.f32.mrf.mxu0
  %315 = vmatprep.mubr.f32.mxu0 %v27
  %316 = vmatmul.mubr.f32.gmra.mxu0 %v26
  %v317 = vpop.f32.mrf.mxu0
  %v318 = vadd.f32 %v149, %v317
  %v319 = vpop.f32.mrf.mxu0
  %320 = vmatprep.mubr.f32.mxu0 %v31
  %321 = vmatmul.mubr.f32.gmra.mxu0 %v30
  %v322 = vpop.f32.mrf.mxu0
  %v323 = vadd.f32 %v154, %v322
  %v324 = vpop.f32.mrf.mxu0
  %325 = vmatprep.mubr.f32.mxu0 %v35
  %326 = vmatmul.mubr.f32.gmra.mxu0 %v34
  %v327 = vpop.f32.mrf.mxu0
  %v328 = vadd.f32 %v159, %v327
  %v329 = vpop.f32.mrf.mxu0
  %330 = vmatprep.mubr.f32.mxu0 %v39
  %331 = vmatmul.mubr.f32.gmra.mxu0 %v38
  %v332 = vpop.f32.mrf.mxu0
  %v333 = vadd.f32 %v164, %v332
  %v334 = vpop.f32.mrf.mxu0
  %335 = vmatprep.mubr.f32.mxu0 %v43
  %336 = vmatmul.mubr.f32.gmra.mxu0 %v42
  %v337 = vpop.f32.mrf.mxu0
  %v338 = vadd.f32 %v169, %v337
  %v339 = vpop.f32.mrf.mxu0
  %340 = vmatprep.mubr.f32.mxu0 %v47
  %341 = vmatmul.mubr.f32.gmra.mxu0 %v46
  %v342 = vpop.f32.mrf.mxu0
  %v343 = vadd.f32 %v174, %v342
  %v344 = vpop.f32.mrf.mxu0
  %345 = vmatprep.mubr.f32.mxu0 %v51
  %346 = vmatmul.mubr.f32.gmra.mxu0 %v50
  %v347 = vpop.f32.mrf.mxu0
  %v348 = vadd.f32 %v179, %v347
  %v349 = vpop.f32.mrf.mxu0
  %350 = vmatprep.mubr.f32.mxu0 %v55
  %351 = vmatmul.mubr.f32.gmra.mxu0 %v54
  %v352 = vpop.f32.mrf.mxu0
  %v353 = vadd.f32 %v184, %v352
  %v354 = vpop.f32.mrf.mxu0
  %355 = vmatprep.mubr.f32.mxu0 %v59
  %356 = vmatmul.mubr.f32.gmra.mxu0 %v58
  %v357 = vpop.f32.mrf.mxu0
  %v358 = vadd.f32 %v189, %v357
  %v359 = vpop.f32.mrf.mxu0
  %360 = vmatprep.mubr.f32.mxu0 %v63
  %361 = vmatmul.mubr.f32.gmra.mxu0 %v62
  %v362 = vpop.f32.mrf.mxu0
  %v363 = vadd.f32 %v194, %v362
  %v364 = vpop.f32.mrf.mxu0
  %365 = vdwg.mxu0
  %366 = vmatprep.subr.mxu0 0.0
  %367 = vmatpush1.msra.mxu0 %v113
  %368 = vmatprep.subr.mxu0 0.0
  %369 = vmatpush1.msra.mxu0 %v112
  %370 = vmatprep.subr.mxu0 0.0
  %371 = vmatpush1.msra.mxu0 %v111
  %372 = vmatprep.subr.mxu0 0.0
  %373 = vmatpush1.msra.mxu0 %v110
  %374 = vmatprep.subr.mxu0 0.0
  %375 = vmatpush1.msra.mxu0 %v109
  %376 = vmatprep.subr.mxu0 0.0
  %377 = vmatpush1.msra.mxu0 %v108
  %378 = vmatprep.subr.mxu0 0.0
  %379 = vmatpush1.msra.mxu0 %v107
  %380 = vmatprep.subr.mxu0 0.0
  %381 = vmatpush1.msra.mxu0 %v106
  %382 = vmatprep.subr.mxu0 0.0
  %383 = vmatpush1.msra.mxu0 %v105
  %384 = vmatprep.subr.mxu0 0.0
  %385 = vmatpush1.msra.mxu0 %v104
  %386 = vmatprep.subr.mxu0 0.0
  %387 = vmatpush1.msra.mxu0 %v103
  %388 = vmatprep.subr.mxu0 0.0
  %389 = vmatpush1.msra.mxu0 %v102
  %390 = vmatprep.subr.mxu0 0.0
  %391 = vmatpush1.msra.mxu0 %v101
  %392 = vmatprep.subr.mxu0 0.0
  %393 = vmatpush1.msra.mxu0 %v100
  %394 = vmatprep.subr.mxu0 0.0
  %395 = vmatpush1.msra.mxu0 %v99
  %396 = vmatprep.subr.mxu0 0.0
  %397 = vmatpush1.msra.mxu0 %v98
  %398 = vmatprep.subr.mxu0 0.0
  %399 = vmatpush2.msra.mxu0 0.0
  %400 = vmatprep.subr.mxu0 0.0
  %401 = vmatpush2.msra.mxu0 0.0
  %402 = vmatprep.subr.mxu0 0.0
  %403 = vmatpush2.msra.mxu0 0.0
  %404 = vmatprep.subr.mxu0 0.0
  %405 = vmatpush2.msra.mxu0 0.0
  %406 = vmatprep.subr.mxu0 0.0
  %407 = vmatpush2.msra.mxu0 0.0
  %408 = vmatprep.subr.mxu0 0.0
  %409 = vmatpush2.msra.mxu0 0.0
  %410 = vmatprep.subr.mxu0 0.0
  %411 = vmatpush2.msra.mxu0 0.0
  %412 = vmatprep.subr.mxu0 0.0
  %413 = vmatpush2.msra.mxu0 0.0
  %414 = vmatprep.subr.mxu0 0.0
  %415 = vmatpush2.msra.mxu0 0.0
  %416 = vmatprep.subr.mxu0 0.0
  %417 = vmatpush2.msra.mxu0 0.0
  %418 = vmatprep.subr.mxu0 0.0
  %419 = vmatpush2.msra.mxu0 0.0
  %420 = vmatprep.subr.mxu0 0.0
  %421 = vmatpush2.msra.mxu0 0.0
  %422 = vmatprep.subr.mxu0 0.0
  %423 = vmatpush2.msra.mxu0 %v117
  %424 = vmatprep.subr.mxu0 0.0
  %425 = vmatpush2.msra.mxu0 %v116
  %426 = vmatprep.subr.mxu0 0.0
  %427 = vmatpush2.msra.mxu0 %v115
  %428 = vmatprep.subr.mxu0 0.0
  %429 = vmatpush2.msra.mxu0 %v114
  %430 = vmatprep.mubr.f32.mxu0 %v198
  %431 = vmatmul.mubr.f32.gmra.mxu0 %v16
  %v432 = vpop.f32.mrf.mxu0
  %v433 = vadd.f32 %v303, %v432
  %v434 = vpop.f32.mrf.mxu0
  %435 = vmatprep.mubr.f32.mxu0 %v201
  %436 = vmatmul.mubr.f32.gmra.mxu0 %v20
  %v437 = vpop.f32.mrf.mxu0
  %v438 = vadd.f32 %v308, %v437
  %v439 = vpop.f32.mrf.mxu0
  %440 = vmatprep.mubr.f32.mxu0 %v204
  %441 = vmatmul.mubr.f32.gmra.mxu0 %v24
  %v442 = vpop.f32.mrf.mxu0
  %v443 = vadd.f32 %v313, %v442
  %v444 = vpop.f32.mrf.mxu0
  %445 = vmatprep.mubr.f32.mxu0 %v207
  %446 = vmatmul.mubr.f32.gmra.mxu0 %v28
  %v447 = vpop.f32.mrf.mxu0
  %v448 = vadd.f32 %v318, %v447
  %v449 = vpop.f32.mrf.mxu0
  %450 = vmatprep.mubr.f32.mxu0 %v210
  %451 = vmatmul.mubr.f32.gmra.mxu0 %v32
  %v452 = vpop.f32.mrf.mxu0
  %v453 = vadd.f32 %v323, %v452
  %v454 = vpop.f32.mrf.mxu0
  %455 = vmatprep.mubr.f32.mxu0 %v213
  %456 = vmatmul.mubr.f32.gmra.mxu0 %v36
  %v457 = vpop.f32.mrf.mxu0
  %v458 = vadd.f32 %v328, %v457
  %v459 = vpop.f32.mrf.mxu0
  %460 = vmatprep.mubr.f32.mxu0 %v216
  %461 = vmatmul.mubr.f32.gmra.mxu0 %v40
  %v462 = vpop.f32.mrf.mxu0
  %v463 = vadd.f32 %v333, %v462
  %v464 = vpop.f32.mrf.mxu0
  %465 = vmatprep.mubr.f32.mxu0 %v219
  %466 = vmatmul.mubr.f32.gmra.mxu0 %v44
  %v467 = vpop.f32.mrf.mxu0
  %v468 = vadd.f32 %v338, %v467
  %v469 = vpop.f32.mrf.mxu0
  %470 = vmatprep.mubr.f32.mxu0 %v222
  %471 = vmatmul.mubr.f32.gmra.mxu0 %v48
  %v472 = vpop.f32.mrf.mxu0
  %v473 = vadd.f32 %v343, %v472
  %v474 = vpop.f32.mrf.mxu0
  %475 = vmatprep.mubr.f32.mxu0 %v225
  %476 = vmatmul.mubr.f32.gmra.mxu0 %v52
  %v477 = vpop.f32.mrf.mxu0
  %v478 = vadd.f32 %v348, %v477
  %v479 = vpop.f32.mrf.mxu0
  %480 = vmatprep.mubr.f32.mxu0 %v228
  %481 = vmatmul.mubr.f32.gmra.mxu0 %v56
  %v482 = vpop.f32.mrf.mxu0
  %v483 = vadd.f32 %v353, %v482
  %v484 = vpop.f32.mrf.mxu0
  %485 = vmatprep.mubr.f32.mxu0 %v231
  %486 = vmatmul.mubr.f32.gmra.mxu0 %v60
  %v487 = vpop.f32.mrf.mxu0
  %v488 = vadd.f32 %v358, %v487
  %v489 = vpop.f32.mrf.mxu0
  %490 = vmatprep.mubr.f32.mxu0 %v234
  %491 = vmatmul.mubr.f32.gmra.mxu0 %v64
  %v492 = vpop.f32.mrf.mxu0
  %v493 = vadd.f32 %v363, %v492
  %v494 = vpop.f32.mrf.mxu0
  %495 = vdwg.mxu0
  %v496 = vmax.f32 %v433, 0.0
  %v497 = vmax.f32 %v438, 0.0
  %v498 = vmax.f32 %v443, 0.0
  %v499 = vmax.f32 %v448, 0.0
  %v500 = vmax.f32 %v453, 0.0
  %v501 = vmax.f32 %v458, 0.0
  %v502 = vmax.f32 %v463, 0.0
  %v503 = vmax.f32 %v468, 0.0
  %v504 = vmax.f32 %v473, 0.0
  %v505 = vmax.f32 %v478, 0.0
  %v506 = vmax.f32 %v483, 0.0
  %v507 = vmax.f32 %v488, 0.0
  %v508 = vmax.f32 %v493, 0.0
  %509 = vst [vmem:[%s3] sm:$0xff] %v496
  %510 = vst [vmem:[%s3 + $0x8] sm:$0xff] %v497
  %511 = vst [vmem:[%s3 + $0x10] sm:$0xff] %v498
  %512 = vst [vmem:[%s3 + $0x18] sm:$0xff] %v499
  %513 = vst [vmem:[%s3 + $0x20] sm:$0xff] %v500
  %514 = vst [vmem:[%s3 + $0x28] sm:$0xff] %v501
  %515 = vst [vmem:[%s3 + $0x30] sm:$0xff] %v502
  %516 = vst [vmem:[%s3 + $0x38] sm:$0xff] %v503
  %517 = vst [vmem:[%s3 + $0x40] sm:$0xff] %v504
  %518 = vst [vmem:[%s3 + $0x48] sm:$0xff] %v505
  %519 = vst [vmem:[%s3 + $0x50] sm:$0xff] %v506
  %520 = vst [vmem:[%s3 + $0x58] sm:$0xff] %v507
  %521 = vst [vmem:[%s3 + $0x60] sm:$0xf] %v508
  // Predicated region
  $region14: #{convolutional_net_forward.12} parent=0 // pred_check
    _
  $region15: #{convolutional_net_forward.12} parent=0 // pred_check_branch
    %523 = sbr.rel (0) target = $region17
  $region16: #{convolutional_net_forward.12} parent=0 // pred_region
    _
  $region17: #{convolutional_net_forward.12} parent=0 // pred_fallthru
    _
  // Predicated region
  $region18: #{convolutional_net_forward.12} parent=0 // pred_check
    _
  $region19: #{convolutional_net_forward.12} parent=0 // pred_check_branch
    %525 = sbr.rel (0) target = $region21
  $region20: #{convolutional_net_forward.12} parent=0 // pred_region
    _
  $region21: #{convolutional_net_forward.12} parent=0 // pred_fallthru
    _

</llo_original>
